<compile_context>
chip_gen: v6e
topology: v6e:2x2x1
jax: 0.10.0
libtpu: 0.0.40
codegen_flags: <defaults>
</compile_context>

<pallas_src>
import jax
import jax.numpy as jnp
import numpy as np
from jax import lax
from jax.experimental import pallas as pl
from jax.experimental.pallas import tpu as pltpu


def _make_unet_kernel(H, W, block_n):
    HW = H * W
    L = block_n * HW
    # Tap order t = (dy+1)*3 + (dx+1) == ky*3 + kx.  Roll shifts are taken modulo the FULL
    # folded lane length so in-image neighbors always stay within the same image.
    shifts = []
    for dy in (-1, 0, 1):
        for dx in (-1, 0, 1):
            shifts.append((-(dy * W + dx)) % L)
    CENTER = 4  # dy == dx == 0: no roll, no mask needed

    def kernel(x_ref, masks_ref, w1_ref, b1_ref, w2_ref, b2_ref, o_ref):
        # x_ref    : (Cin_p, L)        channel-major, batch*spatial folded onto lanes
        # masks_ref: (9, 1, L)         per-tap border masks (0/1 f32), tiled per image
        # w1_ref   : (9, Cmid, Cin_p)  conv1 weights, one (Cout, Cin) slab per tap
        # b1_ref   : (Cmid, 1)
        # w2_ref   : (9, Cout, Cmid)   conv2 weights, one slab per tap
        # b2_ref   : (Cout, 1)
        # o_ref    : (Cout, L)
        # Load + compare masks once; reused by both convs (center tap needs no mask).
        masks = {t: masks_ref[t] != 0.0 for t in range(9) if t != CENTER}

        def conv3x3(a, w_ref, bias):
            # a: (C, L).  One MXU matmul per tap, accumulated in f32 registers.
            # No im2col materialization (no concat, no VMEM round-trip).
            acc = jnp.dot(w_ref[CENTER], a, preferred_element_type=jnp.float32)
            for t, shift in enumerate(shifts):
                if t == CENTER:
                    continue
                s = pltpu.roll(a, shift, axis=1)
                s = jnp.where(masks[t], s, 0.0)  # zero padding; NaN/Inf-safe
                acc = acc + jnp.dot(w_ref[t], s, preferred_element_type=jnp.float32)
            return acc + bias  # single broadcast per conv

        h = jnp.maximum(conv3x3(x_ref[...], w1_ref, b1_ref[...]), 0.0)   # (Cmid, L)
        out = conv3x3(h, w2_ref, b2_ref[...])                            # (Cout, L)
        o_ref[...] = out.astype(o_ref.dtype)                             # lane-dense store

    return kernel


@jax.jit
def unet_student_forward(x_nchw, w1, b1, w2, b2):
    """x_nchw: (N, Cin, H, W) float32; w1/w2 in HWIO layout. Returns (N, Cout, H, W)."""
    N, Cin, H, W = x_nchw.shape
    Cmid = w1.shape[3]
    Cout = w2.shape[3]
    HW = H * W
    Cin_p = ((Cin + 7) // 8) * 8  # sublane-align input channels (3 -> 8)

    # Single grid step by default (per-step overhead dominates this tiny kernel on v5e/v6e);
    # only split the batch into multiple lane-blocks if the per-step footprint would get big
    # (im2col-style 9x amplification bound keeps v7x's smaller VMEM safe when scaling up).
    per_image_bytes = 9 * max(Cmid, Cin_p) * HW * 4
    budget = 4 << 20
    block_n = 1
    for d in range(N, 0, -1):
        if N % d == 0 and d * per_image_bytes <= budget:
            block_n = d
            break
    L_blk = block_n * HW
    grid = (N // block_n,)

    # Channel-major fold of batch+spatial onto lanes; zero-pad channels 3 -> 8 (matching
    # zero weight columns keep results exact).
    x2d = jnp.transpose(x_nchw, (1, 0, 2, 3)).reshape(Cin, N * HW)
    w1p = w1
    if Cin_p != Cin:
        x2d = jnp.pad(x2d, ((0, Cin_p - Cin), (0, 0)))
        w1p = jnp.pad(w1, ((0, 0), (0, 0), (0, Cin_p - Cin), (0, 0)))

    # HWIO -> per-tap (9, Cout_conv, Cin_conv) weight slabs; tap t = ky*3 + kx.
    w1_t = jnp.transpose(w1p, (0, 1, 3, 2)).reshape(9, Cmid, Cin_p)
    w2_t = jnp.transpose(w2, (0, 1, 3, 2)).reshape(9, Cout, Cmid)
    b1_2d = b1.reshape(Cmid, 1)
    b2_2d = b2.reshape(Cout, 1)

    # Per-tap border masks over the flattened spatial axis, tiled per image in the block.
    row = jnp.arange(HW, dtype=jnp.int32) // W
    col = jnp.arange(HW, dtype=jnp.int32) % W
    mask_list = []
    for dy in (-1, 0, 1):
        for dx in (-1, 0, 1):
            ok = ((row + dy) >= 0) & ((row + dy) < H) & ((col + dx) >= 0) & ((col + dx) < W)
            mask_list.append(ok.astype(jnp.float32))
    masks = jnp.tile(jnp.stack(mask_list, axis=0).reshape(9, 1, HW), (1, 1, block_n))

    kernel = _make_unet_kernel(H, W, block_n)

    out2d = pl.pallas_call(
        kernel,
        out_shape=jax.ShapeDtypeStruct((Cout, N * HW), x_nchw.dtype),
        grid_spec=pltpu.PrefetchScalarGridSpec(
            num_scalar_prefetch=0,
            grid=grid,
            in_specs=[
                pl.BlockSpec((Cin_p, L_blk), lambda n: (0, n)),
                pl.BlockSpec((9, 1, L_blk), lambda n: (0, 0, 0)),
                pl.BlockSpec((9, Cmid, Cin_p), lambda n: (0, 0, 0)),
                pl.BlockSpec((Cmid, 1), lambda n: (0, 0)),
                pl.BlockSpec((9, Cout, Cmid), lambda n: (0, 0, 0)),
                pl.BlockSpec((Cout, 1), lambda n: (0, 0)),
            ],
            out_specs=pl.BlockSpec((Cout, L_blk), lambda n: (0, n)),
        ),
        compiler_params=pltpu.CompilerParams(
            dimension_semantics=("parallel",),
        ),
    )(x2d, masks, w1_t, b1_2d, w2_t, b2_2d)

    # (Cout, N*H*W) -> (N, Cout, H, W): tiny XLA-side reshape/transpose outside the kernel.
    return jnp.transpose(out2d.reshape(Cout, N, H, W), (1, 0, 2, 3))


def _reference_forward(x_nchw, w1, b1, w2, b2):
    """Pure-JAX reference (lax conv) for correctness checking."""
    x_nhwc = jnp.transpose(x_nchw, (0, 2, 3, 1))
    dn = lax.conv_dimension_numbers(x_nhwc.shape, w1.shape, ("NHWC", "HWIO", "NHWC"))
    h = lax.conv_general_dilated(x_nhwc, w1, (1, 1), "SAME", dimension_numbers=dn)
    h = jnp.maximum(h + b1, 0.0)
    dn2 = lax.conv_dimension_numbers(h.shape, w2.shape, ("NHWC", "HWIO", "NHWC"))
    o = lax.conv_general_dilated(h, w2, (1, 1), "SAME", dimension_numbers=dn2)
    o = o + b2
    return jnp.transpose(o, (0, 3, 1, 2))


if __name__ == "__main__":
    key = jax.random.PRNGKey(0)
    k_x, k_w1, k_b1, k_w2, k_b2 = jax.random.split(key, 5)

    N, Cin, H, W = 2, 3, 16, 16
    Cmid, Cout = 16, 3

    # Deterministic synthetic parameters (HWIO layout), small scale.
    x = jax.random.normal(k_x, (N, Cin, H, W), jnp.float32)
    w1 = jax.random.normal(k_w1, (3, 3, Cin, Cmid), jnp.float32) * 0.1
    b1 = jax.random.normal(k_b1, (Cmid,), jnp.float32) * 0.1
    w2 = jax.random.normal(k_w2, (3, 3, Cmid, Cout), jnp.float32) * 0.1
    b2 = jax.random.normal(k_b2, (Cout,), jnp.float32) * 0.1

    out = jax.block_until_ready(unet_student_forward(x, w1, b1, w2, b2))
    ref = jax.block_until_ready(_reference_forward(x, w1, b1, w2, b2))
    np.testing.assert_allclose(np.asarray(out), np.asarray(ref), rtol=1e-4, atol=1e-4)

    print("KERNEL_OK")
</pallas_src>

<mosaic_0001>
module attributes {stable_mosaic.version = 11 : i64} {
  func.func @kernel(%arg0: i32, %arg1: memref<8x512xf32, #tpu.memory_space<vmem>>, %arg2: memref<9x1x512xf32, #tpu.memory_space<vmem>>, %arg3: memref<9x16x8xf32, #tpu.memory_space<vmem>>, %arg4: memref<16x1xf32, #tpu.memory_space<vmem>>, %arg5: memref<9x3x16xf32, #tpu.memory_space<vmem>>, %arg6: memref<3x1xf32, #tpu.memory_space<vmem>>, %arg7: memref<3x512xf32, #tpu.memory_space<vmem>>) attributes {dimension_semantics = [#tpu.dimension_semantics<parallel>], iteration_bounds = array<i64: 1>, scalar_prefetch = 0 : i64, scratch_operands = 0 : i64, tpu.core_type = #tpu.core_type<tc>, window_params = [{transform_indices = @transform_0, window_bounds = array<i64: 8, 512>}, {pipeline_mode = #tpu.pipeline_mode<synchronous>, transform_indices = @transform_1, window_bounds = array<i64: 9, 1, 512>}, {pipeline_mode = #tpu.pipeline_mode<synchronous>, transform_indices = @transform_2, window_bounds = array<i64: 9, 16, 8>}, {pipeline_mode = #tpu.pipeline_mode<synchronous>, transform_indices = @transform_3, window_bounds = array<i64: 16, 1>}, {pipeline_mode = #tpu.pipeline_mode<synchronous>, transform_indices = @transform_4, window_bounds = array<i64: 9, 3, 16>}, {pipeline_mode = #tpu.pipeline_mode<synchronous>, transform_indices = @transform_5, window_bounds = array<i64: 3, 1>}, {transform_indices = @transform_6, window_bounds = array<i64: 3, 512>}]} {
    %c0 = arith.constant 0 : index
    %c0_0 = arith.constant 0 : index
    %c0_1 = arith.constant 0 : index
    %0 = vector.load %arg2[%c0, %c0_0, %c0_1] : memref<9x1x512xf32, #tpu.memory_space<vmem>>, vector<1x1x512xf32>
    %1 = vector.shape_cast %0 : vector<1x1x512xf32> to vector<1x512xf32>
    %cst = arith.constant 0.000000e+00 : f32
    %2 = vector.broadcast %cst : f32 to vector<1x512xf32>
    %3 = arith.cmpf one, %1, %2 : vector<1x512xf32>
    %c1 = arith.constant 1 : index
    %c0_2 = arith.constant 0 : index
    %c0_3 = arith.constant 0 : index
    %4 = vector.load %arg2[%c1, %c0_2, %c0_3] : memref<9x1x512xf32, #tpu.memory_space<vmem>>, vector<1x1x512xf32>
    %5 = vector.shape_cast %4 : vector<1x1x512xf32> to vector<1x512xf32>
    %cst_4 = arith.constant 0.000000e+00 : f32
    %6 = vector.broadcast %cst_4 : f32 to vector<1x512xf32>
    %7 = arith.cmpf one, %5, %6 : vector<1x512xf32>
    %c2 = arith.constant 2 : index
    %c0_5 = arith.constant 0 : index
    %c0_6 = arith.constant 0 : index
    %8 = vector.load %arg2[%c2, %c0_5, %c0_6] : memref<9x1x512xf32, #tpu.memory_space<vmem>>, vector<1x1x512xf32>
    %9 = vector.shape_cast %8 : vector<1x1x512xf32> to vector<1x512xf32>
    %cst_7 = arith.constant 0.000000e+00 : f32
    %10 = vector.broadcast %cst_7 : f32 to vector<1x512xf32>
    %11 = arith.cmpf one, %9, %10 : vector<1x512xf32>
    %c3 = arith.constant 3 : index
    %c0_8 = arith.constant 0 : index
    %c0_9 = arith.constant 0 : index
    %12 = vector.load %arg2[%c3, %c0_8, %c0_9] : memref<9x1x512xf32, #tpu.memory_space<vmem>>, vector<1x1x512xf32>
    %13 = vector.shape_cast %12 : vector<1x1x512xf32> to vector<1x512xf32>
    %cst_10 = arith.constant 0.000000e+00 : f32
    %14 = vector.broadcast %cst_10 : f32 to vector<1x512xf32>
    %15 = arith.cmpf one, %13, %14 : vector<1x512xf32>
    %c5 = arith.constant 5 : index
    %c0_11 = arith.constant 0 : index
    %c0_12 = arith.constant 0 : index
    %16 = vector.load %arg2[%c5, %c0_11, %c0_12] : memref<9x1x512xf32, #tpu.memory_space<vmem>>, vector<1x1x512xf32>
    %17 = vector.shape_cast %16 : vector<1x1x512xf32> to vector<1x512xf32>
    %cst_13 = arith.constant 0.000000e+00 : f32
    %18 = vector.broadcast %cst_13 : f32 to vector<1x512xf32>
    %19 = arith.cmpf one, %17, %18 : vector<1x512xf32>
    %c6 = arith.constant 6 : index
    %c0_14 = arith.constant 0 : index
    %c0_15 = arith.constant 0 : index
    %20 = vector.load %arg2[%c6, %c0_14, %c0_15] : memref<9x1x512xf32, #tpu.memory_space<vmem>>, vector<1x1x512xf32>
    %21 = vector.shape_cast %20 : vector<1x1x512xf32> to vector<1x512xf32>
    %cst_16 = arith.constant 0.000000e+00 : f32
    %22 = vector.broadcast %cst_16 : f32 to vector<1x512xf32>
    %23 = arith.cmpf one, %21, %22 : vector<1x512xf32>
    %c7 = arith.constant 7 : index
    %c0_17 = arith.constant 0 : index
    %c0_18 = arith.constant 0 : index
    %24 = vector.load %arg2[%c7, %c0_17, %c0_18] : memref<9x1x512xf32, #tpu.memory_space<vmem>>, vector<1x1x512xf32>
    %25 = vector.shape_cast %24 : vector<1x1x512xf32> to vector<1x512xf32>
    %cst_19 = arith.constant 0.000000e+00 : f32
    %26 = vector.broadcast %cst_19 : f32 to vector<1x512xf32>
    %27 = arith.cmpf one, %25, %26 : vector<1x512xf32>
    %c8 = arith.constant 8 : index
    %c0_20 = arith.constant 0 : index
    %c0_21 = arith.constant 0 : index
    %28 = vector.load %arg2[%c8, %c0_20, %c0_21] : memref<9x1x512xf32, #tpu.memory_space<vmem>>, vector<1x1x512xf32>
    %29 = vector.shape_cast %28 : vector<1x1x512xf32> to vector<1x512xf32>
    %cst_22 = arith.constant 0.000000e+00 : f32
    %30 = vector.broadcast %cst_22 : f32 to vector<1x512xf32>
    %31 = arith.cmpf one, %29, %30 : vector<1x512xf32>
    %c0_23 = arith.constant 0 : index
    %c0_24 = arith.constant 0 : index
    %32 = vector.load %arg1[%c0_23, %c0_24] : memref<8x512xf32, #tpu.memory_space<vmem>>, vector<8x512xf32>
    %c0_25 = arith.constant 0 : index
    %c0_26 = arith.constant 0 : index
    %33 = vector.load %arg4[%c0_25, %c0_26] : memref<16x1xf32, #tpu.memory_space<vmem>>, vector<16x1xf32>
    %c4 = arith.constant 4 : index
    %c0_27 = arith.constant 0 : index
    %c0_28 = arith.constant 0 : index
    %34 = vector.load %arg3[%c4, %c0_27, %c0_28] : memref<9x16x8xf32, #tpu.memory_space<vmem>>, vector<1x16x8xf32>
    %35 = vector.shape_cast %34 : vector<1x16x8xf32> to vector<16x8xf32>
    %cst_29 = arith.constant dense<0.000000e+00> : vector<16x512xf32>
    %36 = tpu.matmul %35, %32, %cst_29 {dimension_numbers = #tpu.dot_dimension_numbers<[1], [0], [0], [1], [0, 0, 1, 1], [], []>} : vector<16x8xf32>, vector<8x512xf32>, vector<16x512xf32> -> vector<16x512xf32>
    %c17_i32 = arith.constant 17 : i32
    %37 = tpu.dynamic_rotate %32 by %c17_i32 dim 1 : vector<8x512xf32>, i32 -> vector<8x512xf32>
    %cst_30 = arith.constant 0.000000e+00 : f32
    %38 = vector.shape_cast %3 : vector<1x512xi1> to vector<1x512xi1>
    %39 = vector.broadcast %38 : vector<1x512xi1> to vector<8x512xi1>
    %40 = vector.broadcast %cst_30 : f32 to vector<8x512xf32>
    %41 = arith.select %39, %37, %40 : vector<8x512xi1>, vector<8x512xf32>
    %c0_31 = arith.constant 0 : index
    %c0_32 = arith.constant 0 : index
    %c0_33 = arith.constant 0 : index
    %42 = vector.load %arg3[%c0_31, %c0_32, %c0_33] : memref<9x16x8xf32, #tpu.memory_space<vmem>>, vector<1x16x8xf32>
    %43 = vector.shape_cast %42 : vector<1x16x8xf32> to vector<16x8xf32>
    %cst_34 = arith.constant dense<0.000000e+00> : vector<16x512xf32>
    %44 = tpu.matmul %43, %41, %cst_34 {dimension_numbers = #tpu.dot_dimension_numbers<[1], [0], [0], [1], [0, 0, 1, 1], [], []>} : vector<16x8xf32>, vector<8x512xf32>, vector<16x512xf32> -> vector<16x512xf32>
    %45 = arith.addf %36, %44 : vector<16x512xf32>
    %c16_i32 = arith.constant 16 : i32
    %46 = tpu.dynamic_rotate %32 by %c16_i32 dim 1 : vector<8x512xf32>, i32 -> vector<8x512xf32>
    %cst_35 = arith.constant 0.000000e+00 : f32
    %47 = vector.shape_cast %7 : vector<1x512xi1> to vector<1x512xi1>
    %48 = vector.broadcast %47 : vector<1x512xi1> to vector<8x512xi1>
    %49 = vector.broadcast %cst_35 : f32 to vector<8x512xf32>
    %50 = arith.select %48, %46, %49 : vector<8x512xi1>, vector<8x512xf32>
    %c1_36 = arith.constant 1 : index
    %c0_37 = arith.constant 0 : index
    %c0_38 = arith.constant 0 : index
    %51 = vector.load %arg3[%c1_36, %c0_37, %c0_38] : memref<9x16x8xf32, #tpu.memory_space<vmem>>, vector<1x16x8xf32>
    %52 = vector.shape_cast %51 : vector<1x16x8xf32> to vector<16x8xf32>
    %cst_39 = arith.constant dense<0.000000e+00> : vector<16x512xf32>
    %53 = tpu.matmul %52, %50, %cst_39 {dimension_numbers = #tpu.dot_dimension_numbers<[1], [0], [0], [1], [0, 0, 1, 1], [], []>} : vector<16x8xf32>, vector<8x512xf32>, vector<16x512xf32> -> vector<16x512xf32>
    %54 = arith.addf %45, %53 : vector<16x512xf32>
    %c15_i32 = arith.constant 15 : i32
    %55 = tpu.dynamic_rotate %32 by %c15_i32 dim 1 : vector<8x512xf32>, i32 -> vector<8x512xf32>
    %cst_40 = arith.constant 0.000000e+00 : f32
    %56 = vector.shape_cast %11 : vector<1x512xi1> to vector<1x512xi1>
    %57 = vector.broadcast %56 : vector<1x512xi1> to vector<8x512xi1>
    %58 = vector.broadcast %cst_40 : f32 to vector<8x512xf32>
    %59 = arith.select %57, %55, %58 : vector<8x512xi1>, vector<8x512xf32>
    %c2_41 = arith.constant 2 : index
    %c0_42 = arith.constant 0 : index
    %c0_43 = arith.constant 0 : index
    %60 = vector.load %arg3[%c2_41, %c0_42, %c0_43] : memref<9x16x8xf32, #tpu.memory_space<vmem>>, vector<1x16x8xf32>
    %61 = vector.shape_cast %60 : vector<1x16x8xf32> to vector<16x8xf32>
    %cst_44 = arith.constant dense<0.000000e+00> : vector<16x512xf32>
    %62 = tpu.matmul %61, %59, %cst_44 {dimension_numbers = #tpu.dot_dimension_numbers<[1], [0], [0], [1], [0, 0, 1, 1], [], []>} : vector<16x8xf32>, vector<8x512xf32>, vector<16x512xf32> -> vector<16x512xf32>
    %63 = arith.addf %54, %62 : vector<16x512xf32>
    %c1_i32 = arith.constant 1 : i32
    %64 = tpu.dynamic_rotate %32 by %c1_i32 dim 1 : vector<8x512xf32>, i32 -> vector<8x512xf32>
    %cst_45 = arith.constant 0.000000e+00 : f32
    %65 = vector.shape_cast %15 : vector<1x512xi1> to vector<1x512xi1>
    %66 = vector.broadcast %65 : vector<1x512xi1> to vector<8x512xi1>
    %67 = vector.broadcast %cst_45 : f32 to vector<8x512xf32>
    %68 = arith.select %66, %64, %67 : vector<8x512xi1>, vector<8x512xf32>
    %c3_46 = arith.constant 3 : index
    %c0_47 = arith.constant 0 : index
    %c0_48 = arith.constant 0 : index
    %69 = vector.load %arg3[%c3_46, %c0_47, %c0_48] : memref<9x16x8xf32, #tpu.memory_space<vmem>>, vector<1x16x8xf32>
    %70 = vector.shape_cast %69 : vector<1x16x8xf32> to vector<16x8xf32>
    %cst_49 = arith.constant dense<0.000000e+00> : vector<16x512xf32>
    %71 = tpu.matmul %70, %68, %cst_49 {dimension_numbers = #tpu.dot_dimension_numbers<[1], [0], [0], [1], [0, 0, 1, 1], [], []>} : vector<16x8xf32>, vector<8x512xf32>, vector<16x512xf32> -> vector<16x512xf32>
    %72 = arith.addf %63, %71 : vector<16x512xf32>
    %c511_i32 = arith.constant 511 : i32
    %73 = tpu.dynamic_rotate %32 by %c511_i32 dim 1 : vector<8x512xf32>, i32 -> vector<8x512xf32>
    %cst_50 = arith.constant 0.000000e+00 : f32
    %74 = vector.shape_cast %19 : vector<1x512xi1> to vector<1x512xi1>
    %75 = vector.broadcast %74 : vector<1x512xi1> to vector<8x512xi1>
    %76 = vector.broadcast %cst_50 : f32 to vector<8x512xf32>
    %77 = arith.select %75, %73, %76 : vector<8x512xi1>, vector<8x512xf32>
    %c5_51 = arith.constant 5 : index
    %c0_52 = arith.constant 0 : index
    %c0_53 = arith.constant 0 : index
    %78 = vector.load %arg3[%c5_51, %c0_52, %c0_53] : memref<9x16x8xf32, #tpu.memory_space<vmem>>, vector<1x16x8xf32>
    %79 = vector.shape_cast %78 : vector<1x16x8xf32> to vector<16x8xf32>
    %cst_54 = arith.constant dense<0.000000e+00> : vector<16x512xf32>
    %80 = tpu.matmul %79, %77, %cst_54 {dimension_numbers = #tpu.dot_dimension_numbers<[1], [0], [0], [1], [0, 0, 1, 1], [], []>} : vector<16x8xf32>, vector<8x512xf32>, vector<16x512xf32> -> vector<16x512xf32>
    %81 = arith.addf %72, %80 : vector<16x512xf32>
    %c497_i32 = arith.constant 497 : i32
    %82 = tpu.dynamic_rotate %32 by %c497_i32 dim 1 : vector<8x512xf32>, i32 -> vector<8x512xf32>
    %cst_55 = arith.constant 0.000000e+00 : f32
    %83 = vector.shape_cast %23 : vector<1x512xi1> to vector<1x512xi1>
    %84 = vector.broadcast %83 : vector<1x512xi1> to vector<8x512xi1>
    %85 = vector.broadcast %cst_55 : f32 to vector<8x512xf32>
    %86 = arith.select %84, %82, %85 : vector<8x512xi1>, vector<8x512xf32>
    %c6_56 = arith.constant 6 : index
    %c0_57 = arith.constant 0 : index
    %c0_58 = arith.constant 0 : index
    %87 = vector.load %arg3[%c6_56, %c0_57, %c0_58] : memref<9x16x8xf32, #tpu.memory_space<vmem>>, vector<1x16x8xf32>
    %88 = vector.shape_cast %87 : vector<1x16x8xf32> to vector<16x8xf32>
    %cst_59 = arith.constant dense<0.000000e+00> : vector<16x512xf32>
    %89 = tpu.matmul %88, %86, %cst_59 {dimension_numbers = #tpu.dot_dimension_numbers<[1], [0], [0], [1], [0, 0, 1, 1], [], []>} : vector<16x8xf32>, vector<8x512xf32>, vector<16x512xf32> -> vector<16x512xf32>
    %90 = arith.addf %81, %89 : vector<16x512xf32>
    %c496_i32 = arith.constant 496 : i32
    %91 = tpu.dynamic_rotate %32 by %c496_i32 dim 1 : vector<8x512xf32>, i32 -> vector<8x512xf32>
    %cst_60 = arith.constant 0.000000e+00 : f32
    %92 = vector.shape_cast %27 : vector<1x512xi1> to vector<1x512xi1>
    %93 = vector.broadcast %92 : vector<1x512xi1> to vector<8x512xi1>
    %94 = vector.broadcast %cst_60 : f32 to vector<8x512xf32>
    %95 = arith.select %93, %91, %94 : vector<8x512xi1>, vector<8x512xf32>
    %c7_61 = arith.constant 7 : index
    %c0_62 = arith.constant 0 : index
    %c0_63 = arith.constant 0 : index
    %96 = vector.load %arg3[%c7_61, %c0_62, %c0_63] : memref<9x16x8xf32, #tpu.memory_space<vmem>>, vector<1x16x8xf32>
    %97 = vector.shape_cast %96 : vector<1x16x8xf32> to vector<16x8xf32>
    %cst_64 = arith.constant dense<0.000000e+00> : vector<16x512xf32>
    %98 = tpu.matmul %97, %95, %cst_64 {dimension_numbers = #tpu.dot_dimension_numbers<[1], [0], [0], [1], [0, 0, 1, 1], [], []>} : vector<16x8xf32>, vector<8x512xf32>, vector<16x512xf32> -> vector<16x512xf32>
    %99 = arith.addf %90, %98 : vector<16x512xf32>
    %c495_i32 = arith.constant 495 : i32
    %100 = tpu.dynamic_rotate %32 by %c495_i32 dim 1 : vector<8x512xf32>, i32 -> vector<8x512xf32>
    %cst_65 = arith.constant 0.000000e+00 : f32
    %101 = vector.shape_cast %31 : vector<1x512xi1> to vector<1x512xi1>
    %102 = vector.broadcast %101 : vector<1x512xi1> to vector<8x512xi1>
    %103 = vector.broadcast %cst_65 : f32 to vector<8x512xf32>
    %104 = arith.select %102, %100, %103 : vector<8x512xi1>, vector<8x512xf32>
    %c8_66 = arith.constant 8 : index
    %c0_67 = arith.constant 0 : index
    %c0_68 = arith.constant 0 : index
    %105 = vector.load %arg3[%c8_66, %c0_67, %c0_68] : memref<9x16x8xf32, #tpu.memory_space<vmem>>, vector<1x16x8xf32>
    %106 = vector.shape_cast %105 : vector<1x16x8xf32> to vector<16x8xf32>
    %cst_69 = arith.constant dense<0.000000e+00> : vector<16x512xf32>
    %107 = tpu.matmul %106, %104, %cst_69 {dimension_numbers = #tpu.dot_dimension_numbers<[1], [0], [0], [1], [0, 0, 1, 1], [], []>} : vector<16x8xf32>, vector<8x512xf32>, vector<16x512xf32> -> vector<16x512xf32>
    %108 = arith.addf %99, %107 : vector<16x512xf32>
    %109 = vector.broadcast %33 : vector<16x1xf32> to vector<16x512xf32>
    %110 = arith.addf %108, %109 : vector<16x512xf32>
    %cst_70 = arith.constant 0.000000e+00 : f32
    %111 = vector.broadcast %cst_70 : f32 to vector<16x512xf32>
    %112 = arith.maximumf %110, %111 : vector<16x512xf32>
    %c0_71 = arith.constant 0 : index
    %c0_72 = arith.constant 0 : index
    %113 = vector.load %arg6[%c0_71, %c0_72] : memref<3x1xf32, #tpu.memory_space<vmem>>, vector<3x1xf32>
    %c4_73 = arith.constant 4 : index
    %c0_74 = arith.constant 0 : index
    %c0_75 = arith.constant 0 : index
    %114 = vector.load %arg5[%c4_73, %c0_74, %c0_75] : memref<9x3x16xf32, #tpu.memory_space<vmem>>, vector<1x3x16xf32>
    %115 = vector.shape_cast %114 : vector<1x3x16xf32> to vector<3x16xf32>
    %cst_76 = arith.constant dense<0.000000e+00> : vector<3x512xf32>
    %116 = tpu.matmul %115, %112, %cst_76 {dimension_numbers = #tpu.dot_dimension_numbers<[1], [0], [0], [1], [0, 0, 1, 1], [], []>} : vector<3x16xf32>, vector<16x512xf32>, vector<3x512xf32> -> vector<3x512xf32>
    %c17_i32_77 = arith.constant 17 : i32
    %117 = tpu.dynamic_rotate %112 by %c17_i32_77 dim 1 : vector<16x512xf32>, i32 -> vector<16x512xf32>
    %cst_78 = arith.constant 0.000000e+00 : f32
    %118 = vector.shape_cast %3 : vector<1x512xi1> to vector<1x512xi1>
    %119 = vector.broadcast %118 : vector<1x512xi1> to vector<16x512xi1>
    %120 = vector.broadcast %cst_78 : f32 to vector<16x512xf32>
    %121 = arith.select %119, %117, %120 : vector<16x512xi1>, vector<16x512xf32>
    %c0_79 = arith.constant 0 : index
    %c0_80 = arith.constant 0 : index
    %c0_81 = arith.constant 0 : index
    %122 = vector.load %arg5[%c0_79, %c0_80, %c0_81] : memref<9x3x16xf32, #tpu.memory_space<vmem>>, vector<1x3x16xf32>
    %123 = vector.shape_cast %122 : vector<1x3x16xf32> to vector<3x16xf32>
    %cst_82 = arith.constant dense<0.000000e+00> : vector<3x512xf32>
    %124 = tpu.matmul %123, %121, %cst_82 {dimension_numbers = #tpu.dot_dimension_numbers<[1], [0], [0], [1], [0, 0, 1, 1], [], []>} : vector<3x16xf32>, vector<16x512xf32>, vector<3x512xf32> -> vector<3x512xf32>
    %125 = arith.addf %116, %124 : vector<3x512xf32>
    %c16_i32_83 = arith.constant 16 : i32
    %126 = tpu.dynamic_rotate %112 by %c16_i32_83 dim 1 : vector<16x512xf32>, i32 -> vector<16x512xf32>
    %cst_84 = arith.constant 0.000000e+00 : f32
    %127 = vector.shape_cast %7 : vector<1x512xi1> to vector<1x512xi1>
    %128 = vector.broadcast %127 : vector<1x512xi1> to vector<16x512xi1>
    %129 = vector.broadcast %cst_84 : f32 to vector<16x512xf32>
    %130 = arith.select %128, %126, %129 : vector<16x512xi1>, vector<16x512xf32>
    %c1_85 = arith.constant 1 : index
    %c0_86 = arith.constant 0 : index
    %c0_87 = arith.constant 0 : index
    %131 = vector.load %arg5[%c1_85, %c0_86, %c0_87] : memref<9x3x16xf32, #tpu.memory_space<vmem>>, vector<1x3x16xf32>
    %132 = vector.shape_cast %131 : vector<1x3x16xf32> to vector<3x16xf32>
    %cst_88 = arith.constant dense<0.000000e+00> : vector<3x512xf32>
    %133 = tpu.matmul %132, %130, %cst_88 {dimension_numbers = #tpu.dot_dimension_numbers<[1], [0], [0], [1], [0, 0, 1, 1], [], []>} : vector<3x16xf32>, vector<16x512xf32>, vector<3x512xf32> -> vector<3x512xf32>
    %134 = arith.addf %125, %133 : vector<3x512xf32>
    %c15_i32_89 = arith.constant 15 : i32
    %135 = tpu.dynamic_rotate %112 by %c15_i32_89 dim 1 : vector<16x512xf32>, i32 -> vector<16x512xf32>
    %cst_90 = arith.constant 0.000000e+00 : f32
    %136 = vector.shape_cast %11 : vector<1x512xi1> to vector<1x512xi1>
    %137 = vector.broadcast %136 : vector<1x512xi1> to vector<16x512xi1>
    %138 = vector.broadcast %cst_90 : f32 to vector<16x512xf32>
    %139 = arith.select %137, %135, %138 : vector<16x512xi1>, vector<16x512xf32>
    %c2_91 = arith.constant 2 : index
    %c0_92 = arith.constant 0 : index
    %c0_93 = arith.constant 0 : index
    %140 = vector.load %arg5[%c2_91, %c0_92, %c0_93] : memref<9x3x16xf32, #tpu.memory_space<vmem>>, vector<1x3x16xf32>
    %141 = vector.shape_cast %140 : vector<1x3x16xf32> to vector<3x16xf32>
    %cst_94 = arith.constant dense<0.000000e+00> : vector<3x512xf32>
    %142 = tpu.matmul %141, %139, %cst_94 {dimension_numbers = #tpu.dot_dimension_numbers<[1], [0], [0], [1], [0, 0, 1, 1], [], []>} : vector<3x16xf32>, vector<16x512xf32>, vector<3x512xf32> -> vector<3x512xf32>
    %143 = arith.addf %134, %142 : vector<3x512xf32>
    %c1_i32_95 = arith.constant 1 : i32
    %144 = tpu.dynamic_rotate %112 by %c1_i32_95 dim 1 : vector<16x512xf32>, i32 -> vector<16x512xf32>
    %cst_96 = arith.constant 0.000000e+00 : f32
    %145 = vector.shape_cast %15 : vector<1x512xi1> to vector<1x512xi1>
    %146 = vector.broadcast %145 : vector<1x512xi1> to vector<16x512xi1>
    %147 = vector.broadcast %cst_96 : f32 to vector<16x512xf32>
    %148 = arith.select %146, %144, %147 : vector<16x512xi1>, vector<16x512xf32>
    %c3_97 = arith.constant 3 : index
    %c0_98 = arith.constant 0 : index
    %c0_99 = arith.constant 0 : index
    %149 = vector.load %arg5[%c3_97, %c0_98, %c0_99] : memref<9x3x16xf32, #tpu.memory_space<vmem>>, vector<1x3x16xf32>
    %150 = vector.shape_cast %149 : vector<1x3x16xf32> to vector<3x16xf32>
    %cst_100 = arith.constant dense<0.000000e+00> : vector<3x512xf32>
    %151 = tpu.matmul %150, %148, %cst_100 {dimension_numbers = #tpu.dot_dimension_numbers<[1], [0], [0], [1], [0, 0, 1, 1], [], []>} : vector<3x16xf32>, vector<16x512xf32>, vector<3x512xf32> -> vector<3x512xf32>
    %152 = arith.addf %143, %151 : vector<3x512xf32>
    %c511_i32_101 = arith.constant 511 : i32
    %153 = tpu.dynamic_rotate %112 by %c511_i32_101 dim 1 : vector<16x512xf32>, i32 -> vector<16x512xf32>
    %cst_102 = arith.constant 0.000000e+00 : f32
    %154 = vector.shape_cast %19 : vector<1x512xi1> to vector<1x512xi1>
    %155 = vector.broadcast %154 : vector<1x512xi1> to vector<16x512xi1>
    %156 = vector.broadcast %cst_102 : f32 to vector<16x512xf32>
    %157 = arith.select %155, %153, %156 : vector<16x512xi1>, vector<16x512xf32>
    %c5_103 = arith.constant 5 : index
    %c0_104 = arith.constant 0 : index
    %c0_105 = arith.constant 0 : index
    %158 = vector.load %arg5[%c5_103, %c0_104, %c0_105] : memref<9x3x16xf32, #tpu.memory_space<vmem>>, vector<1x3x16xf32>
    %159 = vector.shape_cast %158 : vector<1x3x16xf32> to vector<3x16xf32>
    %cst_106 = arith.constant dense<0.000000e+00> : vector<3x512xf32>
    %160 = tpu.matmul %159, %157, %cst_106 {dimension_numbers = #tpu.dot_dimension_numbers<[1], [0], [0], [1], [0, 0, 1, 1], [], []>} : vector<3x16xf32>, vector<16x512xf32>, vector<3x512xf32> -> vector<3x512xf32>
    %161 = arith.addf %152, %160 : vector<3x512xf32>
    %c497_i32_107 = arith.constant 497 : i32
    %162 = tpu.dynamic_rotate %112 by %c497_i32_107 dim 1 : vector<16x512xf32>, i32 -> vector<16x512xf32>
    %cst_108 = arith.constant 0.000000e+00 : f32
    %163 = vector.shape_cast %23 : vector<1x512xi1> to vector<1x512xi1>
    %164 = vector.broadcast %163 : vector<1x512xi1> to vector<16x512xi1>
    %165 = vector.broadcast %cst_108 : f32 to vector<16x512xf32>
    %166 = arith.select %164, %162, %165 : vector<16x512xi1>, vector<16x512xf32>
    %c6_109 = arith.constant 6 : index
    %c0_110 = arith.constant 0 : index
    %c0_111 = arith.constant 0 : index
    %167 = vector.load %arg5[%c6_109, %c0_110, %c0_111] : memref<9x3x16xf32, #tpu.memory_space<vmem>>, vector<1x3x16xf32>
    %168 = vector.shape_cast %167 : vector<1x3x16xf32> to vector<3x16xf32>
    %cst_112 = arith.constant dense<0.000000e+00> : vector<3x512xf32>
    %169 = tpu.matmul %168, %166, %cst_112 {dimension_numbers = #tpu.dot_dimension_numbers<[1], [0], [0], [1], [0, 0, 1, 1], [], []>} : vector<3x16xf32>, vector<16x512xf32>, vector<3x512xf32> -> vector<3x512xf32>
    %170 = arith.addf %161, %169 : vector<3x512xf32>
    %c496_i32_113 = arith.constant 496 : i32
    %171 = tpu.dynamic_rotate %112 by %c496_i32_113 dim 1 : vector<16x512xf32>, i32 -> vector<16x512xf32>
    %cst_114 = arith.constant 0.000000e+00 : f32
    %172 = vector.shape_cast %27 : vector<1x512xi1> to vector<1x512xi1>
    %173 = vector.broadcast %172 : vector<1x512xi1> to vector<16x512xi1>
    %174 = vector.broadcast %cst_114 : f32 to vector<16x512xf32>
    %175 = arith.select %173, %171, %174 : vector<16x512xi1>, vector<16x512xf32>
    %c7_115 = arith.constant 7 : index
    %c0_116 = arith.constant 0 : index
    %c0_117 = arith.constant 0 : index
    %176 = vector.load %arg5[%c7_115, %c0_116, %c0_117] : memref<9x3x16xf32, #tpu.memory_space<vmem>>, vector<1x3x16xf32>
    %177 = vector.shape_cast %176 : vector<1x3x16xf32> to vector<3x16xf32>
    %cst_118 = arith.constant dense<0.000000e+00> : vector<3x512xf32>
    %178 = tpu.matmul %177, %175, %cst_118 {dimension_numbers = #tpu.dot_dimension_numbers<[1], [0], [0], [1], [0, 0, 1, 1], [], []>} : vector<3x16xf32>, vector<16x512xf32>, vector<3x512xf32> -> vector<3x512xf32>
    %179 = arith.addf %170, %178 : vector<3x512xf32>
    %c495_i32_119 = arith.constant 495 : i32
    %180 = tpu.dynamic_rotate %112 by %c495_i32_119 dim 1 : vector<16x512xf32>, i32 -> vector<16x512xf32>
    %cst_120 = arith.constant 0.000000e+00 : f32
    %181 = vector.shape_cast %31 : vector<1x512xi1> to vector<1x512xi1>
    %182 = vector.broadcast %181 : vector<1x512xi1> to vector<16x512xi1>
    %183 = vector.broadcast %cst_120 : f32 to vector<16x512xf32>
    %184 = arith.select %182, %180, %183 : vector<16x512xi1>, vector<16x512xf32>
    %c8_121 = arith.constant 8 : index
    %c0_122 = arith.constant 0 : index
    %c0_123 = arith.constant 0 : index
    %185 = vector.load %arg5[%c8_121, %c0_122, %c0_123] : memref<9x3x16xf32, #tpu.memory_space<vmem>>, vector<1x3x16xf32>
    %186 = vector.shape_cast %185 : vector<1x3x16xf32> to vector<3x16xf32>
    %cst_124 = arith.constant dense<0.000000e+00> : vector<3x512xf32>
    %187 = tpu.matmul %186, %184, %cst_124 {dimension_numbers = #tpu.dot_dimension_numbers<[1], [0], [0], [1], [0, 0, 1, 1], [], []>} : vector<3x16xf32>, vector<16x512xf32>, vector<3x512xf32> -> vector<3x512xf32>
    %188 = arith.addf %179, %187 : vector<3x512xf32>
    %189 = vector.broadcast %113 : vector<3x1xf32> to vector<3x512xf32>
    %190 = arith.addf %188, %189 : vector<3x512xf32>
    %c0_125 = arith.constant 0 : index
    %c0_126 = arith.constant 0 : index
    %191 = vector.load %arg7[%c0_125, %c0_126] : memref<3x512xf32, #tpu.memory_space<vmem>>, vector<3x512xf32>
    tpu.vector_store %arg7[%c0_125, %c0_126], %190 {strides = array<i32>} : memref<3x512xf32, #tpu.memory_space<vmem>>, vector<3x512xf32>,
    return
  }
  func.func @transform_0(%arg0: i32) -> (i32, i32) {
    %c0_i32 = arith.constant 0 : i32
    %c0_i32_0 = arith.constant 0 : i32
    return %c0_i32, %arg0 : i32, i32
  }
  func.func @transform_1(%arg0: i32) -> (i32, i32, i32) {
    %c0_i32 = arith.constant 0 : i32
    %c0_i32_0 = arith.constant 0 : i32
    %c0_i32_1 = arith.constant 0 : i32
    %c0_i32_2 = arith.constant 0 : i32
    return %c0_i32, %c0_i32_0, %c0_i32_1 : i32, i32, i32
  }
  func.func @transform_2(%arg0: i32) -> (i32, i32, i32) {
    %c0_i32 = arith.constant 0 : i32
    %c0_i32_0 = arith.constant 0 : i32
    %c0_i32_1 = arith.constant 0 : i32
    %c0_i32_2 = arith.constant 0 : i32
    return %c0_i32, %c0_i32_0, %c0_i32_1 : i32, i32, i32
  }
  func.func @transform_3(%arg0: i32) -> (i32, i32) {
    %c0_i32 = arith.constant 0 : i32
    %c0_i32_0 = arith.constant 0 : i32
    %c0_i32_1 = arith.constant 0 : i32
    return %c0_i32, %c0_i32_0 : i32, i32
  }
  func.func @transform_4(%arg0: i32) -> (i32, i32, i32) {
    %c0_i32 = arith.constant 0 : i32
    %c0_i32_0 = arith.constant 0 : i32
    %c0_i32_1 = arith.constant 0 : i32
    %c0_i32_2 = arith.constant 0 : i32
    return %c0_i32, %c0_i32_0, %c0_i32_1 : i32, i32, i32
  }
  func.func @transform_5(%arg0: i32) -> (i32, i32) {
    %c0_i32 = arith.constant 0 : i32
    %c0_i32_0 = arith.constant 0 : i32
    %c0_i32_1 = arith.constant 0 : i32
    return %c0_i32, %c0_i32_0 : i32, i32
  }
  func.func @transform_6(%arg0: i32) -> (i32, i32) {
    %c0_i32 = arith.constant 0 : i32
    %c0_i32_0 = arith.constant 0 : i32
    return %c0_i32, %arg0 : i32, i32
  }
}

</mosaic_0001>

<llo_original>
// kernel: unet_student_forward.1
$region0: #{unet_student_forward.1}
  #allocation0 [shape = 'u32[]', space=smem, size = 0x4, offset = 0x4, fixed_abs, tag = 'smem constant byte address 0x4 - core index']
  #allocation1 [shape = 'u32[144,128]{1,0:T(1,128)}', space=vmem, size = 0x12000, scoped, tag = 'internal scratch']
  %s0 = inlined_call_operand.vmem [shape: f32[8,512], index: 0, kind: input, shape index: {}]
  %s1 = inlined_call_operand.vmem [shape: f32[9,1,512], index: 1, kind: input, shape index: {}]
  %s2 = inlined_call_operand.vmem [shape: f32[9,16,8], index: 2, kind: input, shape index: {}]
  %s3 = inlined_call_operand.vmem [shape: f32[16,1], index: 3, kind: input, shape index: {}]
  %s4 = inlined_call_operand.vmem [shape: f32[9,3,16], index: 4, kind: input, shape index: {}]
  %s5 = inlined_call_operand.vmem [shape: f32[3,1], index: 5, kind: input, shape index: {}]
  %s6 = inlined_call_operand.vmem [shape: f32[3,512], index: 6, kind: output, shape index: {}]
  %s7 = sld [smem:[#allocation0]]
  $region34: #{unet_student_forward.1} parent=0
    _
  %s9 = ssub.s32 1, %s7
  %s10 = scalar_select 0, %s9, %s7
  // Predicated region
  $region2: #{unet_student_forward.1} parent=0 // pred_check
    _
  $region3: #{unet_student_forward.1} parent=0 // pred_check_branch
    %12 = sbr.rel (0) target = $region5
  $region4: #{unet_student_forward.1} parent=0 // pred_region
    _
  $region5: #{unet_student_forward.1} parent=0 // pred_fallthru
    _
  // Predicated region
  $region6: #{unet_student_forward.1} parent=0 // pred_check
    _
  $region7: #{unet_student_forward.1} parent=0 // pred_check_branch
    %14 = sbr.rel (0) target = $region9
  $region8: #{unet_student_forward.1} parent=0 // pred_region
    _
  $region9: #{unet_student_forward.1} parent=0 // pred_fallthru
    _
  // Predicated region
  $region10: #{unet_student_forward.1} parent=0 // pred_check
    _
  $region11: #{unet_student_forward.1} parent=0 // pred_check_branch
    %16 = sbr.rel (0) target = $region13
  $region12: #{unet_student_forward.1} parent=0 // pred_region
    _
  $region13: #{unet_student_forward.1} parent=0 // pred_fallthru
    _
  // Predicated region
  $region14: #{unet_student_forward.1} parent=0 // pred_check
    _
  $region15: #{unet_student_forward.1} parent=0 // pred_check_branch
    %18 = sbr.rel (0) target = $region17
  $region16: #{unet_student_forward.1} parent=0 // pred_region
    _
  $region17: #{unet_student_forward.1} parent=0 // pred_fallthru
    _
  // Predicated region
  $region18: #{unet_student_forward.1} parent=0 // pred_check
    _
  $region19: #{unet_student_forward.1} parent=0 // pred_check_branch
    %20 = sbr.rel (0) target = $region21
  $region20: #{unet_student_forward.1} parent=0 // pred_region
    _
  $region21: #{unet_student_forward.1} parent=0 // pred_fallthru
    _
  // Predicated region
  $region22: #{unet_student_forward.1} parent=0 // pred_check
    _
  $region23: #{unet_student_forward.1} parent=0 // pred_check_branch
    %22 = sbr.rel (0) target = $region25
  $region24: #{unet_student_forward.1} parent=0 // pred_region
    _
  $region25: #{unet_student_forward.1} parent=0 // pred_fallthru
    _
  %v23 = vld [vmem:[%s1] sm:$0xf]
  %vm24 = vcmp.ne.f32.partialorder %v23, 0.0
  %s25 = scalar_lea.vmem %s1, 4
  %v26 = vld [vmem:[%s25] sm:$0xf]
  %vm27 = vcmp.ne.f32.partialorder %v26, 0.0
  %s28 = scalar_lea.vmem %s1, 8
  %v29 = vld [vmem:[%s28] sm:$0xf]
  %vm30 = vcmp.ne.f32.partialorder %v29, 0.0
  %s31 = scalar_lea.vmem %s1, 12
  %v32 = vld [vmem:[%s31] sm:$0xf]
  %vm33 = vcmp.ne.f32.partialorder %v32, 0.0
  %s34 = scalar_lea.vmem %s1, 20
  %v35 = vld [vmem:[%s34] sm:$0xf]
  %vm36 = vcmp.ne.f32.partialorder %v35, 0.0
  %s37 = scalar_lea.vmem %s1, 24
  %v38 = vld [vmem:[%s37] sm:$0xf]
  %vm39 = vcmp.ne.f32.partialorder %v38, 0.0
  %s40 = scalar_lea.vmem %s1, 28
  %v41 = vld [vmem:[%s40] sm:$0xf]
  %vm42 = vcmp.ne.f32.partialorder %v41, 0.0
  %s43 = scalar_lea.vmem %s1, 32
  %v44 = vld [vmem:[%s43] sm:$0xf]
  %vm45 = vcmp.ne.f32.partialorder %v44, 0.0
  %v46 = vld [vmem:[%s0] sm:$0xff]
  %v47 = vld [vmem:[%s0 + $0x8] sm:$0xff]
  %v48 = vld [vmem:[%s0 + $0x10] sm:$0xff]
  %v49 = vld [vmem:[%s0 + $0x18] sm:$0xff]
  %v50 = vld [vmem:[%s3] sm:$0xff]
  %v51 = vld [vmem:[%s3 + $0x8] sm:$0xff]
  %s52 = scalar_lea.vmem %s2, 64
  %v53 = vld [vmem:[%s52] sm:$0xff]
  %v54 = vld [vmem:[%s52 + $0x8] sm:$0xff]
  %55 = vrot.lane.b32.xlu0 %v46, 17
  %v56 = vpop.permute.xlu0 %55
  %57 = vrot.lane.b32.xlu0 %v47, 17
  %v58 = vpop.permute.xlu0 %57
  %59 = vrot.lane.b32.xlu0 %v48, 17
  %v60 = vpop.permute.xlu0 %59
  %61 = vrot.lane.b32.xlu0 %v49, 17
  %v62 = vpop.permute.xlu0 %61
  %v63 = vlaneseq
  %v64 = vand.u32 %v63, 127
  %vm65 = vcmp.lt.s32.totalorder %v64, 17
  %v66 = vsel %vm65, %v60, %v62
  %v67 = vsel %vm65, %v58, %v60
  %v68 = vsel %vm65, %v56, %v58
  %v69 = vsel %vm65, %v62, %v56
  %v70 = vsel %vm24, 1, 0
  %v71 = vlaneseq
  %v72 = vshrl.u32 %v71, 7
  %v73 = vsub.s32 0, %v72
  %v74 = vrot.slane %v70, %v73
  %v75 = vlaneseq
  %v76 = vshrl.u32 %v75, 7
  %v77 = vsub.s32 1, %v76
  %v78 = vrot.slane %v70, %v77
  %v79 = vlaneseq
  %v80 = vshrl.u32 %v79, 7
  %v81 = vsub.s32 2, %v80
  %v82 = vrot.slane %v70, %v81
  %v83 = vlaneseq
  %v84 = vshrl.u32 %v83, 7
  %v85 = vsub.s32 3, %v84
  %v86 = vrot.slane %v70, %v85
  %vm87 = vcmp.eq.s32.totalorder %v74, 1
  %vm88 = vcmp.eq.s32.totalorder %v78, 1
  %vm89 = vcmp.eq.s32.totalorder %v82, 1
  %vm90 = vcmp.eq.s32.totalorder %v86, 1
  %v91 = vsel %vm87, %v69, 0.0
  %v92 = vsel %vm88, %v68, 0.0
  %v93 = vsel %vm89, %v67, 0.0
  %v94 = vsel %vm90, %v66, 0.0
  %v95 = vld [vmem:[%s2] sm:$0xff]
  %v96 = vld [vmem:[%s2 + $0x8] sm:$0xff]
  %vm97 = vcmask 64512
  %v99 = vsel %vm97, %v95, 0
  %v102 = vsel %vm97, %v96, 0
  %104 = vmatprep.subr.mxu0 0.0
  %105 = vmatpush1.msra.mxu0 0.0
  %106 = vmatprep.subr.mxu0 0.0
  %107 = vmatpush1.msra.mxu0 0.0
  %108 = vmatprep.subr.mxu0 0.0
  %109 = vmatpush1.msra.mxu0 0.0
  %110 = vmatprep.subr.mxu0 0.0
  %111 = vmatpush1.msra.mxu0 0.0
  %112 = vmatprep.subr.mxu0 0.0
  %113 = vmatpush1.msra.mxu0 0.0
  %114 = vmatprep.subr.mxu0 0.0
  %115 = vmatpush1.msra.mxu0 0.0
  %116 = vmatprep.subr.mxu0 0.0
  %117 = vmatpush1.msra.mxu0 0.0
  %118 = vmatprep.subr.mxu0 0.0
  %119 = vmatpush1.msra.mxu0 0.0
  %120 = vmatprep.subr.mxu0 0.0
  %121 = vmatpush1.msra.mxu0 0.0
  %122 = vmatprep.subr.mxu0 0.0
  %123 = vmatpush1.msra.mxu0 0.0
  %124 = vmatprep.subr.mxu0 0.0
  %125 = vmatpush1.msra.mxu0 0.0
  %126 = vmatprep.subr.mxu0 0.0
  %127 = vmatpush1.msra.mxu0 0.0
  %128 = vmatprep.subr.mxu0 0.0
  %129 = vmatpush1.msra.mxu0 0.0
  %130 = vmatprep.subr.mxu0 0.0
  %131 = vmatpush1.msra.mxu0 0.0
  %132 = vmatprep.subr.mxu0 0.0
  %133 = vmatpush1.msra.mxu0 0.0
  %134 = vmatprep.subr.mxu0 %v92
  %135 = vmatpush1.msra.mxu0 %v91
  %136 = vmatprep.subr.mxu0 0.0
  %137 = vmatpush2.msra.mxu0 0.0
  %138 = vmatprep.subr.mxu0 0.0
  %139 = vmatpush2.msra.mxu0 0.0
  %140 = vmatprep.subr.mxu0 0.0
  %141 = vmatpush2.msra.mxu0 0.0
  %142 = vmatprep.subr.mxu0 0.0
  %143 = vmatpush2.msra.mxu0 0.0
  %144 = vmatprep.subr.mxu0 0.0
  %145 = vmatpush2.msra.mxu0 0.0
  %146 = vmatprep.subr.mxu0 0.0
  %147 = vmatpush2.msra.mxu0 0.0
  %148 = vmatprep.subr.mxu0 0.0
  %149 = vmatpush2.msra.mxu0 0.0
  %150 = vmatprep.subr.mxu0 0.0
  %151 = vmatpush2.msra.mxu0 0.0
  %152 = vmatprep.subr.mxu0 0.0
  %153 = vmatpush2.msra.mxu0 0.0
  %154 = vmatprep.subr.mxu0 0.0
  %155 = vmatpush2.msra.mxu0 0.0
  %156 = vmatprep.subr.mxu0 0.0
  %157 = vmatpush2.msra.mxu0 0.0
  %158 = vmatprep.subr.mxu0 0.0
  %159 = vmatpush2.msra.mxu0 0.0
  %160 = vmatprep.subr.mxu0 0.0
  %161 = vmatpush2.msra.mxu0 0.0
  %162 = vmatprep.subr.mxu0 0.0
  %163 = vmatpush2.msra.mxu0 0.0
  %164 = vmatprep.subr.mxu0 0.0
  %165 = vmatpush2.msra.mxu0 0.0
  %166 = vmatprep.subr.mxu0 0.0
  %167 = vmatpush2.msra.mxu0 0.0
  %168 = vmatprep.mubr.f32.mxu0 0.0
  %169 = vmatmul.mubr.f32.gmra.mxu0 %v99
  %v170 = vpop.f32.mrf.mxu0
  %v171 = vadd.f32 0.0, %v170
  %v172 = vpop.f32.mrf.mxu0
  %v173 = vadd.f32 0.0, %v172
  %174 = vmatprep.mubr.f32.mxu0 0.0
  %175 = vmatmul.mubr.f32.gmra.mxu0 %v102
  %v176 = vpop.f32.mrf.mxu0
  %v177 = vadd.f32 0.0, %v176
  %v178 = vpop.f32.mrf.mxu0
  %v179 = vadd.f32 0.0, %v178
  %180 = vdwg.mxu0
  %181 = vmatprep.subr.mxu0 0.0
  %182 = vmatpush1.msra.mxu0 0.0
  %183 = vmatprep.subr.mxu0 0.0
  %184 = vmatpush1.msra.mxu0 0.0
  %185 = vmatprep.subr.mxu0 0.0
  %186 = vmatpush1.msra.mxu0 0.0
  %187 = vmatprep.subr.mxu0 0.0
  %188 = vmatpush1.msra.mxu0 0.0
  %189 = vmatprep.subr.mxu0 0.0
  %190 = vmatpush1.msra.mxu0 0.0
  %191 = vmatprep.subr.mxu0 0.0
  %192 = vmatpush1.msra.mxu0 0.0
  %193 = vmatprep.subr.mxu0 0.0
  %194 = vmatpush1.msra.mxu0 0.0
  %195 = vmatprep.subr.mxu0 0.0
  %196 = vmatpush1.msra.mxu0 0.0
  %197 = vmatprep.subr.mxu0 0.0
  %198 = vmatpush1.msra.mxu0 0.0
  %199 = vmatprep.subr.mxu0 0.0
  %200 = vmatpush1.msra.mxu0 0.0
  %201 = vmatprep.subr.mxu0 0.0
  %202 = vmatpush1.msra.mxu0 0.0
  %203 = vmatprep.subr.mxu0 0.0
  %204 = vmatpush1.msra.mxu0 0.0
  %205 = vmatprep.subr.mxu0 0.0
  %206 = vmatpush1.msra.mxu0 0.0
  %207 = vmatprep.subr.mxu0 0.0
  %208 = vmatpush1.msra.mxu0 0.0
  %209 = vmatprep.subr.mxu0 0.0
  %210 = vmatpush1.msra.mxu0 0.0
  %211 = vmatprep.subr.mxu0 %v94
  %212 = vmatpush1.msra.mxu0 %v93
  %213 = vmatprep.subr.mxu0 0.0
  %214 = vmatpush2.msra.mxu0 0.0
  %215 = vmatprep.subr.mxu0 0.0
  %216 = vmatpush2.msra.mxu0 0.0
  %217 = vmatprep.subr.mxu0 0.0
  %218 = vmatpush2.msra.mxu0 0.0
  %219 = vmatprep.subr.mxu0 0.0
  %220 = vmatpush2.msra.mxu0 0.0
  %221 = vmatprep.subr.mxu0 0.0
  %222 = vmatpush2.msra.mxu0 0.0
  %223 = vmatprep.subr.mxu0 0.0
  %224 = vmatpush2.msra.mxu0 0.0
  %225 = vmatprep.subr.mxu0 0.0
  %226 = vmatpush2.msra.mxu0 0.0
  %227 = vmatprep.subr.mxu0 0.0
  %228 = vmatpush2.msra.mxu0 0.0
  %229 = vmatprep.subr.mxu0 0.0
  %230 = vmatpush2.msra.mxu0 0.0
  %231 = vmatprep.subr.mxu0 0.0
  %232 = vmatpush2.msra.mxu0 0.0
  %233 = vmatprep.subr.mxu0 0.0
  %234 = vmatpush2.msra.mxu0 0.0
  %235 = vmatprep.subr.mxu0 0.0
  %236 = vmatpush2.msra.mxu0 0.0
  %237 = vmatprep.subr.mxu0 0.0
  %238 = vmatpush2.msra.mxu0 0.0
  %239 = vmatprep.subr.mxu0 0.0
  %240 = vmatpush2.msra.mxu0 0.0
  %241 = vmatprep.subr.mxu0 0.0
  %242 = vmatpush2.msra.mxu0 0.0
  %243 = vmatprep.subr.mxu0 0.0
  %244 = vmatpush2.msra.mxu0 0.0
  %245 = vmatprep.mubr.f32.mxu0 0.0
  %246 = vmatmul.mubr.f32.gmra.mxu0 %v99
  %v247 = vpop.f32.mrf.mxu0
  %v248 = vadd.f32 0.0, %v247
  %v249 = vpop.f32.mrf.mxu0
  %v250 = vadd.f32 0.0, %v249
  %251 = vmatprep.mubr.f32.mxu0 0.0
  %252 = vmatmul.mubr.f32.gmra.mxu0 %v102
  %v253 = vpop.f32.mrf.mxu0
  %v254 = vadd.f32 0.0, %v253
  %v255 = vpop.f32.mrf.mxu0
  %v256 = vadd.f32 0.0, %v255
  %257 = vdwg.mxu0
  %v259 = vsel %vm97, %v53, 0
  %v262 = vsel %vm97, %v54, 0
  %264 = vmatprep.subr.mxu0 0.0
  %265 = vmatpush1.msra.mxu0 0.0
  %266 = vmatprep.subr.mxu0 0.0
  %267 = vmatpush1.msra.mxu0 0.0
  %268 = vmatprep.subr.mxu0 0.0
  %269 = vmatpush1.msra.mxu0 0.0
  %270 = vmatprep.subr.mxu0 0.0
  %271 = vmatpush1.msra.mxu0 0.0
  %272 = vmatprep.subr.mxu0 0.0
  %273 = vmatpush1.msra.mxu0 0.0
  %274 = vmatprep.subr.mxu0 0.0
  %275 = vmatpush1.msra.mxu0 0.0
  %276 = vmatprep.subr.mxu0 0.0
  %277 = vmatpush1.msra.mxu0 0.0
  %278 = vmatprep.subr.mxu0 0.0
  %279 = vmatpush1.msra.mxu0 0.0
  %280 = vmatprep.subr.mxu0 0.0
  %281 = vmatpush1.msra.mxu0 0.0
  %282 = vmatprep.subr.mxu0 0.0
  %283 = vmatpush1.msra.mxu0 0.0
  %284 = vmatprep.subr.mxu0 0.0
  %285 = vmatpush1.msra.mxu0 0.0
  %286 = vmatprep.subr.mxu0 0.0
  %287 = vmatpush1.msra.mxu0 0.0
  %288 = vmatprep.subr.mxu0 0.0
  %289 = vmatpush1.msra.mxu0 0.0
  %290 = vmatprep.subr.mxu0 0.0
  %291 = vmatpush1.msra.mxu0 0.0
  %292 = vmatprep.subr.mxu0 0.0
  %293 = vmatpush1.msra.mxu0 0.0
  %294 = vmatprep.subr.mxu0 %v47
  %295 = vmatpush1.msra.mxu0 %v46
  %296 = vmatprep.subr.mxu0 0.0
  %297 = vmatpush2.msra.mxu0 0.0
  %298 = vmatprep.subr.mxu0 0.0
  %299 = vmatpush2.msra.mxu0 0.0
  %300 = vmatprep.subr.mxu0 0.0
  %301 = vmatpush2.msra.mxu0 0.0
  %302 = vmatprep.subr.mxu0 0.0
  %303 = vmatpush2.msra.mxu0 0.0
  %304 = vmatprep.subr.mxu0 0.0
  %305 = vmatpush2.msra.mxu0 0.0
  %306 = vmatprep.subr.mxu0 0.0
  %307 = vmatpush2.msra.mxu0 0.0
  %308 = vmatprep.subr.mxu0 0.0
  %309 = vmatpush2.msra.mxu0 0.0
  %310 = vmatprep.subr.mxu0 0.0
  %311 = vmatpush2.msra.mxu0 0.0
  %312 = vmatprep.subr.mxu0 0.0
  %313 = vmatpush2.msra.mxu0 0.0
  %314 = vmatprep.subr.mxu0 0.0
  %315 = vmatpush2.msra.mxu0 0.0
  %316 = vmatprep.subr.mxu0 0.0
  %317 = vmatpush2.msra.mxu0 0.0
  %318 = vmatprep.subr.mxu0 0.0
  %319 = vmatpush2.msra.mxu0 0.0
  %320 = vmatprep.subr.mxu0 0.0
  %321 = vmatpush2.msra.mxu0 0.0
  %322 = vmatprep.subr.mxu0 0.0
  %323 = vmatpush2.msra.mxu0 0.0
  %324 = vmatprep.subr.mxu0 0.0
  %325 = vmatpush2.msra.mxu0 0.0
  %326 = vmatprep.subr.mxu0 0.0
  %327 = vmatpush2.msra.mxu0 0.0
  %328 = vmatprep.mubr.f32.mxu0 0.0
  %329 = vmatmul.mubr.f32.gmra.mxu0 %v259
  %v330 = vpop.f32.mrf.mxu0
  %v331 = vadd.f32 %v171, %v330
  %v332 = vpop.f32.mrf.mxu0
  %v333 = vadd.f32 %v173, %v332
  %334 = vmatprep.mubr.f32.mxu0 0.0
  %335 = vmatmul.mubr.f32.gmra.mxu0 %v262
  %v336 = vpop.f32.mrf.mxu0
  %v337 = vadd.f32 %v177, %v336
  %v338 = vpop.f32.mrf.mxu0
  %v339 = vadd.f32 %v179, %v338
  %340 = vdwg.mxu0
  %341 = vmatprep.subr.mxu0 0.0
  %342 = vmatpush1.msra.mxu0 0.0
  %343 = vmatprep.subr.mxu0 0.0
  %344 = vmatpush1.msra.mxu0 0.0
  %345 = vmatprep.subr.mxu0 0.0
  %346 = vmatpush1.msra.mxu0 0.0
  %347 = vmatprep.subr.mxu0 0.0
  %348 = vmatpush1.msra.mxu0 0.0
  %349 = vmatprep.subr.mxu0 0.0
  %350 = vmatpush1.msra.mxu0 0.0
  %351 = vmatprep.subr.mxu0 0.0
  %352 = vmatpush1.msra.mxu0 0.0
  %353 = vmatprep.subr.mxu0 0.0
  %354 = vmatpush1.msra.mxu0 0.0
  %355 = vmatprep.subr.mxu0 0.0
  %356 = vmatpush1.msra.mxu0 0.0
  %357 = vmatprep.subr.mxu0 0.0
  %358 = vmatpush1.msra.mxu0 0.0
  %359 = vmatprep.subr.mxu0 0.0
  %360 = vmatpush1.msra.mxu0 0.0
  %361 = vmatprep.subr.mxu0 0.0
  %362 = vmatpush1.msra.mxu0 0.0
  %363 = vmatprep.subr.mxu0 0.0
  %364 = vmatpush1.msra.mxu0 0.0
  %365 = vmatprep.subr.mxu0 0.0
  %366 = vmatpush1.msra.mxu0 0.0
  %367 = vmatprep.subr.mxu0 0.0
  %368 = vmatpush1.msra.mxu0 0.0
  %369 = vmatprep.subr.mxu0 0.0
  %370 = vmatpush1.msra.mxu0 0.0
  %371 = vmatprep.subr.mxu0 %v49
  %372 = vmatpush1.msra.mxu0 %v48
  %373 = vmatprep.subr.mxu0 0.0
  %374 = vmatpush2.msra.mxu0 0.0
  %375 = vmatprep.subr.mxu0 0.0
  %376 = vmatpush2.msra.mxu0 0.0
  %377 = vmatprep.subr.mxu0 0.0
  %378 = vmatpush2.msra.mxu0 0.0
  %379 = vmatprep.subr.mxu0 0.0
  %380 = vmatpush2.msra.mxu0 0.0
  %381 = vmatprep.subr.mxu0 0.0
  %382 = vmatpush2.msra.mxu0 0.0
  %383 = vmatprep.subr.mxu0 0.0
  %384 = vmatpush2.msra.mxu0 0.0
  %385 = vmatprep.subr.mxu0 0.0
  %386 = vmatpush2.msra.mxu0 0.0
  %387 = vmatprep.subr.mxu0 0.0
  %388 = vmatpush2.msra.mxu0 0.0
  %389 = vmatprep.subr.mxu0 0.0
  %390 = vmatpush2.msra.mxu0 0.0
  %391 = vmatprep.subr.mxu0 0.0
  %392 = vmatpush2.msra.mxu0 0.0
  %393 = vmatprep.subr.mxu0 0.0
  %394 = vmatpush2.msra.mxu0 0.0
  %395 = vmatprep.subr.mxu0 0.0
  %396 = vmatpush2.msra.mxu0 0.0
  %397 = vmatprep.subr.mxu0 0.0
  %398 = vmatpush2.msra.mxu0 0.0
  %399 = vmatprep.subr.mxu0 0.0
  %400 = vmatpush2.msra.mxu0 0.0
  %401 = vmatprep.subr.mxu0 0.0
  %402 = vmatpush2.msra.mxu0 0.0
  %403 = vmatprep.subr.mxu0 0.0
  %404 = vmatpush2.msra.mxu0 0.0
  %405 = vmatprep.mubr.f32.mxu0 0.0
  %406 = vmatmul.mubr.f32.gmra.mxu0 %v259
  %v407 = vpop.f32.mrf.mxu0
  %v408 = vadd.f32 %v248, %v407
  %v409 = vpop.f32.mrf.mxu0
  %v410 = vadd.f32 %v250, %v409
  %411 = vmatprep.mubr.f32.mxu0 0.0
  %412 = vmatmul.mubr.f32.gmra.mxu0 %v262
  %v413 = vpop.f32.mrf.mxu0
  %v414 = vadd.f32 %v254, %v413
  %v415 = vpop.f32.mrf.mxu0
  %v416 = vadd.f32 %v256, %v415
  %417 = vdwg.mxu0
  %418 = vrot.lane.b32.xlu0 %v46, 16
  %v419 = vpop.permute.xlu0 %418
  %420 = vrot.lane.b32.xlu0 %v47, 16
  %v421 = vpop.permute.xlu0 %420
  %422 = vrot.lane.b32.xlu0 %v48, 16
  %v423 = vpop.permute.xlu0 %422
  %424 = vrot.lane.b32.xlu0 %v49, 16
  %v425 = vpop.permute.xlu0 %424
  %vm426 = vcmp.lt.s32.totalorder %v64, 16
  %v427 = vsel %vm426, %v423, %v425
  %v428 = vsel %vm426, %v421, %v423
  %v429 = vsel %vm426, %v419, %v421
  %v430 = vsel %vm426, %v425, %v419
  %v431 = vsel %vm27, 1, 0
  %v432 = vlaneseq
  %v433 = vshrl.u32 %v432, 7
  %v434 = vsub.s32 0, %v433
  %v435 = vrot.slane %v431, %v434
  %v436 = vlaneseq
  %v437 = vshrl.u32 %v436, 7
  %v438 = vsub.s32 1, %v437
  %v439 = vrot.slane %v431, %v438
  %v440 = vlaneseq
  %v441 = vshrl.u32 %v440, 7
  %v442 = vsub.s32 2, %v441
  %v443 = vrot.slane %v431, %v442
  %v444 = vlaneseq
  %v445 = vshrl.u32 %v444, 7
  %v446 = vsub.s32 3, %v445
  %v447 = vrot.slane %v431, %v446
  %vm448 = vcmp.eq.s32.totalorder %v435, 1
  %vm449 = vcmp.eq.s32.totalorder %v439, 1
  %vm450 = vcmp.eq.s32.totalorder %v443, 1
  %vm451 = vcmp.eq.s32.totalorder %v447, 1
  %v452 = vsel %vm448, %v430, 0.0
  %v453 = vsel %vm449, %v429, 0.0
  %v454 = vsel %vm450, %v428, 0.0
  %v455 = vsel %vm451, %v427, 0.0
  %s456 = scalar_lea.vmem %s2, 16
  %v457 = vld [vmem:[%s456] sm:$0xff]
  %v458 = vld [vmem:[%s456 + $0x8] sm:$0xff]
  %v460 = vsel %vm97, %v457, 0
  %v463 = vsel %vm97, %v458, 0
  %465 = vmatprep.subr.mxu0 0.0
  %466 = vmatpush1.msra.mxu0 0.0
  %467 = vmatprep.subr.mxu0 0.0
  %468 = vmatpush1.msra.mxu0 0.0
  %469 = vmatprep.subr.mxu0 0.0
  %470 = vmatpush1.msra.mxu0 0.0
  %471 = vmatprep.subr.mxu0 0.0
  %472 = vmatpush1.msra.mxu0 0.0
  %473 = vmatprep.subr.mxu0 0.0
  %474 = vmatpush1.msra.mxu0 0.0
  %475 = vmatprep.subr.mxu0 0.0
  %476 = vmatpush1.msra.mxu0 0.0
  %477 = vmatprep.subr.mxu0 0.0
  %478 = vmatpush1.msra.mxu0 0.0
  %479 = vmatprep.subr.mxu0 0.0
  %480 = vmatpush1.msra.mxu0 0.0
  %481 = vmatprep.subr.mxu0 0.0
  %482 = vmatpush1.msra.mxu0 0.0
  %483 = vmatprep.subr.mxu0 0.0
  %484 = vmatpush1.msra.mxu0 0.0
  %485 = vmatprep.subr.mxu0 0.0
  %486 = vmatpush1.msra.mxu0 0.0
  %487 = vmatprep.subr.mxu0 0.0
  %488 = vmatpush1.msra.mxu0 0.0
  %489 = vmatprep.subr.mxu0 0.0
  %490 = vmatpush1.msra.mxu0 0.0
  %491 = vmatprep.subr.mxu0 0.0
  %492 = vmatpush1.msra.mxu0 0.0
  %493 = vmatprep.subr.mxu0 0.0
  %494 = vmatpush1.msra.mxu0 0.0
  %495 = vmatprep.subr.mxu0 %v453
  %496 = vmatpush1.msra.mxu0 %v452
  %497 = vmatprep.subr.mxu0 0.0
  %498 = vmatpush2.msra.mxu0 0.0
  %499 = vmatprep.subr.mxu0 0.0
  %500 = vmatpush2.msra.mxu0 0.0
  %501 = vmatprep.subr.mxu0 0.0
  %502 = vmatpush2.msra.mxu0 0.0
  %503 = vmatprep.subr.mxu0 0.0
  %504 = vmatpush2.msra.mxu0 0.0
  %505 = vmatprep.subr.mxu0 0.0
  %506 = vmatpush2.msra.mxu0 0.0
  %507 = vmatprep.subr.mxu0 0.0
  %508 = vmatpush2.msra.mxu0 0.0
  %509 = vmatprep.subr.mxu0 0.0
  %510 = vmatpush2.msra.mxu0 0.0
  %511 = vmatprep.subr.mxu0 0.0
  %512 = vmatpush2.msra.mxu0 0.0
  %513 = vmatprep.subr.mxu0 0.0
  %514 = vmatpush2.msra.mxu0 0.0
  %515 = vmatprep.subr.mxu0 0.0
  %516 = vmatpush2.msra.mxu0 0.0
  %517 = vmatprep.subr.mxu0 0.0
  %518 = vmatpush2.msra.mxu0 0.0
  %519 = vmatprep.subr.mxu0 0.0
  %520 = vmatpush2.msra.mxu0 0.0
  %521 = vmatprep.subr.mxu0 0.0
  %522 = vmatpush2.msra.mxu0 0.0
  %523 = vmatprep.subr.mxu0 0.0
  %524 = vmatpush2.msra.mxu0 0.0
  %525 = vmatprep.subr.mxu0 0.0
  %526 = vmatpush2.msra.mxu0 0.0
  %527 = vmatprep.subr.mxu0 0.0
  %528 = vmatpush2.msra.mxu0 0.0
  %529 = vmatprep.mubr.f32.mxu0 0.0
  %530 = vmatmul.mubr.f32.gmra.mxu0 %v460
  %v531 = vpop.f32.mrf.mxu0
  %v532 = vadd.f32 0.0, %v531
  %v533 = vpop.f32.mrf.mxu0
  %v534 = vadd.f32 0.0, %v533
  %535 = vmatprep.mubr.f32.mxu0 0.0
  %536 = vmatmul.mubr.f32.gmra.mxu0 %v463
  %v537 = vpop.f32.mrf.mxu0
  %v538 = vadd.f32 0.0, %v537
  %v539 = vpop.f32.mrf.mxu0
  %v540 = vadd.f32 0.0, %v539
  %541 = vdwg.mxu0
  %542 = vmatprep.subr.mxu0 0.0
  %543 = vmatpush1.msra.mxu0 0.0
  %544 = vmatprep.subr.mxu0 0.0
  %545 = vmatpush1.msra.mxu0 0.0
  %546 = vmatprep.subr.mxu0 0.0
  %547 = vmatpush1.msra.mxu0 0.0
  %548 = vmatprep.subr.mxu0 0.0
  %549 = vmatpush1.msra.mxu0 0.0
  %550 = vmatprep.subr.mxu0 0.0
  %551 = vmatpush1.msra.mxu0 0.0
  %552 = vmatprep.subr.mxu0 0.0
  %553 = vmatpush1.msra.mxu0 0.0
  %554 = vmatprep.subr.mxu0 0.0
  %555 = vmatpush1.msra.mxu0 0.0
  %556 = vmatprep.subr.mxu0 0.0
  %557 = vmatpush1.msra.mxu0 0.0
  %558 = vmatprep.subr.mxu0 0.0
  %559 = vmatpush1.msra.mxu0 0.0
  %560 = vmatprep.subr.mxu0 0.0
  %561 = vmatpush1.msra.mxu0 0.0
  %562 = vmatprep.subr.mxu0 0.0
  %563 = vmatpush1.msra.mxu0 0.0
  %564 = vmatprep.subr.mxu0 0.0
  %565 = vmatpush1.msra.mxu0 0.0
  %566 = vmatprep.subr.mxu0 0.0
  %567 = vmatpush1.msra.mxu0 0.0
  %568 = vmatprep.subr.mxu0 0.0
  %569 = vmatpush1.msra.mxu0 0.0
  %570 = vmatprep.subr.mxu0 0.0
  %571 = vmatpush1.msra.mxu0 0.0
  %572 = vmatprep.subr.mxu0 %v455
  %573 = vmatpush1.msra.mxu0 %v454
  %574 = vmatprep.subr.mxu0 0.0
  %575 = vmatpush2.msra.mxu0 0.0
  %576 = vmatprep.subr.mxu0 0.0
  %577 = vmatpush2.msra.mxu0 0.0
  %578 = vmatprep.subr.mxu0 0.0
  %579 = vmatpush2.msra.mxu0 0.0
  %580 = vmatprep.subr.mxu0 0.0
  %581 = vmatpush2.msra.mxu0 0.0
  %582 = vmatprep.subr.mxu0 0.0
  %583 = vmatpush2.msra.mxu0 0.0
  %584 = vmatprep.subr.mxu0 0.0
  %585 = vmatpush2.msra.mxu0 0.0
  %586 = vmatprep.subr.mxu0 0.0
  %587 = vmatpush2.msra.mxu0 0.0
  %588 = vmatprep.subr.mxu0 0.0
  %589 = vmatpush2.msra.mxu0 0.0
  %590 = vmatprep.subr.mxu0 0.0
  %591 = vmatpush2.msra.mxu0 0.0
  %592 = vmatprep.subr.mxu0 0.0
  %593 = vmatpush2.msra.mxu0 0.0
  %594 = vmatprep.subr.mxu0 0.0
  %595 = vmatpush2.msra.mxu0 0.0
  %596 = vmatprep.subr.mxu0 0.0
  %597 = vmatpush2.msra.mxu0 0.0
  %598 = vmatprep.subr.mxu0 0.0
  %599 = vmatpush2.msra.mxu0 0.0
  %600 = vmatprep.subr.mxu0 0.0
  %601 = vmatpush2.msra.mxu0 0.0
  %602 = vmatprep.subr.mxu0 0.0
  %603 = vmatpush2.msra.mxu0 0.0
  %604 = vmatprep.subr.mxu0 0.0
  %605 = vmatpush2.msra.mxu0 0.0
  %606 = vmatprep.mubr.f32.mxu0 0.0
  %607 = vmatmul.mubr.f32.gmra.mxu0 %v460
  %v608 = vpop.f32.mrf.mxu0
  %v609 = vadd.f32 0.0, %v608
  %v610 = vpop.f32.mrf.mxu0
  %v611 = vadd.f32 0.0, %v610
  %612 = vmatprep.mubr.f32.mxu0 0.0
  %613 = vmatmul.mubr.f32.gmra.mxu0 %v463
  %v614 = vpop.f32.mrf.mxu0
  %v615 = vadd.f32 0.0, %v614
  %v616 = vpop.f32.mrf.mxu0
  %v617 = vadd.f32 0.0, %v616
  %618 = vdwg.mxu0
  %v619 = vadd.f32 %v331, %v532
  %v620 = vadd.f32 %v333, %v534
  %v621 = vadd.f32 %v408, %v609
  %v622 = vadd.f32 %v410, %v611
  %v623 = vadd.f32 %v337, %v538
  %v624 = vadd.f32 %v339, %v540
  %v625 = vadd.f32 %v414, %v615
  %v626 = vadd.f32 %v416, %v617
  %627 = vrot.lane.b32.xlu0 %v46, 15
  %v628 = vpop.permute.xlu0 %627
  %629 = vrot.lane.b32.xlu0 %v47, 15
  %v630 = vpop.permute.xlu0 %629
  %631 = vrot.lane.b32.xlu0 %v48, 15
  %v632 = vpop.permute.xlu0 %631
  %633 = vrot.lane.b32.xlu0 %v49, 15
  %v634 = vpop.permute.xlu0 %633
  %vm635 = vcmp.lt.s32.totalorder %v64, 15
  %v636 = vsel %vm635, %v632, %v634
  %v637 = vsel %vm635, %v630, %v632
  %v638 = vsel %vm635, %v628, %v630
  %v639 = vsel %vm635, %v634, %v628
  %v640 = vsel %vm30, 1, 0
  %v641 = vlaneseq
  %v642 = vshrl.u32 %v641, 7
  %v643 = vsub.s32 0, %v642
  %v644 = vrot.slane %v640, %v643
  %v645 = vlaneseq
  %v646 = vshrl.u32 %v645, 7
  %v647 = vsub.s32 1, %v646
  %v648 = vrot.slane %v640, %v647
  %v649 = vlaneseq
  %v650 = vshrl.u32 %v649, 7
  %v651 = vsub.s32 2, %v650
  %v652 = vrot.slane %v640, %v651
  %v653 = vlaneseq
  %v654 = vshrl.u32 %v653, 7
  %v655 = vsub.s32 3, %v654
  %v656 = vrot.slane %v640, %v655
  %vm657 = vcmp.eq.s32.totalorder %v644, 1
  %vm658 = vcmp.eq.s32.totalorder %v648, 1
  %vm659 = vcmp.eq.s32.totalorder %v652, 1
  %vm660 = vcmp.eq.s32.totalorder %v656, 1
  %v661 = vsel %vm657, %v639, 0.0
  %v662 = vsel %vm658, %v638, 0.0
  %v663 = vsel %vm659, %v637, 0.0
  %v664 = vsel %vm660, %v636, 0.0
  %s665 = scalar_lea.vmem %s2, 32
  %v666 = vld [vmem:[%s665] sm:$0xff]
  %v667 = vld [vmem:[%s665 + $0x8] sm:$0xff]
  %v669 = vsel %vm97, %v666, 0
  %v672 = vsel %vm97, %v667, 0
  %674 = vmatprep.subr.mxu0 0.0
  %675 = vmatpush1.msra.mxu0 0.0
  %676 = vmatprep.subr.mxu0 0.0
  %677 = vmatpush1.msra.mxu0 0.0
  %678 = vmatprep.subr.mxu0 0.0
  %679 = vmatpush1.msra.mxu0 0.0
  %680 = vmatprep.subr.mxu0 0.0
  %681 = vmatpush1.msra.mxu0 0.0
  %682 = vmatprep.subr.mxu0 0.0
  %683 = vmatpush1.msra.mxu0 0.0
  %684 = vmatprep.subr.mxu0 0.0
  %685 = vmatpush1.msra.mxu0 0.0
  %686 = vmatprep.subr.mxu0 0.0
  %687 = vmatpush1.msra.mxu0 0.0
  %688 = vmatprep.subr.mxu0 0.0
  %689 = vmatpush1.msra.mxu0 0.0
  %690 = vmatprep.subr.mxu0 0.0
  %691 = vmatpush1.msra.mxu0 0.0
  %692 = vmatprep.subr.mxu0 0.0
  %693 = vmatpush1.msra.mxu0 0.0
  %694 = vmatprep.subr.mxu0 0.0
  %695 = vmatpush1.msra.mxu0 0.0
  %696 = vmatprep.subr.mxu0 0.0
  %697 = vmatpush1.msra.mxu0 0.0
  %698 = vmatprep.subr.mxu0 0.0
  %699 = vmatpush1.msra.mxu0 0.0
  %700 = vmatprep.subr.mxu0 0.0
  %701 = vmatpush1.msra.mxu0 0.0
  %702 = vmatprep.subr.mxu0 0.0
  %703 = vmatpush1.msra.mxu0 0.0
  %704 = vmatprep.subr.mxu0 %v662
  %705 = vmatpush1.msra.mxu0 %v661
  %706 = vmatprep.subr.mxu0 0.0
  %707 = vmatpush2.msra.mxu0 0.0
  %708 = vmatprep.subr.mxu0 0.0
  %709 = vmatpush2.msra.mxu0 0.0
  %710 = vmatprep.subr.mxu0 0.0
  %711 = vmatpush2.msra.mxu0 0.0
  %712 = vmatprep.subr.mxu0 0.0
  %713 = vmatpush2.msra.mxu0 0.0
  %714 = vmatprep.subr.mxu0 0.0
  %715 = vmatpush2.msra.mxu0 0.0
  %716 = vmatprep.subr.mxu0 0.0
  %717 = vmatpush2.msra.mxu0 0.0
  %718 = vmatprep.subr.mxu0 0.0
  %719 = vmatpush2.msra.mxu0 0.0
  %720 = vmatprep.subr.mxu0 0.0
  %721 = vmatpush2.msra.mxu0 0.0
  %722 = vmatprep.subr.mxu0 0.0
  %723 = vmatpush2.msra.mxu0 0.0
  %724 = vmatprep.subr.mxu0 0.0
  %725 = vmatpush2.msra.mxu0 0.0
  %726 = vmatprep.subr.mxu0 0.0
  %727 = vmatpush2.msra.mxu0 0.0
  %728 = vmatprep.subr.mxu0 0.0
  %729 = vmatpush2.msra.mxu0 0.0
  %730 = vmatprep.subr.mxu0 0.0
  %731 = vmatpush2.msra.mxu0 0.0
  %732 = vmatprep.subr.mxu0 0.0
  %733 = vmatpush2.msra.mxu0 0.0
  %734 = vmatprep.subr.mxu0 0.0
  %735 = vmatpush2.msra.mxu0 0.0
  %736 = vmatprep.subr.mxu0 0.0
  %737 = vmatpush2.msra.mxu0 0.0
  %738 = vmatprep.mubr.f32.mxu0 0.0
  %739 = vmatmul.mubr.f32.gmra.mxu0 %v669
  %v740 = vpop.f32.mrf.mxu0
  %v741 = vadd.f32 0.0, %v740
  %v742 = vpop.f32.mrf.mxu0
  %v743 = vadd.f32 0.0, %v742
  %744 = vmatprep.mubr.f32.mxu0 0.0
  %745 = vmatmul.mubr.f32.gmra.mxu0 %v672
  %v746 = vpop.f32.mrf.mxu0
  %v747 = vadd.f32 0.0, %v746
  %v748 = vpop.f32.mrf.mxu0
  %v749 = vadd.f32 0.0, %v748
  %750 = vdwg.mxu0
  %751 = vmatprep.subr.mxu0 0.0
  %752 = vmatpush1.msra.mxu0 0.0
  %753 = vmatprep.subr.mxu0 0.0
  %754 = vmatpush1.msra.mxu0 0.0
  %755 = vmatprep.subr.mxu0 0.0
  %756 = vmatpush1.msra.mxu0 0.0
  %757 = vmatprep.subr.mxu0 0.0
  %758 = vmatpush1.msra.mxu0 0.0
  %759 = vmatprep.subr.mxu0 0.0
  %760 = vmatpush1.msra.mxu0 0.0
  %761 = vmatprep.subr.mxu0 0.0
  %762 = vmatpush1.msra.mxu0 0.0
  %763 = vmatprep.subr.mxu0 0.0
  %764 = vmatpush1.msra.mxu0 0.0
  %765 = vmatprep.subr.mxu0 0.0
  %766 = vmatpush1.msra.mxu0 0.0
  %767 = vmatprep.subr.mxu0 0.0
  %768 = vmatpush1.msra.mxu0 0.0
  %769 = vmatprep.subr.mxu0 0.0
  %770 = vmatpush1.msra.mxu0 0.0
  %771 = vmatprep.subr.mxu0 0.0
  %772 = vmatpush1.msra.mxu0 0.0
  %773 = vmatprep.subr.mxu0 0.0
  %774 = vmatpush1.msra.mxu0 0.0
  %775 = vmatprep.subr.mxu0 0.0
  %776 = vmatpush1.msra.mxu0 0.0
  %777 = vmatprep.subr.mxu0 0.0
  %778 = vmatpush1.msra.mxu0 0.0
  %779 = vmatprep.subr.mxu0 0.0
  %780 = vmatpush1.msra.mxu0 0.0
  %781 = vmatprep.subr.mxu0 %v664
  %782 = vmatpush1.msra.mxu0 %v663
  %783 = vmatprep.subr.mxu0 0.0
  %784 = vmatpush2.msra.mxu0 0.0
  %785 = vmatprep.subr.mxu0 0.0
  %786 = vmatpush2.msra.mxu0 0.0
  %787 = vmatprep.subr.mxu0 0.0
  %788 = vmatpush2.msra.mxu0 0.0
  %789 = vmatprep.subr.mxu0 0.0
  %790 = vmatpush2.msra.mxu0 0.0
  %791 = vmatprep.subr.mxu0 0.0
  %792 = vmatpush2.msra.mxu0 0.0
  %793 = vmatprep.subr.mxu0 0.0
  %794 = vmatpush2.msra.mxu0 0.0
  %795 = vmatprep.subr.mxu0 0.0
  %796 = vmatpush2.msra.mxu0 0.0
  %797 = vmatprep.subr.mxu0 0.0
  %798 = vmatpush2.msra.mxu0 0.0
  %799 = vmatprep.subr.mxu0 0.0
  %800 = vmatpush2.msra.mxu0 0.0
  %801 = vmatprep.subr.mxu0 0.0
  %802 = vmatpush2.msra.mxu0 0.0
  %803 = vmatprep.subr.mxu0 0.0
  %804 = vmatpush2.msra.mxu0 0.0
  %805 = vmatprep.subr.mxu0 0.0
  %806 = vmatpush2.msra.mxu0 0.0
  %807 = vmatprep.subr.mxu0 0.0
  %808 = vmatpush2.msra.mxu0 0.0
  %809 = vmatprep.subr.mxu0 0.0
  %810 = vmatpush2.msra.mxu0 0.0
  %811 = vmatprep.subr.mxu0 0.0
  %812 = vmatpush2.msra.mxu0 0.0
  %813 = vmatprep.subr.mxu0 0.0
  %814 = vmatpush2.msra.mxu0 0.0
  %815 = vmatprep.mubr.f32.mxu0 0.0
  %816 = vmatmul.mubr.f32.gmra.mxu0 %v669
  %v817 = vpop.f32.mrf.mxu0
  %v818 = vadd.f32 0.0, %v817
  %v819 = vpop.f32.mrf.mxu0
  %v820 = vadd.f32 0.0, %v819
  %821 = vmatprep.mubr.f32.mxu0 0.0
  %822 = vmatmul.mubr.f32.gmra.mxu0 %v672
  %v823 = vpop.f32.mrf.mxu0
  %v824 = vadd.f32 0.0, %v823
  %v825 = vpop.f32.mrf.mxu0
  %v826 = vadd.f32 0.0, %v825
  %827 = vdwg.mxu0
  %v828 = vadd.f32 %v619, %v741
  %v829 = vadd.f32 %v620, %v743
  %v830 = vadd.f32 %v621, %v818
  %v831 = vadd.f32 %v622, %v820
  %v832 = vadd.f32 %v623, %v747
  %v833 = vadd.f32 %v624, %v749
  %v834 = vadd.f32 %v625, %v824
  %v835 = vadd.f32 %v626, %v826
  %836 = vrot.lane.b32.xlu0 %v46, 1
  %v837 = vpop.permute.xlu0 %836
  %838 = vrot.lane.b32.xlu0 %v47, 1
  %v839 = vpop.permute.xlu0 %838
  %840 = vrot.lane.b32.xlu0 %v48, 1
  %v841 = vpop.permute.xlu0 %840
  %842 = vrot.lane.b32.xlu0 %v49, 1
  %v843 = vpop.permute.xlu0 %842
  %vm844 = vcmp.lt.s32.totalorder %v64, 1
  %v845 = vsel %vm844, %v841, %v843
  %v846 = vsel %vm844, %v839, %v841
  %v847 = vsel %vm844, %v837, %v839
  %v848 = vsel %vm844, %v843, %v837
  %v849 = vsel %vm33, 1, 0
  %v850 = vlaneseq
  %v851 = vshrl.u32 %v850, 7
  %v852 = vsub.s32 0, %v851
  %v853 = vrot.slane %v849, %v852
  %v854 = vlaneseq
  %v855 = vshrl.u32 %v854, 7
  %v856 = vsub.s32 1, %v855
  %v857 = vrot.slane %v849, %v856
  %v858 = vlaneseq
  %v859 = vshrl.u32 %v858, 7
  %v860 = vsub.s32 2, %v859
  %v861 = vrot.slane %v849, %v860
  %v862 = vlaneseq
  %v863 = vshrl.u32 %v862, 7
  %v864 = vsub.s32 3, %v863
  %v865 = vrot.slane %v849, %v864
  %vm866 = vcmp.eq.s32.totalorder %v853, 1
  %vm867 = vcmp.eq.s32.totalorder %v857, 1
  %vm868 = vcmp.eq.s32.totalorder %v861, 1
  %vm869 = vcmp.eq.s32.totalorder %v865, 1
  %v870 = vsel %vm866, %v848, 0.0
  %v871 = vsel %vm867, %v847, 0.0
  %v872 = vsel %vm868, %v846, 0.0
  %v873 = vsel %vm869, %v845, 0.0
  %s874 = scalar_lea.vmem %s2, 48
  %v875 = vld [vmem:[%s874] sm:$0xff]
  %v876 = vld [vmem:[%s874 + $0x8] sm:$0xff]
  %v878 = vsel %vm97, %v875, 0
  %v881 = vsel %vm97, %v876, 0
  %883 = vmatprep.subr.mxu0 0.0
  %884 = vmatpush1.msra.mxu0 0.0
  %885 = vmatprep.subr.mxu0 0.0
  %886 = vmatpush1.msra.mxu0 0.0
  %887 = vmatprep.subr.mxu0 0.0
  %888 = vmatpush1.msra.mxu0 0.0
  %889 = vmatprep.subr.mxu0 0.0
  %890 = vmatpush1.msra.mxu0 0.0
  %891 = vmatprep.subr.mxu0 0.0
  %892 = vmatpush1.msra.mxu0 0.0
  %893 = vmatprep.subr.mxu0 0.0
  %894 = vmatpush1.msra.mxu0 0.0
  %895 = vmatprep.subr.mxu0 0.0
  %896 = vmatpush1.msra.mxu0 0.0
  %897 = vmatprep.subr.mxu0 0.0
  %898 = vmatpush1.msra.mxu0 0.0
  %899 = vmatprep.subr.mxu0 0.0
  %900 = vmatpush1.msra.mxu0 0.0
  %901 = vmatprep.subr.mxu0 0.0
  %902 = vmatpush1.msra.mxu0 0.0
  %903 = vmatprep.subr.mxu0 0.0
  %904 = vmatpush1.msra.mxu0 0.0
  %905 = vmatprep.subr.mxu0 0.0
  %906 = vmatpush1.msra.mxu0 0.0
  %907 = vmatprep.subr.mxu0 0.0
  %908 = vmatpush1.msra.mxu0 0.0
  %909 = vmatprep.subr.mxu0 0.0
  %910 = vmatpush1.msra.mxu0 0.0
  %911 = vmatprep.subr.mxu0 0.0
  %912 = vmatpush1.msra.mxu0 0.0
  %913 = vmatprep.subr.mxu0 %v871
  %914 = vmatpush1.msra.mxu0 %v870
  %915 = vmatprep.subr.mxu0 0.0
  %916 = vmatpush2.msra.mxu0 0.0
  %917 = vmatprep.subr.mxu0 0.0
  %918 = vmatpush2.msra.mxu0 0.0
  %919 = vmatprep.subr.mxu0 0.0
  %920 = vmatpush2.msra.mxu0 0.0
  %921 = vmatprep.subr.mxu0 0.0
  %922 = vmatpush2.msra.mxu0 0.0
  %923 = vmatprep.subr.mxu0 0.0
  %924 = vmatpush2.msra.mxu0 0.0
  %925 = vmatprep.subr.mxu0 0.0
  %926 = vmatpush2.msra.mxu0 0.0
  %927 = vmatprep.subr.mxu0 0.0
  %928 = vmatpush2.msra.mxu0 0.0
  %929 = vmatprep.subr.mxu0 0.0
  %930 = vmatpush2.msra.mxu0 0.0
  %931 = vmatprep.subr.mxu0 0.0
  %932 = vmatpush2.msra.mxu0 0.0
  %933 = vmatprep.subr.mxu0 0.0
  %934 = vmatpush2.msra.mxu0 0.0
  %935 = vmatprep.subr.mxu0 0.0
  %936 = vmatpush2.msra.mxu0 0.0
  %937 = vmatprep.subr.mxu0 0.0
  %938 = vmatpush2.msra.mxu0 0.0
  %939 = vmatprep.subr.mxu0 0.0
  %940 = vmatpush2.msra.mxu0 0.0
  %941 = vmatprep.subr.mxu0 0.0
  %942 = vmatpush2.msra.mxu0 0.0
  %943 = vmatprep.subr.mxu0 0.0
  %944 = vmatpush2.msra.mxu0 0.0
  %945 = vmatprep.subr.mxu0 0.0
  %946 = vmatpush2.msra.mxu0 0.0
  %947 = vmatprep.mubr.f32.mxu0 0.0
  %948 = vmatmul.mubr.f32.gmra.mxu0 %v878
  %v949 = vpop.f32.mrf.mxu0
  %v950 = vadd.f32 0.0, %v949
  %v951 = vpop.f32.mrf.mxu0
  %v952 = vadd.f32 0.0, %v951
  %953 = vmatprep.mubr.f32.mxu0 0.0
  %954 = vmatmul.mubr.f32.gmra.mxu0 %v881
  %v955 = vpop.f32.mrf.mxu0
  %v956 = vadd.f32 0.0, %v955
  %v957 = vpop.f32.mrf.mxu0
  %v958 = vadd.f32 0.0, %v957
  %959 = vdwg.mxu0
  %960 = vmatprep.subr.mxu0 0.0
  %961 = vmatpush1.msra.mxu0 0.0
  %962 = vmatprep.subr.mxu0 0.0
  %963 = vmatpush1.msra.mxu0 0.0
  %964 = vmatprep.subr.mxu0 0.0
  %965 = vmatpush1.msra.mxu0 0.0
  %966 = vmatprep.subr.mxu0 0.0
  %967 = vmatpush1.msra.mxu0 0.0
  %968 = vmatprep.subr.mxu0 0.0
  %969 = vmatpush1.msra.mxu0 0.0
  %970 = vmatprep.subr.mxu0 0.0
  %971 = vmatpush1.msra.mxu0 0.0
  %972 = vmatprep.subr.mxu0 0.0
  %973 = vmatpush1.msra.mxu0 0.0
  %974 = vmatprep.subr.mxu0 0.0
  %975 = vmatpush1.msra.mxu0 0.0
  %976 = vmatprep.subr.mxu0 0.0
  %977 = vmatpush1.msra.mxu0 0.0
  %978 = vmatprep.subr.mxu0 0.0
  %979 = vmatpush1.msra.mxu0 0.0
  %980 = vmatprep.subr.mxu0 0.0
  %981 = vmatpush1.msra.mxu0 0.0
  %982 = vmatprep.subr.mxu0 0.0
  %983 = vmatpush1.msra.mxu0 0.0
  %984 = vmatprep.subr.mxu0 0.0
  %985 = vmatpush1.msra.mxu0 0.0
  %986 = vmatprep.subr.mxu0 0.0
  %987 = vmatpush1.msra.mxu0 0.0
  %988 = vmatprep.subr.mxu0 0.0
  %989 = vmatpush1.msra.mxu0 0.0
  %990 = vmatprep.subr.mxu0 %v873
  %991 = vmatpush1.msra.mxu0 %v872
  %992 = vmatprep.subr.mxu0 0.0
  %993 = vmatpush2.msra.mxu0 0.0
  %994 = vmatprep.subr.mxu0 0.0
  %995 = vmatpush2.msra.mxu0 0.0
  %996 = vmatprep.subr.mxu0 0.0
  %997 = vmatpush2.msra.mxu0 0.0
  %998 = vmatprep.subr.mxu0 0.0
  %999 = vmatpush2.msra.mxu0 0.0
  %1000 = vmatprep.subr.mxu0 0.0
  %1001 = vmatpush2.msra.mxu0 0.0
  %1002 = vmatprep.subr.mxu0 0.0
  %1003 = vmatpush2.msra.mxu0 0.0
  %1004 = vmatprep.subr.mxu0 0.0
  %1005 = vmatpush2.msra.mxu0 0.0
  %1006 = vmatprep.subr.mxu0 0.0
  %1007 = vmatpush2.msra.mxu0 0.0
  %1008 = vmatprep.subr.mxu0 0.0
  %1009 = vmatpush2.msra.mxu0 0.0
  %1010 = vmatprep.subr.mxu0 0.0
  %1011 = vmatpush2.msra.mxu0 0.0
  %1012 = vmatprep.subr.mxu0 0.0
  %1013 = vmatpush2.msra.mxu0 0.0
  %1014 = vmatprep.subr.mxu0 0.0
  %1015 = vmatpush2.msra.mxu0 0.0
  %1016 = vmatprep.subr.mxu0 0.0
  %1017 = vmatpush2.msra.mxu0 0.0
  %1018 = vmatprep.subr.mxu0 0.0
  %1019 = vmatpush2.msra.mxu0 0.0
  %1020 = vmatprep.subr.mxu0 0.0
  %1021 = vmatpush2.msra.mxu0 0.0
  %1022 = vmatprep.subr.mxu0 0.0
  %1023 = vmatpush2.msra.mxu0 0.0
  %1024 = vmatprep.mubr.f32.mxu0 0.0
  %1025 = vmatmul.mubr.f32.gmra.mxu0 %v878
  %v1026 = vpop.f32.mrf.mxu0
  %v1027 = vadd.f32 0.0, %v1026
  %v1028 = vpop.f32.mrf.mxu0
  %v1029 = vadd.f32 0.0, %v1028
  %1030 = vmatprep.mubr.f32.mxu0 0.0
  %1031 = vmatmul.mubr.f32.gmra.mxu0 %v881
  %v1032 = vpop.f32.mrf.mxu0
  %v1033 = vadd.f32 0.0, %v1032
  %v1034 = vpop.f32.mrf.mxu0
  %v1035 = vadd.f32 0.0, %v1034
  %1036 = vdwg.mxu0
  %v1037 = vadd.f32 %v828, %v950
  %v1038 = vadd.f32 %v829, %v952
  %v1039 = vadd.f32 %v830, %v1027
  %v1040 = vadd.f32 %v831, %v1029
  %v1041 = vadd.f32 %v832, %v956
  %v1042 = vadd.f32 %v833, %v958
  %v1043 = vadd.f32 %v834, %v1033
  %v1044 = vadd.f32 %v835, %v1035
  %1045 = vrot.lane.b32.xlu0 %v46, 127
  %v1046 = vpop.permute.xlu0 %1045
  %1047 = vrot.lane.b32.xlu0 %v47, 127
  %v1048 = vpop.permute.xlu0 %1047
  %1049 = vrot.lane.b32.xlu0 %v48, 127
  %v1050 = vpop.permute.xlu0 %1049
  %1051 = vrot.lane.b32.xlu0 %v49, 127
  %v1052 = vpop.permute.xlu0 %1051
  %vm1053 = vcmp.lt.s32.totalorder %v64, 127
  %v1054 = vsel %vm1053, %v1050, %v1052
  %v1055 = vsel %vm1053, %v1048, %v1050
  %v1056 = vsel %vm1053, %v1046, %v1048
  %v1057 = vsel %vm1053, %v1052, %v1046
  %v1058 = vsel %vm36, 1, 0
  %v1059 = vlaneseq
  %v1060 = vshrl.u32 %v1059, 7
  %v1061 = vsub.s32 0, %v1060
  %v1062 = vrot.slane %v1058, %v1061
  %v1063 = vlaneseq
  %v1064 = vshrl.u32 %v1063, 7
  %v1065 = vsub.s32 1, %v1064
  %v1066 = vrot.slane %v1058, %v1065
  %v1067 = vlaneseq
  %v1068 = vshrl.u32 %v1067, 7
  %v1069 = vsub.s32 2, %v1068
  %v1070 = vrot.slane %v1058, %v1069
  %v1071 = vlaneseq
  %v1072 = vshrl.u32 %v1071, 7
  %v1073 = vsub.s32 3, %v1072
  %v1074 = vrot.slane %v1058, %v1073
  %vm1075 = vcmp.eq.s32.totalorder %v1062, 1
  %vm1076 = vcmp.eq.s32.totalorder %v1066, 1
  %vm1077 = vcmp.eq.s32.totalorder %v1070, 1
  %vm1078 = vcmp.eq.s32.totalorder %v1074, 1
  %v1079 = vsel %vm1075, %v1056, 0.0
  %v1080 = vsel %vm1076, %v1055, 0.0
  %v1081 = vsel %vm1077, %v1054, 0.0
  %v1082 = vsel %vm1078, %v1057, 0.0
  %s1083 = scalar_lea.vmem %s2, 80
  %v1084 = vld [vmem:[%s1083] sm:$0xff]
  %v1085 = vld [vmem:[%s1083 + $0x8] sm:$0xff]
  %v1087 = vsel %vm97, %v1084, 0
  %v1090 = vsel %vm97, %v1085, 0
  %1092 = vmatprep.subr.mxu0 0.0
  %1093 = vmatpush1.msra.mxu0 0.0
  %1094 = vmatprep.subr.mxu0 0.0
  %1095 = vmatpush1.msra.mxu0 0.0
  %1096 = vmatprep.subr.mxu0 0.0
  %1097 = vmatpush1.msra.mxu0 0.0
  %1098 = vmatprep.subr.mxu0 0.0
  %1099 = vmatpush1.msra.mxu0 0.0
  %1100 = vmatprep.subr.mxu0 0.0
  %1101 = vmatpush1.msra.mxu0 0.0
  %1102 = vmatprep.subr.mxu0 0.0
  %1103 = vmatpush1.msra.mxu0 0.0
  %1104 = vmatprep.subr.mxu0 0.0
  %1105 = vmatpush1.msra.mxu0 0.0
  %1106 = vmatprep.subr.mxu0 0.0
  %1107 = vmatpush1.msra.mxu0 0.0
  %1108 = vmatprep.subr.mxu0 0.0
  %1109 = vmatpush1.msra.mxu0 0.0
  %1110 = vmatprep.subr.mxu0 0.0
  %1111 = vmatpush1.msra.mxu0 0.0
  %1112 = vmatprep.subr.mxu0 0.0
  %1113 = vmatpush1.msra.mxu0 0.0
  %1114 = vmatprep.subr.mxu0 0.0
  %1115 = vmatpush1.msra.mxu0 0.0
  %1116 = vmatprep.subr.mxu0 0.0
  %1117 = vmatpush1.msra.mxu0 0.0
  %1118 = vmatprep.subr.mxu0 0.0
  %1119 = vmatpush1.msra.mxu0 0.0
  %1120 = vmatprep.subr.mxu0 0.0
  %1121 = vmatpush1.msra.mxu0 0.0
  %1122 = vmatprep.subr.mxu0 %v1080
  %1123 = vmatpush1.msra.mxu0 %v1079
  %1124 = vmatprep.subr.mxu0 0.0
  %1125 = vmatpush2.msra.mxu0 0.0
  %1126 = vmatprep.subr.mxu0 0.0
  %1127 = vmatpush2.msra.mxu0 0.0
  %1128 = vmatprep.subr.mxu0 0.0
  %1129 = vmatpush2.msra.mxu0 0.0
  %1130 = vmatprep.subr.mxu0 0.0
  %1131 = vmatpush2.msra.mxu0 0.0
  %1132 = vmatprep.subr.mxu0 0.0
  %1133 = vmatpush2.msra.mxu0 0.0
  %1134 = vmatprep.subr.mxu0 0.0
  %1135 = vmatpush2.msra.mxu0 0.0
  %1136 = vmatprep.subr.mxu0 0.0
  %1137 = vmatpush2.msra.mxu0 0.0
  %1138 = vmatprep.subr.mxu0 0.0
  %1139 = vmatpush2.msra.mxu0 0.0
  %1140 = vmatprep.subr.mxu0 0.0
  %1141 = vmatpush2.msra.mxu0 0.0
  %1142 = vmatprep.subr.mxu0 0.0
  %1143 = vmatpush2.msra.mxu0 0.0
  %1144 = vmatprep.subr.mxu0 0.0
  %1145 = vmatpush2.msra.mxu0 0.0
  %1146 = vmatprep.subr.mxu0 0.0
  %1147 = vmatpush2.msra.mxu0 0.0
  %1148 = vmatprep.subr.mxu0 0.0
  %1149 = vmatpush2.msra.mxu0 0.0
  %1150 = vmatprep.subr.mxu0 0.0
  %1151 = vmatpush2.msra.mxu0 0.0
  %1152 = vmatprep.subr.mxu0 0.0
  %1153 = vmatpush2.msra.mxu0 0.0
  %1154 = vmatprep.subr.mxu0 0.0
  %1155 = vmatpush2.msra.mxu0 0.0
  %1156 = vmatprep.mubr.f32.mxu0 0.0
  %1157 = vmatmul.mubr.f32.gmra.mxu0 %v1087
  %v1158 = vpop.f32.mrf.mxu0
  %v1159 = vadd.f32 0.0, %v1158
  %v1160 = vpop.f32.mrf.mxu0
  %v1161 = vadd.f32 0.0, %v1160
  %1162 = vmatprep.mubr.f32.mxu0 0.0
  %1163 = vmatmul.mubr.f32.gmra.mxu0 %v1090
  %v1164 = vpop.f32.mrf.mxu0
  %v1165 = vadd.f32 0.0, %v1164
  %v1166 = vpop.f32.mrf.mxu0
  %v1167 = vadd.f32 0.0, %v1166
  %1168 = vdwg.mxu0
  %1169 = vmatprep.subr.mxu0 0.0
  %1170 = vmatpush1.msra.mxu0 0.0
  %1171 = vmatprep.subr.mxu0 0.0
  %1172 = vmatpush1.msra.mxu0 0.0
  %1173 = vmatprep.subr.mxu0 0.0
  %1174 = vmatpush1.msra.mxu0 0.0
  %1175 = vmatprep.subr.mxu0 0.0
  %1176 = vmatpush1.msra.mxu0 0.0
  %1177 = vmatprep.subr.mxu0 0.0
  %1178 = vmatpush1.msra.mxu0 0.0
  %1179 = vmatprep.subr.mxu0 0.0
  %1180 = vmatpush1.msra.mxu0 0.0
  %1181 = vmatprep.subr.mxu0 0.0
  %1182 = vmatpush1.msra.mxu0 0.0
  %1183 = vmatprep.subr.mxu0 0.0
  %1184 = vmatpush1.msra.mxu0 0.0
  %1185 = vmatprep.subr.mxu0 0.0
  %1186 = vmatpush1.msra.mxu0 0.0
  %1187 = vmatprep.subr.mxu0 0.0
  %1188 = vmatpush1.msra.mxu0 0.0
  %1189 = vmatprep.subr.mxu0 0.0
  %1190 = vmatpush1.msra.mxu0 0.0
  %1191 = vmatprep.subr.mxu0 0.0
  %1192 = vmatpush1.msra.mxu0 0.0
  %1193 = vmatprep.subr.mxu0 0.0
  %1194 = vmatpush1.msra.mxu0 0.0
  %1195 = vmatprep.subr.mxu0 0.0
  %1196 = vmatpush1.msra.mxu0 0.0
  %1197 = vmatprep.subr.mxu0 0.0
  %1198 = vmatpush1.msra.mxu0 0.0
  %1199 = vmatprep.subr.mxu0 %v1082
  %1200 = vmatpush1.msra.mxu0 %v1081
  %1201 = vmatprep.subr.mxu0 0.0
  %1202 = vmatpush2.msra.mxu0 0.0
  %1203 = vmatprep.subr.mxu0 0.0
  %1204 = vmatpush2.msra.mxu0 0.0
  %1205 = vmatprep.subr.mxu0 0.0
  %1206 = vmatpush2.msra.mxu0 0.0
  %1207 = vmatprep.subr.mxu0 0.0
  %1208 = vmatpush2.msra.mxu0 0.0
  %1209 = vmatprep.subr.mxu0 0.0
  %1210 = vmatpush2.msra.mxu0 0.0
  %1211 = vmatprep.subr.mxu0 0.0
  %1212 = vmatpush2.msra.mxu0 0.0
  %1213 = vmatprep.subr.mxu0 0.0
  %1214 = vmatpush2.msra.mxu0 0.0
  %1215 = vmatprep.subr.mxu0 0.0
  %1216 = vmatpush2.msra.mxu0 0.0
  %1217 = vmatprep.subr.mxu0 0.0
  %1218 = vmatpush2.msra.mxu0 0.0
  %1219 = vmatprep.subr.mxu0 0.0
  %1220 = vmatpush2.msra.mxu0 0.0
  %1221 = vmatprep.subr.mxu0 0.0
  %1222 = vmatpush2.msra.mxu0 0.0
  %1223 = vmatprep.subr.mxu0 0.0
  %1224 = vmatpush2.msra.mxu0 0.0
  %1225 = vmatprep.subr.mxu0 0.0
  %1226 = vmatpush2.msra.mxu0 0.0
  %1227 = vmatprep.subr.mxu0 0.0
  %1228 = vmatpush2.msra.mxu0 0.0
  %1229 = vmatprep.subr.mxu0 0.0
  %1230 = vmatpush2.msra.mxu0 0.0
  %1231 = vmatprep.subr.mxu0 0.0
  %1232 = vmatpush2.msra.mxu0 0.0
  %1233 = vmatprep.mubr.f32.mxu0 0.0
  %1234 = vmatmul.mubr.f32.gmra.mxu0 %v1087
  %v1235 = vpop.f32.mrf.mxu0
  %v1236 = vadd.f32 0.0, %v1235
  %v1237 = vpop.f32.mrf.mxu0
  %v1238 = vadd.f32 0.0, %v1237
  %1239 = vmatprep.mubr.f32.mxu0 0.0
  %1240 = vmatmul.mubr.f32.gmra.mxu0 %v1090
  %v1241 = vpop.f32.mrf.mxu0
  %v1242 = vadd.f32 0.0, %v1241
  %v1243 = vpop.f32.mrf.mxu0
  %v1244 = vadd.f32 0.0, %v1243
  %1245 = vdwg.mxu0
  %v1246 = vadd.f32 %v1037, %v1159
  %v1247 = vadd.f32 %v1038, %v1161
  %v1248 = vadd.f32 %v1039, %v1236
  %v1249 = vadd.f32 %v1040, %v1238
  %v1250 = vadd.f32 %v1041, %v1165
  %v1251 = vadd.f32 %v1042, %v1167
  %v1252 = vadd.f32 %v1043, %v1242
  %v1253 = vadd.f32 %v1044, %v1244
  %1254 = vrot.lane.b32.xlu0 %v46, 113
  %v1255 = vpop.permute.xlu0 %1254
  %1256 = vrot.lane.b32.xlu0 %v47, 113
  %v1257 = vpop.permute.xlu0 %1256
  %1258 = vrot.lane.b32.xlu0 %v48, 113
  %v1259 = vpop.permute.xlu0 %1258
  %1260 = vrot.lane.b32.xlu0 %v49, 113
  %v1261 = vpop.permute.xlu0 %1260
  %vm1262 = vcmp.lt.s32.totalorder %v64, 113
  %v1263 = vsel %vm1262, %v1259, %v1261
  %v1264 = vsel %vm1262, %v1257, %v1259
  %v1265 = vsel %vm1262, %v1255, %v1257
  %v1266 = vsel %vm1262, %v1261, %v1255
  %v1267 = vsel %vm39, 1, 0
  %v1268 = vlaneseq
  %v1269 = vshrl.u32 %v1268, 7
  %v1270 = vsub.s32 0, %v1269
  %v1271 = vrot.slane %v1267, %v1270
  %v1272 = vlaneseq
  %v1273 = vshrl.u32 %v1272, 7
  %v1274 = vsub.s32 1, %v1273
  %v1275 = vrot.slane %v1267, %v1274
  %v1276 = vlaneseq
  %v1277 = vshrl.u32 %v1276, 7
  %v1278 = vsub.s32 2, %v1277
  %v1279 = vrot.slane %v1267, %v1278
  %v1280 = vlaneseq
  %v1281 = vshrl.u32 %v1280, 7
  %v1282 = vsub.s32 3, %v1281
  %v1283 = vrot.slane %v1267, %v1282
  %vm1284 = vcmp.eq.s32.totalorder %v1271, 1
  %vm1285 = vcmp.eq.s32.totalorder %v1275, 1
  %vm1286 = vcmp.eq.s32.totalorder %v1279, 1
  %vm1287 = vcmp.eq.s32.totalorder %v1283, 1
  %v1288 = vsel %vm1284, %v1265, 0.0
  %v1289 = vsel %vm1285, %v1264, 0.0
  %v1290 = vsel %vm1286, %v1263, 0.0
  %v1291 = vsel %vm1287, %v1266, 0.0
  %s1292 = scalar_lea.vmem %s2, 96
  %v1293 = vld [vmem:[%s1292] sm:$0xff]
  %v1294 = vld [vmem:[%s1292 + $0x8] sm:$0xff]
  %v1296 = vsel %vm97, %v1293, 0
  %v1299 = vsel %vm97, %v1294, 0
  %1301 = vmatprep.subr.mxu0 0.0
  %1302 = vmatpush1.msra.mxu0 0.0
  %1303 = vmatprep.subr.mxu0 0.0
  %1304 = vmatpush1.msra.mxu0 0.0
  %1305 = vmatprep.subr.mxu0 0.0
  %1306 = vmatpush1.msra.mxu0 0.0
  %1307 = vmatprep.subr.mxu0 0.0
  %1308 = vmatpush1.msra.mxu0 0.0
  %1309 = vmatprep.subr.mxu0 0.0
  %1310 = vmatpush1.msra.mxu0 0.0
  %1311 = vmatprep.subr.mxu0 0.0
  %1312 = vmatpush1.msra.mxu0 0.0
  %1313 = vmatprep.subr.mxu0 0.0
  %1314 = vmatpush1.msra.mxu0 0.0
  %1315 = vmatprep.subr.mxu0 0.0
  %1316 = vmatpush1.msra.mxu0 0.0
  %1317 = vmatprep.subr.mxu0 0.0
  %1318 = vmatpush1.msra.mxu0 0.0
  %1319 = vmatprep.subr.mxu0 0.0
  %1320 = vmatpush1.msra.mxu0 0.0
  %1321 = vmatprep.subr.mxu0 0.0
  %1322 = vmatpush1.msra.mxu0 0.0
  %1323 = vmatprep.subr.mxu0 0.0
  %1324 = vmatpush1.msra.mxu0 0.0
  %1325 = vmatprep.subr.mxu0 0.0
  %1326 = vmatpush1.msra.mxu0 0.0
  %1327 = vmatprep.subr.mxu0 0.0
  %1328 = vmatpush1.msra.mxu0 0.0
  %1329 = vmatprep.subr.mxu0 0.0
  %1330 = vmatpush1.msra.mxu0 0.0
  %1331 = vmatprep.subr.mxu0 %v1289
  %1332 = vmatpush1.msra.mxu0 %v1288
  %1333 = vmatprep.subr.mxu0 0.0
  %1334 = vmatpush2.msra.mxu0 0.0
  %1335 = vmatprep.subr.mxu0 0.0
  %1336 = vmatpush2.msra.mxu0 0.0
  %1337 = vmatprep.subr.mxu0 0.0
  %1338 = vmatpush2.msra.mxu0 0.0
  %1339 = vmatprep.subr.mxu0 0.0
  %1340 = vmatpush2.msra.mxu0 0.0
  %1341 = vmatprep.subr.mxu0 0.0
  %1342 = vmatpush2.msra.mxu0 0.0
  %1343 = vmatprep.subr.mxu0 0.0
  %1344 = vmatpush2.msra.mxu0 0.0
  %1345 = vmatprep.subr.mxu0 0.0
  %1346 = vmatpush2.msra.mxu0 0.0
  %1347 = vmatprep.subr.mxu0 0.0
  %1348 = vmatpush2.msra.mxu0 0.0
  %1349 = vmatprep.subr.mxu0 0.0
  %1350 = vmatpush2.msra.mxu0 0.0
  %1351 = vmatprep.subr.mxu0 0.0
  %1352 = vmatpush2.msra.mxu0 0.0
  %1353 = vmatprep.subr.mxu0 0.0
  %1354 = vmatpush2.msra.mxu0 0.0
  %1355 = vmatprep.subr.mxu0 0.0
  %1356 = vmatpush2.msra.mxu0 0.0
  %1357 = vmatprep.subr.mxu0 0.0
  %1358 = vmatpush2.msra.mxu0 0.0
  %1359 = vmatprep.subr.mxu0 0.0
  %1360 = vmatpush2.msra.mxu0 0.0
  %1361 = vmatprep.subr.mxu0 0.0
  %1362 = vmatpush2.msra.mxu0 0.0
  %1363 = vmatprep.subr.mxu0 0.0
  %1364 = vmatpush2.msra.mxu0 0.0
  %1365 = vmatprep.mubr.f32.mxu0 0.0
  %1366 = vmatmul.mubr.f32.gmra.mxu0 %v1296
  %v1367 = vpop.f32.mrf.mxu0
  %v1368 = vadd.f32 0.0, %v1367
  %v1369 = vpop.f32.mrf.mxu0
  %v1370 = vadd.f32 0.0, %v1369
  %1371 = vmatprep.mubr.f32.mxu0 0.0
  %1372 = vmatmul.mubr.f32.gmra.mxu0 %v1299
  %v1373 = vpop.f32.mrf.mxu0
  %v1374 = vadd.f32 0.0, %v1373
  %v1375 = vpop.f32.mrf.mxu0
  %v1376 = vadd.f32 0.0, %v1375
  %1377 = vdwg.mxu0
  %1378 = vmatprep.subr.mxu0 0.0
  %1379 = vmatpush1.msra.mxu0 0.0
  %1380 = vmatprep.subr.mxu0 0.0
  %1381 = vmatpush1.msra.mxu0 0.0
  %1382 = vmatprep.subr.mxu0 0.0
  %1383 = vmatpush1.msra.mxu0 0.0
  %1384 = vmatprep.subr.mxu0 0.0
  %1385 = vmatpush1.msra.mxu0 0.0
  %1386 = vmatprep.subr.mxu0 0.0
  %1387 = vmatpush1.msra.mxu0 0.0
  %1388 = vmatprep.subr.mxu0 0.0
  %1389 = vmatpush1.msra.mxu0 0.0
  %1390 = vmatprep.subr.mxu0 0.0
  %1391 = vmatpush1.msra.mxu0 0.0
  %1392 = vmatprep.subr.mxu0 0.0
  %1393 = vmatpush1.msra.mxu0 0.0
  %1394 = vmatprep.subr.mxu0 0.0
  %1395 = vmatpush1.msra.mxu0 0.0
  %1396 = vmatprep.subr.mxu0 0.0
  %1397 = vmatpush1.msra.mxu0 0.0
  %1398 = vmatprep.subr.mxu0 0.0
  %1399 = vmatpush1.msra.mxu0 0.0
  %1400 = vmatprep.subr.mxu0 0.0
  %1401 = vmatpush1.msra.mxu0 0.0
  %1402 = vmatprep.subr.mxu0 0.0
  %1403 = vmatpush1.msra.mxu0 0.0
  %1404 = vmatprep.subr.mxu0 0.0
  %1405 = vmatpush1.msra.mxu0 0.0
  %1406 = vmatprep.subr.mxu0 0.0
  %1407 = vmatpush1.msra.mxu0 0.0
  %1408 = vmatprep.subr.mxu0 %v1291
  %1409 = vmatpush1.msra.mxu0 %v1290
  %1410 = vmatprep.subr.mxu0 0.0
  %1411 = vmatpush2.msra.mxu0 0.0
  %1412 = vmatprep.subr.mxu0 0.0
  %1413 = vmatpush2.msra.mxu0 0.0
  %1414 = vmatprep.subr.mxu0 0.0
  %1415 = vmatpush2.msra.mxu0 0.0
  %1416 = vmatprep.subr.mxu0 0.0
  %1417 = vmatpush2.msra.mxu0 0.0
  %1418 = vmatprep.subr.mxu0 0.0
  %1419 = vmatpush2.msra.mxu0 0.0
  %1420 = vmatprep.subr.mxu0 0.0
  %1421 = vmatpush2.msra.mxu0 0.0
  %1422 = vmatprep.subr.mxu0 0.0
  %1423 = vmatpush2.msra.mxu0 0.0
  %1424 = vmatprep.subr.mxu0 0.0
  %1425 = vmatpush2.msra.mxu0 0.0
  %1426 = vmatprep.subr.mxu0 0.0
  %1427 = vmatpush2.msra.mxu0 0.0
  %1428 = vmatprep.subr.mxu0 0.0
  %1429 = vmatpush2.msra.mxu0 0.0
  %1430 = vmatprep.subr.mxu0 0.0
  %1431 = vmatpush2.msra.mxu0 0.0
  %1432 = vmatprep.subr.mxu0 0.0
  %1433 = vmatpush2.msra.mxu0 0.0
  %1434 = vmatprep.subr.mxu0 0.0
  %1435 = vmatpush2.msra.mxu0 0.0
  %1436 = vmatprep.subr.mxu0 0.0
  %1437 = vmatpush2.msra.mxu0 0.0
  %1438 = vmatprep.subr.mxu0 0.0
  %1439 = vmatpush2.msra.mxu0 0.0
  %1440 = vmatprep.subr.mxu0 0.0
  %1441 = vmatpush2.msra.mxu0 0.0
  %1442 = vmatprep.mubr.f32.mxu0 0.0
  %1443 = vmatmul.mubr.f32.gmra.mxu0 %v1296
  %v1444 = vpop.f32.mrf.mxu0
  %v1445 = vadd.f32 0.0, %v1444
  %v1446 = vpop.f32.mrf.mxu0
  %v1447 = vadd.f32 0.0, %v1446
  %1448 = vmatprep.mubr.f32.mxu0 0.0
  %1449 = vmatmul.mubr.f32.gmra.mxu0 %v1299
  %v1450 = vpop.f32.mrf.mxu0
  %v1451 = vadd.f32 0.0, %v1450
  %v1452 = vpop.f32.mrf.mxu0
  %v1453 = vadd.f32 0.0, %v1452
  %1454 = vdwg.mxu0
  %v1455 = vadd.f32 %v1246, %v1368
  %v1456 = vadd.f32 %v1247, %v1370
  %v1457 = vadd.f32 %v1248, %v1445
  %v1458 = vadd.f32 %v1249, %v1447
  %v1459 = vadd.f32 %v1250, %v1374
  %v1460 = vadd.f32 %v1251, %v1376
  %v1461 = vadd.f32 %v1252, %v1451
  %v1462 = vadd.f32 %v1253, %v1453
  %1463 = vrot.lane.b32.xlu0 %v46, 112
  %v1464 = vpop.permute.xlu0 %1463
  %1465 = vrot.lane.b32.xlu0 %v47, 112
  %v1466 = vpop.permute.xlu0 %1465
  %1467 = vrot.lane.b32.xlu0 %v48, 112
  %v1468 = vpop.permute.xlu0 %1467
  %1469 = vrot.lane.b32.xlu0 %v49, 112
  %v1470 = vpop.permute.xlu0 %1469
  %vm1471 = vcmp.lt.s32.totalorder %v64, 112
  %v1472 = vsel %vm1471, %v1468, %v1470
  %v1473 = vsel %vm1471, %v1466, %v1468
  %v1474 = vsel %vm1471, %v1464, %v1466
  %v1475 = vsel %vm1471, %v1470, %v1464
  %v1476 = vsel %vm42, 1, 0
  %v1477 = vlaneseq
  %v1478 = vshrl.u32 %v1477, 7
  %v1479 = vsub.s32 0, %v1478
  %v1480 = vrot.slane %v1476, %v1479
  %v1481 = vlaneseq
  %v1482 = vshrl.u32 %v1481, 7
  %v1483 = vsub.s32 1, %v1482
  %v1484 = vrot.slane %v1476, %v1483
  %v1485 = vlaneseq
  %v1486 = vshrl.u32 %v1485, 7
  %v1487 = vsub.s32 2, %v1486
  %v1488 = vrot.slane %v1476, %v1487
  %v1489 = vlaneseq
  %v1490 = vshrl.u32 %v1489, 7
  %v1491 = vsub.s32 3, %v1490
  %v1492 = vrot.slane %v1476, %v1491
  %vm1493 = vcmp.eq.s32.totalorder %v1480, 1
  %vm1494 = vcmp.eq.s32.totalorder %v1484, 1
  %vm1495 = vcmp.eq.s32.totalorder %v1488, 1
  %vm1496 = vcmp.eq.s32.totalorder %v1492, 1
  %v1497 = vsel %vm1493, %v1474, 0.0
  %v1498 = vsel %vm1494, %v1473, 0.0
  %v1499 = vsel %vm1495, %v1472, 0.0
  %v1500 = vsel %vm1496, %v1475, 0.0
  %s1501 = scalar_lea.vmem %s2, 112
  %v1502 = vld [vmem:[%s1501] sm:$0xff]
  %v1503 = vld [vmem:[%s1501 + $0x8] sm:$0xff]
  %v1505 = vsel %vm97, %v1502, 0
  %v1508 = vsel %vm97, %v1503, 0
  %1510 = vmatprep.subr.mxu0 0.0
  %1511 = vmatpush1.msra.mxu0 0.0
  %1512 = vmatprep.subr.mxu0 0.0
  %1513 = vmatpush1.msra.mxu0 0.0
  %1514 = vmatprep.subr.mxu0 0.0
  %1515 = vmatpush1.msra.mxu0 0.0
  %1516 = vmatprep.subr.mxu0 0.0
  %1517 = vmatpush1.msra.mxu0 0.0
  %1518 = vmatprep.subr.mxu0 0.0
  %1519 = vmatpush1.msra.mxu0 0.0
  %1520 = vmatprep.subr.mxu0 0.0
  %1521 = vmatpush1.msra.mxu0 0.0
  %1522 = vmatprep.subr.mxu0 0.0
  %1523 = vmatpush1.msra.mxu0 0.0
  %1524 = vmatprep.subr.mxu0 0.0
  %1525 = vmatpush1.msra.mxu0 0.0
  %1526 = vmatprep.subr.mxu0 0.0
  %1527 = vmatpush1.msra.mxu0 0.0
  %1528 = vmatprep.subr.mxu0 0.0
  %1529 = vmatpush1.msra.mxu0 0.0
  %1530 = vmatprep.subr.mxu0 0.0
  %1531 = vmatpush1.msra.mxu0 0.0
  %1532 = vmatprep.subr.mxu0 0.0
  %1533 = vmatpush1.msra.mxu0 0.0
  %1534 = vmatprep.subr.mxu0 0.0
  %1535 = vmatpush1.msra.mxu0 0.0
  %1536 = vmatprep.subr.mxu0 0.0
  %1537 = vmatpush1.msra.mxu0 0.0
  %1538 = vmatprep.subr.mxu0 0.0
  %1539 = vmatpush1.msra.mxu0 0.0
  %1540 = vmatprep.subr.mxu0 %v1498
  %1541 = vmatpush1.msra.mxu0 %v1497
  %1542 = vmatprep.subr.mxu0 0.0
  %1543 = vmatpush2.msra.mxu0 0.0
  %1544 = vmatprep.subr.mxu0 0.0
  %1545 = vmatpush2.msra.mxu0 0.0
  %1546 = vmatprep.subr.mxu0 0.0
  %1547 = vmatpush2.msra.mxu0 0.0
  %1548 = vmatprep.subr.mxu0 0.0
  %1549 = vmatpush2.msra.mxu0 0.0
  %1550 = vmatprep.subr.mxu0 0.0
  %1551 = vmatpush2.msra.mxu0 0.0
  %1552 = vmatprep.subr.mxu0 0.0
  %1553 = vmatpush2.msra.mxu0 0.0
  %1554 = vmatprep.subr.mxu0 0.0
  %1555 = vmatpush2.msra.mxu0 0.0
  %1556 = vmatprep.subr.mxu0 0.0
  %1557 = vmatpush2.msra.mxu0 0.0
  %1558 = vmatprep.subr.mxu0 0.0
  %1559 = vmatpush2.msra.mxu0 0.0
  %1560 = vmatprep.subr.mxu0 0.0
  %1561 = vmatpush2.msra.mxu0 0.0
  %1562 = vmatprep.subr.mxu0 0.0
  %1563 = vmatpush2.msra.mxu0 0.0
  %1564 = vmatprep.subr.mxu0 0.0
  %1565 = vmatpush2.msra.mxu0 0.0
  %1566 = vmatprep.subr.mxu0 0.0
  %1567 = vmatpush2.msra.mxu0 0.0
  %1568 = vmatprep.subr.mxu0 0.0
  %1569 = vmatpush2.msra.mxu0 0.0
  %1570 = vmatprep.subr.mxu0 0.0
  %1571 = vmatpush2.msra.mxu0 0.0
  %1572 = vmatprep.subr.mxu0 0.0
  %1573 = vmatpush2.msra.mxu0 0.0
  %1574 = vmatprep.mubr.f32.mxu0 0.0
  %1575 = vmatmul.mubr.f32.gmra.mxu0 %v1505
  %v1576 = vpop.f32.mrf.mxu0
  %v1577 = vadd.f32 0.0, %v1576
  %v1578 = vpop.f32.mrf.mxu0
  %v1579 = vadd.f32 0.0, %v1578
  %1580 = vmatprep.mubr.f32.mxu0 0.0
  %1581 = vmatmul.mubr.f32.gmra.mxu0 %v1508
  %v1582 = vpop.f32.mrf.mxu0
  %v1583 = vadd.f32 0.0, %v1582
  %v1584 = vpop.f32.mrf.mxu0
  %v1585 = vadd.f32 0.0, %v1584
  %1586 = vdwg.mxu0
  %1587 = vmatprep.subr.mxu0 0.0
  %1588 = vmatpush1.msra.mxu0 0.0
  %1589 = vmatprep.subr.mxu0 0.0
  %1590 = vmatpush1.msra.mxu0 0.0
  %1591 = vmatprep.subr.mxu0 0.0
  %1592 = vmatpush1.msra.mxu0 0.0
  %1593 = vmatprep.subr.mxu0 0.0
  %1594 = vmatpush1.msra.mxu0 0.0
  %1595 = vmatprep.subr.mxu0 0.0
  %1596 = vmatpush1.msra.mxu0 0.0
  %1597 = vmatprep.subr.mxu0 0.0
  %1598 = vmatpush1.msra.mxu0 0.0
  %1599 = vmatprep.subr.mxu0 0.0
  %1600 = vmatpush1.msra.mxu0 0.0
  %1601 = vmatprep.subr.mxu0 0.0
  %1602 = vmatpush1.msra.mxu0 0.0
  %1603 = vmatprep.subr.mxu0 0.0
  %1604 = vmatpush1.msra.mxu0 0.0
  %1605 = vmatprep.subr.mxu0 0.0
  %1606 = vmatpush1.msra.mxu0 0.0
  %1607 = vmatprep.subr.mxu0 0.0
  %1608 = vmatpush1.msra.mxu0 0.0
  %1609 = vmatprep.subr.mxu0 0.0
  %1610 = vmatpush1.msra.mxu0 0.0
  %1611 = vmatprep.subr.mxu0 0.0
  %1612 = vmatpush1.msra.mxu0 0.0
  %1613 = vmatprep.subr.mxu0 0.0
  %1614 = vmatpush1.msra.mxu0 0.0
  %1615 = vmatprep.subr.mxu0 0.0
  %1616 = vmatpush1.msra.mxu0 0.0
  %1617 = vmatprep.subr.mxu0 %v1500
  %1618 = vmatpush1.msra.mxu0 %v1499
  %1619 = vmatprep.subr.mxu0 0.0
  %1620 = vmatpush2.msra.mxu0 0.0
  %1621 = vmatprep.subr.mxu0 0.0
  %1622 = vmatpush2.msra.mxu0 0.0
  %1623 = vmatprep.subr.mxu0 0.0
  %1624 = vmatpush2.msra.mxu0 0.0
  %1625 = vmatprep.subr.mxu0 0.0
  %1626 = vmatpush2.msra.mxu0 0.0
  %1627 = vmatprep.subr.mxu0 0.0
  %1628 = vmatpush2.msra.mxu0 0.0
  %1629 = vmatprep.subr.mxu0 0.0
  %1630 = vmatpush2.msra.mxu0 0.0
  %1631 = vmatprep.subr.mxu0 0.0
  %1632 = vmatpush2.msra.mxu0 0.0
  %1633 = vmatprep.subr.mxu0 0.0
  %1634 = vmatpush2.msra.mxu0 0.0
  %1635 = vmatprep.subr.mxu0 0.0
  %1636 = vmatpush2.msra.mxu0 0.0
  %1637 = vmatprep.subr.mxu0 0.0
  %1638 = vmatpush2.msra.mxu0 0.0
  %1639 = vmatprep.subr.mxu0 0.0
  %1640 = vmatpush2.msra.mxu0 0.0
  %1641 = vmatprep.subr.mxu0 0.0
  %1642 = vmatpush2.msra.mxu0 0.0
  %1643 = vmatprep.subr.mxu0 0.0
  %1644 = vmatpush2.msra.mxu0 0.0
  %1645 = vmatprep.subr.mxu0 0.0
  %1646 = vmatpush2.msra.mxu0 0.0
  %1647 = vmatprep.subr.mxu0 0.0
  %1648 = vmatpush2.msra.mxu0 0.0
  %1649 = vmatprep.subr.mxu0 0.0
  %1650 = vmatpush2.msra.mxu0 0.0
  %1651 = vmatprep.mubr.f32.mxu0 0.0
  %1652 = vmatmul.mubr.f32.gmra.mxu0 %v1505
  %v1653 = vpop.f32.mrf.mxu0
  %v1654 = vadd.f32 0.0, %v1653
  %v1655 = vpop.f32.mrf.mxu0
  %v1656 = vadd.f32 0.0, %v1655
  %1657 = vmatprep.mubr.f32.mxu0 0.0
  %1658 = vmatmul.mubr.f32.gmra.mxu0 %v1508
  %v1659 = vpop.f32.mrf.mxu0
  %v1660 = vadd.f32 0.0, %v1659
  %v1661 = vpop.f32.mrf.mxu0
  %v1662 = vadd.f32 0.0, %v1661
  %1663 = vdwg.mxu0
  %v1664 = vadd.f32 %v1455, %v1577
  %v1665 = vadd.f32 %v1456, %v1579
  %v1666 = vadd.f32 %v1457, %v1654
  %v1667 = vadd.f32 %v1458, %v1656
  %v1668 = vadd.f32 %v1459, %v1583
  %v1669 = vadd.f32 %v1460, %v1585
  %v1670 = vadd.f32 %v1461, %v1660
  %v1671 = vadd.f32 %v1462, %v1662
  %1672 = vrot.lane.b32.xlu0 %v46, 111
  %v1673 = vpop.permute.xlu0 %1672
  %1674 = vrot.lane.b32.xlu0 %v47, 111
  %v1675 = vpop.permute.xlu0 %1674
  %1676 = vrot.lane.b32.xlu0 %v48, 111
  %v1677 = vpop.permute.xlu0 %1676
  %1678 = vrot.lane.b32.xlu0 %v49, 111
  %v1679 = vpop.permute.xlu0 %1678
  %vm1680 = vcmp.lt.s32.totalorder %v64, 111
  %v1681 = vsel %vm1680, %v1677, %v1679
  %v1682 = vsel %vm1680, %v1675, %v1677
  %v1683 = vsel %vm1680, %v1673, %v1675
  %v1684 = vsel %vm1680, %v1679, %v1673
  %v1685 = vsel %vm45, 1, 0
  %v1686 = vlaneseq
  %v1687 = vshrl.u32 %v1686, 7
  %v1688 = vsub.s32 0, %v1687
  %v1689 = vrot.slane %v1685, %v1688
  %v1690 = vlaneseq
  %v1691 = vshrl.u32 %v1690, 7
  %v1692 = vsub.s32 1, %v1691
  %v1693 = vrot.slane %v1685, %v1692
  %v1694 = vlaneseq
  %v1695 = vshrl.u32 %v1694, 7
  %v1696 = vsub.s32 2, %v1695
  %v1697 = vrot.slane %v1685, %v1696
  %v1698 = vlaneseq
  %v1699 = vshrl.u32 %v1698, 7
  %v1700 = vsub.s32 3, %v1699
  %v1701 = vrot.slane %v1685, %v1700
  %vm1702 = vcmp.eq.s32.totalorder %v1689, 1
  %vm1703 = vcmp.eq.s32.totalorder %v1693, 1
  %vm1704 = vcmp.eq.s32.totalorder %v1697, 1
  %vm1705 = vcmp.eq.s32.totalorder %v1701, 1
  %v1706 = vsel %vm1702, %v1683, 0.0
  %v1707 = vsel %vm1703, %v1682, 0.0
  %v1708 = vsel %vm1704, %v1681, 0.0
  %v1709 = vsel %vm1705, %v1684, 0.0
  %s1710 = scalar_lea.vmem %s2, 128
  %v1711 = vld [vmem:[%s1710] sm:$0xff]
  %v1712 = vld [vmem:[%s1710 + $0x8] sm:$0xff]
  %v1714 = vsel %vm97, %v1711, 0
  %v1717 = vsel %vm97, %v1712, 0
  %1719 = vmatprep.subr.mxu0 0.0
  %1720 = vmatpush1.msra.mxu0 0.0
  %1721 = vmatprep.subr.mxu0 0.0
  %1722 = vmatpush1.msra.mxu0 0.0
  %1723 = vmatprep.subr.mxu0 0.0
  %1724 = vmatpush1.msra.mxu0 0.0
  %1725 = vmatprep.subr.mxu0 0.0
  %1726 = vmatpush1.msra.mxu0 0.0
  %1727 = vmatprep.subr.mxu0 0.0
  %1728 = vmatpush1.msra.mxu0 0.0
  %1729 = vmatprep.subr.mxu0 0.0
  %1730 = vmatpush1.msra.mxu0 0.0
  %1731 = vmatprep.subr.mxu0 0.0
  %1732 = vmatpush1.msra.mxu0 0.0
  %1733 = vmatprep.subr.mxu0 0.0
  %1734 = vmatpush1.msra.mxu0 0.0
  %1735 = vmatprep.subr.mxu0 0.0
  %1736 = vmatpush1.msra.mxu0 0.0
  %1737 = vmatprep.subr.mxu0 0.0
  %1738 = vmatpush1.msra.mxu0 0.0
  %1739 = vmatprep.subr.mxu0 0.0
  %1740 = vmatpush1.msra.mxu0 0.0
  %1741 = vmatprep.subr.mxu0 0.0
  %1742 = vmatpush1.msra.mxu0 0.0
  %1743 = vmatprep.subr.mxu0 0.0
  %1744 = vmatpush1.msra.mxu0 0.0
  %1745 = vmatprep.subr.mxu0 0.0
  %1746 = vmatpush1.msra.mxu0 0.0
  %1747 = vmatprep.subr.mxu0 0.0
  %1748 = vmatpush1.msra.mxu0 0.0
  %1749 = vmatprep.subr.mxu0 %v1707
  %1750 = vmatpush1.msra.mxu0 %v1706
  %1751 = vmatprep.subr.mxu0 0.0
  %1752 = vmatpush2.msra.mxu0 0.0
  %1753 = vmatprep.subr.mxu0 0.0
  %1754 = vmatpush2.msra.mxu0 0.0
  %1755 = vmatprep.subr.mxu0 0.0
  %1756 = vmatpush2.msra.mxu0 0.0
  %1757 = vmatprep.subr.mxu0 0.0
  %1758 = vmatpush2.msra.mxu0 0.0
  %1759 = vmatprep.subr.mxu0 0.0
  %1760 = vmatpush2.msra.mxu0 0.0
  %1761 = vmatprep.subr.mxu0 0.0
  %1762 = vmatpush2.msra.mxu0 0.0
  %1763 = vmatprep.subr.mxu0 0.0
  %1764 = vmatpush2.msra.mxu0 0.0
  %1765 = vmatprep.subr.mxu0 0.0
  %1766 = vmatpush2.msra.mxu0 0.0
  %1767 = vmatprep.subr.mxu0 0.0
  %1768 = vmatpush2.msra.mxu0 0.0
  %1769 = vmatprep.subr.mxu0 0.0
  %1770 = vmatpush2.msra.mxu0 0.0
  %1771 = vmatprep.subr.mxu0 0.0
  %1772 = vmatpush2.msra.mxu0 0.0
  %1773 = vmatprep.subr.mxu0 0.0
  %1774 = vmatpush2.msra.mxu0 0.0
  %1775 = vmatprep.subr.mxu0 0.0
  %1776 = vmatpush2.msra.mxu0 0.0
  %1777 = vmatprep.subr.mxu0 0.0
  %1778 = vmatpush2.msra.mxu0 0.0
  %1779 = vmatprep.subr.mxu0 0.0
  %1780 = vmatpush2.msra.mxu0 0.0
  %1781 = vmatprep.subr.mxu0 0.0
  %1782 = vmatpush2.msra.mxu0 0.0
  %1783 = vmatprep.mubr.f32.mxu0 0.0
  %1784 = vmatmul.mubr.f32.gmra.mxu0 %v1714
  %v1785 = vpop.f32.mrf.mxu0
  %v1786 = vadd.f32 0.0, %v1785
  %v1787 = vpop.f32.mrf.mxu0
  %v1788 = vadd.f32 0.0, %v1787
  %1789 = vmatprep.mubr.f32.mxu0 0.0
  %1790 = vmatmul.mubr.f32.gmra.mxu0 %v1717
  %v1791 = vpop.f32.mrf.mxu0
  %v1792 = vadd.f32 0.0, %v1791
  %v1793 = vpop.f32.mrf.mxu0
  %v1794 = vadd.f32 0.0, %v1793
  %1795 = vdwg.mxu0
  %1796 = vmatprep.subr.mxu0 0.0
  %1797 = vmatpush1.msra.mxu0 0.0
  %1798 = vmatprep.subr.mxu0 0.0
  %1799 = vmatpush1.msra.mxu0 0.0
  %1800 = vmatprep.subr.mxu0 0.0
  %1801 = vmatpush1.msra.mxu0 0.0
  %1802 = vmatprep.subr.mxu0 0.0
  %1803 = vmatpush1.msra.mxu0 0.0
  %1804 = vmatprep.subr.mxu0 0.0
  %1805 = vmatpush1.msra.mxu0 0.0
  %1806 = vmatprep.subr.mxu0 0.0
  %1807 = vmatpush1.msra.mxu0 0.0
  %1808 = vmatprep.subr.mxu0 0.0
  %1809 = vmatpush1.msra.mxu0 0.0
  %1810 = vmatprep.subr.mxu0 0.0
  %1811 = vmatpush1.msra.mxu0 0.0
  %1812 = vmatprep.subr.mxu0 0.0
  %1813 = vmatpush1.msra.mxu0 0.0
  %1814 = vmatprep.subr.mxu0 0.0
  %1815 = vmatpush1.msra.mxu0 0.0
  %1816 = vmatprep.subr.mxu0 0.0
  %1817 = vmatpush1.msra.mxu0 0.0
  %1818 = vmatprep.subr.mxu0 0.0
  %1819 = vmatpush1.msra.mxu0 0.0
  %1820 = vmatprep.subr.mxu0 0.0
  %1821 = vmatpush1.msra.mxu0 0.0
  %1822 = vmatprep.subr.mxu0 0.0
  %1823 = vmatpush1.msra.mxu0 0.0
  %1824 = vmatprep.subr.mxu0 0.0
  %1825 = vmatpush1.msra.mxu0 0.0
  %1826 = vmatprep.subr.mxu0 %v1709
  %1827 = vmatpush1.msra.mxu0 %v1708
  %1828 = vmatprep.subr.mxu0 0.0
  %1829 = vmatpush2.msra.mxu0 0.0
  %1830 = vmatprep.subr.mxu0 0.0
  %1831 = vmatpush2.msra.mxu0 0.0
  %1832 = vmatprep.subr.mxu0 0.0
  %1833 = vmatpush2.msra.mxu0 0.0
  %1834 = vmatprep.subr.mxu0 0.0
  %1835 = vmatpush2.msra.mxu0 0.0
  %1836 = vmatprep.subr.mxu0 0.0
  %1837 = vmatpush2.msra.mxu0 0.0
  %1838 = vmatprep.subr.mxu0 0.0
  %1839 = vmatpush2.msra.mxu0 0.0
  %1840 = vmatprep.subr.mxu0 0.0
  %1841 = vmatpush2.msra.mxu0 0.0
  %1842 = vmatprep.subr.mxu0 0.0
  %1843 = vmatpush2.msra.mxu0 0.0
  %1844 = vmatprep.subr.mxu0 0.0
  %1845 = vmatpush2.msra.mxu0 0.0
  %1846 = vmatprep.subr.mxu0 0.0
  %1847 = vmatpush2.msra.mxu0 0.0
  %1848 = vmatprep.subr.mxu0 0.0
  %1849 = vmatpush2.msra.mxu0 0.0
  %1850 = vmatprep.subr.mxu0 0.0
  %1851 = vmatpush2.msra.mxu0 0.0
  %1852 = vmatprep.subr.mxu0 0.0
  %1853 = vmatpush2.msra.mxu0 0.0
  %1854 = vmatprep.subr.mxu0 0.0
  %1855 = vmatpush2.msra.mxu0 0.0
  %1856 = vmatprep.subr.mxu0 0.0
  %1857 = vmatpush2.msra.mxu0 0.0
  %1858 = vmatprep.subr.mxu0 0.0
  %1859 = vmatpush2.msra.mxu0 0.0
  %1860 = vmatprep.mubr.f32.mxu0 0.0
  %1861 = vmatmul.mubr.f32.gmra.mxu0 %v1714
  %v1862 = vpop.f32.mrf.mxu0
  %v1863 = vadd.f32 0.0, %v1862
  %v1864 = vpop.f32.mrf.mxu0
  %v1865 = vadd.f32 0.0, %v1864
  %1866 = vmatprep.mubr.f32.mxu0 0.0
  %1867 = vmatmul.mubr.f32.gmra.mxu0 %v1717
  %v1868 = vpop.f32.mrf.mxu0
  %v1869 = vadd.f32 0.0, %v1868
  %v1870 = vpop.f32.mrf.mxu0
  %v1871 = vadd.f32 0.0, %v1870
  %1872 = vdwg.mxu0
  %v1873 = vadd.f32 %v1664, %v1786
  %v1874 = vadd.f32 %v1665, %v1788
  %v1875 = vadd.f32 %v1666, %v1863
  %v1876 = vadd.f32 %v1667, %v1865
  %v1877 = vadd.f32 %v1668, %v1792
  %v1878 = vadd.f32 %v1669, %v1794
  %v1879 = vadd.f32 %v1670, %v1869
  %v1880 = vadd.f32 %v1671, %v1871
  %1882 = vset.pattern.permute.xlu0 0
  %1883 = vperm.xlu0 %1882, %v50
  %v1884 = vpop.permute.xlu0 %1883
  %1887 = vset.pattern.permute.xlu0 0
  %1888 = vperm.xlu0 %1887, %v51
  %v1889 = vpop.permute.xlu0 %1888
  %v1891 = vadd.f32 %v1873, %v1884
  %v1892 = vadd.f32 %v1874, %v1884
  %v1893 = vadd.f32 %v1875, %v1884
  %v1894 = vadd.f32 %v1876, %v1884
  %v1895 = vadd.f32 %v1877, %v1889
  %v1896 = vadd.f32 %v1878, %v1889
  %v1897 = vadd.f32 %v1879, %v1889
  %v1898 = vadd.f32 %v1880, %v1889
  %v1899 = vmax.f32 %v1891, 0.0
  %v1900 = vmax.f32 %v1892, 0.0
  %v1901 = vmax.f32 %v1893, 0.0
  %v1902 = vmax.f32 %v1894, 0.0
  %v1903 = vmax.f32 %v1895, 0.0
  %v1904 = vmax.f32 %v1896, 0.0
  %v1905 = vmax.f32 %v1897, 0.0
  %v1906 = vmax.f32 %v1898, 0.0
  %v1907 = vld [vmem:[%s5] sm:$0x7]
  %s1908 = scalar_lea.vmem %s4, 16
  %v1909 = vld [vmem:[%s1908] sm:$0x7]
  %1910 = vrot.lane.b32.xlu0 %v1899, 17
  %v1911 = vpop.permute.xlu0 %1910
  %1912 = vrot.lane.b32.xlu0 %v1903, 17
  %v1913 = vpop.permute.xlu0 %1912
  %1914 = vrot.lane.b32.xlu0 %v1900, 17
  %v1915 = vpop.permute.xlu0 %1914
  %1916 = vrot.lane.b32.xlu0 %v1904, 17
  %v1917 = vpop.permute.xlu0 %1916
  %1918 = vrot.lane.b32.xlu0 %v1901, 17
  %v1919 = vpop.permute.xlu0 %1918
  %1920 = vrot.lane.b32.xlu0 %v1905, 17
  %v1921 = vpop.permute.xlu0 %1920
  %1922 = vrot.lane.b32.xlu0 %v1902, 17
  %v1923 = vpop.permute.xlu0 %1922
  %1924 = vrot.lane.b32.xlu0 %v1906, 17
  %v1925 = vpop.permute.xlu0 %1924
  %v1926 = vsel %vm65, %v1919, %v1923
  %v1927 = vsel %vm65, %v1921, %v1925
  %v1928 = vsel %vm65, %v1915, %v1919
  %v1929 = vsel %vm65, %v1917, %v1921
  %v1930 = vsel %vm65, %v1911, %v1915
  %v1931 = vsel %vm65, %v1913, %v1917
  %v1932 = vsel %vm65, %v1923, %v1911
  %v1933 = vsel %vm65, %v1925, %v1913
  %v1934 = vsel %vm87, %v1932, 0.0
  %v1935 = vsel %vm88, %v1930, 0.0
  %v1936 = vsel %vm89, %v1928, 0.0
  %v1937 = vsel %vm90, %v1926, 0.0
  %v1938 = vsel %vm87, %v1933, 0.0
  %v1939 = vsel %vm88, %v1931, 0.0
  %v1940 = vsel %vm89, %v1929, 0.0
  %v1941 = vsel %vm90, %v1927, 0.0
  %v1942 = vld [vmem:[%s4] sm:$0x7]
  %vm1943 = vcmask 130048
  %v1945 = vsel %vm1943, %v1942, 0
  %1947 = vmatprep.subr.mxu0 0.0
  %1948 = vmatpush1.msra.mxu0 0.0
  %1949 = vmatprep.subr.mxu0 0.0
  %1950 = vmatpush1.msra.mxu0 0.0
  %1951 = vmatprep.subr.mxu0 0.0
  %1952 = vmatpush1.msra.mxu0 0.0
  %1953 = vmatprep.subr.mxu0 0.0
  %1954 = vmatpush1.msra.mxu0 0.0
  %1955 = vmatprep.subr.mxu0 0.0
  %1956 = vmatpush1.msra.mxu0 0.0
  %1957 = vmatprep.subr.mxu0 0.0
  %1958 = vmatpush1.msra.mxu0 0.0
  %1959 = vmatprep.subr.mxu0 0.0
  %1960 = vmatpush1.msra.mxu0 0.0
  %1961 = vmatprep.subr.mxu0 0.0
  %1962 = vmatpush1.msra.mxu0 0.0
  %1963 = vmatprep.subr.mxu0 0.0
  %1964 = vmatpush1.msra.mxu0 0.0
  %1965 = vmatprep.subr.mxu0 0.0
  %1966 = vmatpush1.msra.mxu0 0.0
  %1967 = vmatprep.subr.mxu0 0.0
  %1968 = vmatpush1.msra.mxu0 0.0
  %1969 = vmatprep.subr.mxu0 0.0
  %1970 = vmatpush1.msra.mxu0 0.0
  %1971 = vmatprep.subr.mxu0 0.0
  %1972 = vmatpush1.msra.mxu0 0.0
  %1973 = vmatprep.subr.mxu0 0.0
  %1974 = vmatpush1.msra.mxu0 0.0
  %1975 = vmatprep.subr.mxu0 %v1939
  %1976 = vmatpush1.msra.mxu0 %v1938
  %1977 = vmatprep.subr.mxu0 %v1935
  %1978 = vmatpush1.msra.mxu0 %v1934
  %1979 = vmatprep.subr.mxu0 0.0
  %1980 = vmatpush2.msra.mxu0 0.0
  %1981 = vmatprep.subr.mxu0 0.0
  %1982 = vmatpush2.msra.mxu0 0.0
  %1983 = vmatprep.subr.mxu0 0.0
  %1984 = vmatpush2.msra.mxu0 0.0
  %1985 = vmatprep.subr.mxu0 0.0
  %1986 = vmatpush2.msra.mxu0 0.0
  %1987 = vmatprep.subr.mxu0 0.0
  %1988 = vmatpush2.msra.mxu0 0.0
  %1989 = vmatprep.subr.mxu0 0.0
  %1990 = vmatpush2.msra.mxu0 0.0
  %1991 = vmatprep.subr.mxu0 0.0
  %1992 = vmatpush2.msra.mxu0 0.0
  %1993 = vmatprep.subr.mxu0 0.0
  %1994 = vmatpush2.msra.mxu0 0.0
  %1995 = vmatprep.subr.mxu0 0.0
  %1996 = vmatpush2.msra.mxu0 0.0
  %1997 = vmatprep.subr.mxu0 0.0
  %1998 = vmatpush2.msra.mxu0 0.0
  %1999 = vmatprep.subr.mxu0 0.0
  %2000 = vmatpush2.msra.mxu0 0.0
  %2001 = vmatprep.subr.mxu0 0.0
  %2002 = vmatpush2.msra.mxu0 0.0
  %2003 = vmatprep.subr.mxu0 0.0
  %2004 = vmatpush2.msra.mxu0 0.0
  %2005 = vmatprep.subr.mxu0 0.0
  %2006 = vmatpush2.msra.mxu0 0.0
  %2007 = vmatprep.subr.mxu0 0.0
  %2008 = vmatpush2.msra.mxu0 0.0
  %2009 = vmatprep.subr.mxu0 0.0
  %2010 = vmatpush2.msra.mxu0 0.0
  %2011 = vmatprep.mubr.f32.mxu0 0.0
  %2012 = vmatmul.mubr.f32.gmra.mxu0 %v1945
  %v2013 = vpop.f32.mrf.mxu0
  %v2014 = vadd.f32 0.0, %v2013
  %v2015 = vpop.f32.mrf.mxu0
  %v2016 = vadd.f32 0.0, %v2015
  %2017 = vdwg.mxu0
  %2018 = vmatprep.subr.mxu0 0.0
  %2019 = vmatpush1.msra.mxu0 0.0
  %2020 = vmatprep.subr.mxu0 0.0
  %2021 = vmatpush1.msra.mxu0 0.0
  %2022 = vmatprep.subr.mxu0 0.0
  %2023 = vmatpush1.msra.mxu0 0.0
  %2024 = vmatprep.subr.mxu0 0.0
  %2025 = vmatpush1.msra.mxu0 0.0
  %2026 = vmatprep.subr.mxu0 0.0
  %2027 = vmatpush1.msra.mxu0 0.0
  %2028 = vmatprep.subr.mxu0 0.0
  %2029 = vmatpush1.msra.mxu0 0.0
  %2030 = vmatprep.subr.mxu0 0.0
  %2031 = vmatpush1.msra.mxu0 0.0
  %2032 = vmatprep.subr.mxu0 0.0
  %2033 = vmatpush1.msra.mxu0 0.0
  %2034 = vmatprep.subr.mxu0 0.0
  %2035 = vmatpush1.msra.mxu0 0.0
  %2036 = vmatprep.subr.mxu0 0.0
  %2037 = vmatpush1.msra.mxu0 0.0
  %2038 = vmatprep.subr.mxu0 0.0
  %2039 = vmatpush1.msra.mxu0 0.0
  %2040 = vmatprep.subr.mxu0 0.0
  %2041 = vmatpush1.msra.mxu0 0.0
  %2042 = vmatprep.subr.mxu0 0.0
  %2043 = vmatpush1.msra.mxu0 0.0
  %2044 = vmatprep.subr.mxu0 0.0
  %2045 = vmatpush1.msra.mxu0 0.0
  %2046 = vmatprep.subr.mxu0 %v1941
  %2047 = vmatpush1.msra.mxu0 %v1940
  %2048 = vmatprep.subr.mxu0 %v1937
  %2049 = vmatpush1.msra.mxu0 %v1936
  %2050 = vmatprep.subr.mxu0 0.0
  %2051 = vmatpush2.msra.mxu0 0.0
  %2052 = vmatprep.subr.mxu0 0.0
  %2053 = vmatpush2.msra.mxu0 0.0
  %2054 = vmatprep.subr.mxu0 0.0
  %2055 = vmatpush2.msra.mxu0 0.0
  %2056 = vmatprep.subr.mxu0 0.0
  %2057 = vmatpush2.msra.mxu0 0.0
  %2058 = vmatprep.subr.mxu0 0.0
  %2059 = vmatpush2.msra.mxu0 0.0
  %2060 = vmatprep.subr.mxu0 0.0
  %2061 = vmatpush2.msra.mxu0 0.0
  %2062 = vmatprep.subr.mxu0 0.0
  %2063 = vmatpush2.msra.mxu0 0.0
  %2064 = vmatprep.subr.mxu0 0.0
  %2065 = vmatpush2.msra.mxu0 0.0
  %2066 = vmatprep.subr.mxu0 0.0
  %2067 = vmatpush2.msra.mxu0 0.0
  %2068 = vmatprep.subr.mxu0 0.0
  %2069 = vmatpush2.msra.mxu0 0.0
  %2070 = vmatprep.subr.mxu0 0.0
  %2071 = vmatpush2.msra.mxu0 0.0
  %2072 = vmatprep.subr.mxu0 0.0
  %2073 = vmatpush2.msra.mxu0 0.0
  %2074 = vmatprep.subr.mxu0 0.0
  %2075 = vmatpush2.msra.mxu0 0.0
  %2076 = vmatprep.subr.mxu0 0.0
  %2077 = vmatpush2.msra.mxu0 0.0
  %2078 = vmatprep.subr.mxu0 0.0
  %2079 = vmatpush2.msra.mxu0 0.0
  %2080 = vmatprep.subr.mxu0 0.0
  %2081 = vmatpush2.msra.mxu0 0.0
  %2082 = vmatprep.mubr.f32.mxu0 0.0
  %2083 = vmatmul.mubr.f32.gmra.mxu0 %v1945
  %v2084 = vpop.f32.mrf.mxu0
  %v2085 = vadd.f32 0.0, %v2084
  %v2086 = vpop.f32.mrf.mxu0
  %v2087 = vadd.f32 0.0, %v2086
  %2088 = vdwg.mxu0
  %v2090 = vsel %vm1943, %v1909, 0
  %2092 = vmatprep.subr.mxu0 0.0
  %2093 = vmatpush1.msra.mxu0 0.0
  %2094 = vmatprep.subr.mxu0 0.0
  %2095 = vmatpush1.msra.mxu0 0.0
  %2096 = vmatprep.subr.mxu0 0.0
  %2097 = vmatpush1.msra.mxu0 0.0
  %2098 = vmatprep.subr.mxu0 0.0
  %2099 = vmatpush1.msra.mxu0 0.0
  %2100 = vmatprep.subr.mxu0 0.0
  %2101 = vmatpush1.msra.mxu0 0.0
  %2102 = vmatprep.subr.mxu0 0.0
  %2103 = vmatpush1.msra.mxu0 0.0
  %2104 = vmatprep.subr.mxu0 0.0
  %2105 = vmatpush1.msra.mxu0 0.0
  %2106 = vmatprep.subr.mxu0 0.0
  %2107 = vmatpush1.msra.mxu0 0.0
  %2108 = vmatprep.subr.mxu0 0.0
  %2109 = vmatpush1.msra.mxu0 0.0
  %2110 = vmatprep.subr.mxu0 0.0
  %2111 = vmatpush1.msra.mxu0 0.0
  %2112 = vmatprep.subr.mxu0 0.0
  %2113 = vmatpush1.msra.mxu0 0.0
  %2114 = vmatprep.subr.mxu0 0.0
  %2115 = vmatpush1.msra.mxu0 0.0
  %2116 = vmatprep.subr.mxu0 0.0
  %2117 = vmatpush1.msra.mxu0 0.0
  %2118 = vmatprep.subr.mxu0 0.0
  %2119 = vmatpush1.msra.mxu0 0.0
  %2120 = vmatprep.subr.mxu0 %v1904
  %2121 = vmatpush1.msra.mxu0 %v1903
  %2122 = vmatprep.subr.mxu0 %v1900
  %2123 = vmatpush1.msra.mxu0 %v1899
  %2124 = vmatprep.subr.mxu0 0.0
  %2125 = vmatpush2.msra.mxu0 0.0
  %2126 = vmatprep.subr.mxu0 0.0
  %2127 = vmatpush2.msra.mxu0 0.0
  %2128 = vmatprep.subr.mxu0 0.0
  %2129 = vmatpush2.msra.mxu0 0.0
  %2130 = vmatprep.subr.mxu0 0.0
  %2131 = vmatpush2.msra.mxu0 0.0
  %2132 = vmatprep.subr.mxu0 0.0
  %2133 = vmatpush2.msra.mxu0 0.0
  %2134 = vmatprep.subr.mxu0 0.0
  %2135 = vmatpush2.msra.mxu0 0.0
  %2136 = vmatprep.subr.mxu0 0.0
  %2137 = vmatpush2.msra.mxu0 0.0
  %2138 = vmatprep.subr.mxu0 0.0
  %2139 = vmatpush2.msra.mxu0 0.0
  %2140 = vmatprep.subr.mxu0 0.0
  %2141 = vmatpush2.msra.mxu0 0.0
  %2142 = vmatprep.subr.mxu0 0.0
  %2143 = vmatpush2.msra.mxu0 0.0
  %2144 = vmatprep.subr.mxu0 0.0
  %2145 = vmatpush2.msra.mxu0 0.0
  %2146 = vmatprep.subr.mxu0 0.0
  %2147 = vmatpush2.msra.mxu0 0.0
  %2148 = vmatprep.subr.mxu0 0.0
  %2149 = vmatpush2.msra.mxu0 0.0
  %2150 = vmatprep.subr.mxu0 0.0
  %2151 = vmatpush2.msra.mxu0 0.0
  %2152 = vmatprep.subr.mxu0 0.0
  %2153 = vmatpush2.msra.mxu0 0.0
  %2154 = vmatprep.subr.mxu0 0.0
  %2155 = vmatpush2.msra.mxu0 0.0
  %2156 = vmatprep.mubr.f32.mxu0 0.0
  %2157 = vmatmul.mubr.f32.gmra.mxu0 %v2090
  %v2158 = vpop.f32.mrf.mxu0
  %v2159 = vadd.f32 %v2014, %v2158
  %v2160 = vpop.f32.mrf.mxu0
  %v2161 = vadd.f32 %v2016, %v2160
  %2162 = vdwg.mxu0
  %2163 = vmatprep.subr.mxu0 0.0
  %2164 = vmatpush1.msra.mxu0 0.0
  %2165 = vmatprep.subr.mxu0 0.0
  %2166 = vmatpush1.msra.mxu0 0.0
  %2167 = vmatprep.subr.mxu0 0.0
  %2168 = vmatpush1.msra.mxu0 0.0
  %2169 = vmatprep.subr.mxu0 0.0
  %2170 = vmatpush1.msra.mxu0 0.0
  %2171 = vmatprep.subr.mxu0 0.0
  %2172 = vmatpush1.msra.mxu0 0.0
  %2173 = vmatprep.subr.mxu0 0.0
  %2174 = vmatpush1.msra.mxu0 0.0
  %2175 = vmatprep.subr.mxu0 0.0
  %2176 = vmatpush1.msra.mxu0 0.0
  %2177 = vmatprep.subr.mxu0 0.0
  %2178 = vmatpush1.msra.mxu0 0.0
  %2179 = vmatprep.subr.mxu0 0.0
  %2180 = vmatpush1.msra.mxu0 0.0
  %2181 = vmatprep.subr.mxu0 0.0
  %2182 = vmatpush1.msra.mxu0 0.0
  %2183 = vmatprep.subr.mxu0 0.0
  %2184 = vmatpush1.msra.mxu0 0.0
  %2185 = vmatprep.subr.mxu0 0.0
  %2186 = vmatpush1.msra.mxu0 0.0
  %2187 = vmatprep.subr.mxu0 0.0
  %2188 = vmatpush1.msra.mxu0 0.0
  %2189 = vmatprep.subr.mxu0 0.0
  %2190 = vmatpush1.msra.mxu0 0.0
  %2191 = vmatprep.subr.mxu0 %v1906
  %2192 = vmatpush1.msra.mxu0 %v1905
  %2193 = vmatprep.subr.mxu0 %v1902
  %2194 = vmatpush1.msra.mxu0 %v1901
  %2195 = vmatprep.subr.mxu0 0.0
  %2196 = vmatpush2.msra.mxu0 0.0
  %2197 = vmatprep.subr.mxu0 0.0
  %2198 = vmatpush2.msra.mxu0 0.0
  %2199 = vmatprep.subr.mxu0 0.0
  %2200 = vmatpush2.msra.mxu0 0.0
  %2201 = vmatprep.subr.mxu0 0.0
  %2202 = vmatpush2.msra.mxu0 0.0
  %2203 = vmatprep.subr.mxu0 0.0
  %2204 = vmatpush2.msra.mxu0 0.0
  %2205 = vmatprep.subr.mxu0 0.0
  %2206 = vmatpush2.msra.mxu0 0.0
  %2207 = vmatprep.subr.mxu0 0.0
  %2208 = vmatpush2.msra.mxu0 0.0
  %2209 = vmatprep.subr.mxu0 0.0
  %2210 = vmatpush2.msra.mxu0 0.0
  %2211 = vmatprep.subr.mxu0 0.0
  %2212 = vmatpush2.msra.mxu0 0.0
  %2213 = vmatprep.subr.mxu0 0.0
  %2214 = vmatpush2.msra.mxu0 0.0
  %2215 = vmatprep.subr.mxu0 0.0
  %2216 = vmatpush2.msra.mxu0 0.0
  %2217 = vmatprep.subr.mxu0 0.0
  %2218 = vmatpush2.msra.mxu0 0.0
  %2219 = vmatprep.subr.mxu0 0.0
  %2220 = vmatpush2.msra.mxu0 0.0
  %2221 = vmatprep.subr.mxu0 0.0
  %2222 = vmatpush2.msra.mxu0 0.0
  %2223 = vmatprep.subr.mxu0 0.0
  %2224 = vmatpush2.msra.mxu0 0.0
  %2225 = vmatprep.subr.mxu0 0.0
  %2226 = vmatpush2.msra.mxu0 0.0
  %2227 = vmatprep.mubr.f32.mxu0 0.0
  %2228 = vmatmul.mubr.f32.gmra.mxu0 %v2090
  %v2229 = vpop.f32.mrf.mxu0
  %v2230 = vadd.f32 %v2085, %v2229
  %v2231 = vpop.f32.mrf.mxu0
  %v2232 = vadd.f32 %v2087, %v2231
  %2233 = vdwg.mxu0
  %2234 = vrot.lane.b32.xlu0 %v1899, 16
  %v2235 = vpop.permute.xlu0 %2234
  %2236 = vrot.lane.b32.xlu0 %v1903, 16
  %v2237 = vpop.permute.xlu0 %2236
  %2238 = vrot.lane.b32.xlu0 %v1900, 16
  %v2239 = vpop.permute.xlu0 %2238
  %2240 = vrot.lane.b32.xlu0 %v1904, 16
  %v2241 = vpop.permute.xlu0 %2240
  %2242 = vrot.lane.b32.xlu0 %v1901, 16
  %v2243 = vpop.permute.xlu0 %2242
  %2244 = vrot.lane.b32.xlu0 %v1905, 16
  %v2245 = vpop.permute.xlu0 %2244
  %2246 = vrot.lane.b32.xlu0 %v1902, 16
  %v2247 = vpop.permute.xlu0 %2246
  %2248 = vrot.lane.b32.xlu0 %v1906, 16
  %v2249 = vpop.permute.xlu0 %2248
  %v2250 = vsel %vm426, %v2243, %v2247
  %v2251 = vsel %vm426, %v2245, %v2249
  %v2252 = vsel %vm426, %v2239, %v2243
  %v2253 = vsel %vm426, %v2241, %v2245
  %v2254 = vsel %vm426, %v2235, %v2239
  %v2255 = vsel %vm426, %v2237, %v2241
  %v2256 = vsel %vm426, %v2247, %v2235
  %v2257 = vsel %vm426, %v2249, %v2237
  %v2258 = vsel %vm448, %v2256, 0.0
  %v2259 = vsel %vm449, %v2254, 0.0
  %v2260 = vsel %vm450, %v2252, 0.0
  %v2261 = vsel %vm451, %v2250, 0.0
  %v2262 = vsel %vm448, %v2257, 0.0
  %v2263 = vsel %vm449, %v2255, 0.0
  %v2264 = vsel %vm450, %v2253, 0.0
  %v2265 = vsel %vm451, %v2251, 0.0
  %s2266 = scalar_lea.vmem %s4, 4
  %v2267 = vld [vmem:[%s2266] sm:$0x7]
  %v2269 = vsel %vm1943, %v2267, 0
  %2271 = vmatprep.subr.mxu0 0.0
  %2272 = vmatpush1.msra.mxu0 0.0
  %2273 = vmatprep.subr.mxu0 0.0
  %2274 = vmatpush1.msra.mxu0 0.0
  %2275 = vmatprep.subr.mxu0 0.0
  %2276 = vmatpush1.msra.mxu0 0.0
  %2277 = vmatprep.subr.mxu0 0.0
  %2278 = vmatpush1.msra.mxu0 0.0
  %2279 = vmatprep.subr.mxu0 0.0
  %2280 = vmatpush1.msra.mxu0 0.0
  %2281 = vmatprep.subr.mxu0 0.0
  %2282 = vmatpush1.msra.mxu0 0.0
  %2283 = vmatprep.subr.mxu0 0.0
  %2284 = vmatpush1.msra.mxu0 0.0
  %2285 = vmatprep.subr.mxu0 0.0
  %2286 = vmatpush1.msra.mxu0 0.0
  %2287 = vmatprep.subr.mxu0 0.0
  %2288 = vmatpush1.msra.mxu0 0.0
  %2289 = vmatprep.subr.mxu0 0.0
  %2290 = vmatpush1.msra.mxu0 0.0
  %2291 = vmatprep.subr.mxu0 0.0
  %2292 = vmatpush1.msra.mxu0 0.0
  %2293 = vmatprep.subr.mxu0 0.0
  %2294 = vmatpush1.msra.mxu0 0.0
  %2295 = vmatprep.subr.mxu0 0.0
  %2296 = vmatpush1.msra.mxu0 0.0
  %2297 = vmatprep.subr.mxu0 0.0
  %2298 = vmatpush1.msra.mxu0 0.0
  %2299 = vmatprep.subr.mxu0 %v2263
  %2300 = vmatpush1.msra.mxu0 %v2262
  %2301 = vmatprep.subr.mxu0 %v2259
  %2302 = vmatpush1.msra.mxu0 %v2258
  %2303 = vmatprep.subr.mxu0 0.0
  %2304 = vmatpush2.msra.mxu0 0.0
  %2305 = vmatprep.subr.mxu0 0.0
  %2306 = vmatpush2.msra.mxu0 0.0
  %2307 = vmatprep.subr.mxu0 0.0
  %2308 = vmatpush2.msra.mxu0 0.0
  %2309 = vmatprep.subr.mxu0 0.0
  %2310 = vmatpush2.msra.mxu0 0.0
  %2311 = vmatprep.subr.mxu0 0.0
  %2312 = vmatpush2.msra.mxu0 0.0
  %2313 = vmatprep.subr.mxu0 0.0
  %2314 = vmatpush2.msra.mxu0 0.0
  %2315 = vmatprep.subr.mxu0 0.0
  %2316 = vmatpush2.msra.mxu0 0.0
  %2317 = vmatprep.subr.mxu0 0.0
  %2318 = vmatpush2.msra.mxu0 0.0
  %2319 = vmatprep.subr.mxu0 0.0
  %2320 = vmatpush2.msra.mxu0 0.0
  %2321 = vmatprep.subr.mxu0 0.0
  %2322 = vmatpush2.msra.mxu0 0.0
  %2323 = vmatprep.subr.mxu0 0.0
  %2324 = vmatpush2.msra.mxu0 0.0
  %2325 = vmatprep.subr.mxu0 0.0
  %2326 = vmatpush2.msra.mxu0 0.0
  %2327 = vmatprep.subr.mxu0 0.0
  %2328 = vmatpush2.msra.mxu0 0.0
  %2329 = vmatprep.subr.mxu0 0.0
  %2330 = vmatpush2.msra.mxu0 0.0
  %2331 = vmatprep.subr.mxu0 0.0
  %2332 = vmatpush2.msra.mxu0 0.0
  %2333 = vmatprep.subr.mxu0 0.0
  %2334 = vmatpush2.msra.mxu0 0.0
  %2335 = vmatprep.mubr.f32.mxu0 0.0
  %2336 = vmatmul.mubr.f32.gmra.mxu0 %v2269
  %v2337 = vpop.f32.mrf.mxu0
  %v2338 = vadd.f32 0.0, %v2337
  %v2339 = vpop.f32.mrf.mxu0
  %v2340 = vadd.f32 0.0, %v2339
  %2341 = vdwg.mxu0
  %2342 = vmatprep.subr.mxu0 0.0
  %2343 = vmatpush1.msra.mxu0 0.0
  %2344 = vmatprep.subr.mxu0 0.0
  %2345 = vmatpush1.msra.mxu0 0.0
  %2346 = vmatprep.subr.mxu0 0.0
  %2347 = vmatpush1.msra.mxu0 0.0
  %2348 = vmatprep.subr.mxu0 0.0
  %2349 = vmatpush1.msra.mxu0 0.0
  %2350 = vmatprep.subr.mxu0 0.0
  %2351 = vmatpush1.msra.mxu0 0.0
  %2352 = vmatprep.subr.mxu0 0.0
  %2353 = vmatpush1.msra.mxu0 0.0
  %2354 = vmatprep.subr.mxu0 0.0
  %2355 = vmatpush1.msra.mxu0 0.0
  %2356 = vmatprep.subr.mxu0 0.0
  %2357 = vmatpush1.msra.mxu0 0.0
  %2358 = vmatprep.subr.mxu0 0.0
  %2359 = vmatpush1.msra.mxu0 0.0
  %2360 = vmatprep.subr.mxu0 0.0
  %2361 = vmatpush1.msra.mxu0 0.0
  %2362 = vmatprep.subr.mxu0 0.0
  %2363 = vmatpush1.msra.mxu0 0.0
  %2364 = vmatprep.subr.mxu0 0.0
  %2365 = vmatpush1.msra.mxu0 0.0
  %2366 = vmatprep.subr.mxu0 0.0
  %2367 = vmatpush1.msra.mxu0 0.0
  %2368 = vmatprep.subr.mxu0 0.0
  %2369 = vmatpush1.msra.mxu0 0.0
  %2370 = vmatprep.subr.mxu0 %v2265
  %2371 = vmatpush1.msra.mxu0 %v2264
  %2372 = vmatprep.subr.mxu0 %v2261
  %2373 = vmatpush1.msra.mxu0 %v2260
  %2374 = vmatprep.subr.mxu0 0.0
  %2375 = vmatpush2.msra.mxu0 0.0
  %2376 = vmatprep.subr.mxu0 0.0
  %2377 = vmatpush2.msra.mxu0 0.0
  %2378 = vmatprep.subr.mxu0 0.0
  %2379 = vmatpush2.msra.mxu0 0.0
  %2380 = vmatprep.subr.mxu0 0.0
  %2381 = vmatpush2.msra.mxu0 0.0
  %2382 = vmatprep.subr.mxu0 0.0
  %2383 = vmatpush2.msra.mxu0 0.0
  %2384 = vmatprep.subr.mxu0 0.0
  %2385 = vmatpush2.msra.mxu0 0.0
  %2386 = vmatprep.subr.mxu0 0.0
  %2387 = vmatpush2.msra.mxu0 0.0
  %2388 = vmatprep.subr.mxu0 0.0
  %2389 = vmatpush2.msra.mxu0 0.0
  %2390 = vmatprep.subr.mxu0 0.0
  %2391 = vmatpush2.msra.mxu0 0.0
  %2392 = vmatprep.subr.mxu0 0.0
  %2393 = vmatpush2.msra.mxu0 0.0
  %2394 = vmatprep.subr.mxu0 0.0
  %2395 = vmatpush2.msra.mxu0 0.0
  %2396 = vmatprep.subr.mxu0 0.0
  %2397 = vmatpush2.msra.mxu0 0.0
  %2398 = vmatprep.subr.mxu0 0.0
  %2399 = vmatpush2.msra.mxu0 0.0
  %2400 = vmatprep.subr.mxu0 0.0
  %2401 = vmatpush2.msra.mxu0 0.0
  %2402 = vmatprep.subr.mxu0 0.0
  %2403 = vmatpush2.msra.mxu0 0.0
  %2404 = vmatprep.subr.mxu0 0.0
  %2405 = vmatpush2.msra.mxu0 0.0
  %2406 = vmatprep.mubr.f32.mxu0 0.0
  %2407 = vmatmul.mubr.f32.gmra.mxu0 %v2269
  %v2408 = vpop.f32.mrf.mxu0
  %v2409 = vadd.f32 0.0, %v2408
  %v2410 = vpop.f32.mrf.mxu0
  %v2411 = vadd.f32 0.0, %v2410
  %2412 = vdwg.mxu0
  %v2413 = vadd.f32 %v2159, %v2338
  %v2414 = vadd.f32 %v2161, %v2340
  %v2415 = vadd.f32 %v2230, %v2409
  %v2416 = vadd.f32 %v2232, %v2411
  %2417 = vrot.lane.b32.xlu0 %v1899, 15
  %v2418 = vpop.permute.xlu0 %2417
  %2419 = vrot.lane.b32.xlu0 %v1903, 15
  %v2420 = vpop.permute.xlu0 %2419
  %2421 = vrot.lane.b32.xlu0 %v1900, 15
  %v2422 = vpop.permute.xlu0 %2421
  %2423 = vrot.lane.b32.xlu0 %v1904, 15
  %v2424 = vpop.permute.xlu0 %2423
  %2425 = vrot.lane.b32.xlu0 %v1901, 15
  %v2426 = vpop.permute.xlu0 %2425
  %2427 = vrot.lane.b32.xlu0 %v1905, 15
  %v2428 = vpop.permute.xlu0 %2427
  %2429 = vrot.lane.b32.xlu0 %v1902, 15
  %v2430 = vpop.permute.xlu0 %2429
  %2431 = vrot.lane.b32.xlu0 %v1906, 15
  %v2432 = vpop.permute.xlu0 %2431
  %v2433 = vsel %vm635, %v2426, %v2430
  %v2434 = vsel %vm635, %v2428, %v2432
  %v2435 = vsel %vm635, %v2422, %v2426
  %v2436 = vsel %vm635, %v2424, %v2428
  %v2437 = vsel %vm635, %v2418, %v2422
  %v2438 = vsel %vm635, %v2420, %v2424
  %v2439 = vsel %vm635, %v2430, %v2418
  %v2440 = vsel %vm635, %v2432, %v2420
  %v2441 = vsel %vm657, %v2439, 0.0
  %v2442 = vsel %vm658, %v2437, 0.0
  %v2443 = vsel %vm659, %v2435, 0.0
  %v2444 = vsel %vm660, %v2433, 0.0
  %v2445 = vsel %vm657, %v2440, 0.0
  %v2446 = vsel %vm658, %v2438, 0.0
  %v2447 = vsel %vm659, %v2436, 0.0
  %v2448 = vsel %vm660, %v2434, 0.0
  %s2449 = scalar_lea.vmem %s4, 8
  %v2450 = vld [vmem:[%s2449] sm:$0x7]
  %v2452 = vsel %vm1943, %v2450, 0
  %2454 = vmatprep.subr.mxu0 0.0
  %2455 = vmatpush1.msra.mxu0 0.0
  %2456 = vmatprep.subr.mxu0 0.0
  %2457 = vmatpush1.msra.mxu0 0.0
  %2458 = vmatprep.subr.mxu0 0.0
  %2459 = vmatpush1.msra.mxu0 0.0
  %2460 = vmatprep.subr.mxu0 0.0
  %2461 = vmatpush1.msra.mxu0 0.0
  %2462 = vmatprep.subr.mxu0 0.0
  %2463 = vmatpush1.msra.mxu0 0.0
  %2464 = vmatprep.subr.mxu0 0.0
  %2465 = vmatpush1.msra.mxu0 0.0
  %2466 = vmatprep.subr.mxu0 0.0
  %2467 = vmatpush1.msra.mxu0 0.0
  %2468 = vmatprep.subr.mxu0 0.0
  %2469 = vmatpush1.msra.mxu0 0.0
  %2470 = vmatprep.subr.mxu0 0.0
  %2471 = vmatpush1.msra.mxu0 0.0
  %2472 = vmatprep.subr.mxu0 0.0
  %2473 = vmatpush1.msra.mxu0 0.0
  %2474 = vmatprep.subr.mxu0 0.0
  %2475 = vmatpush1.msra.mxu0 0.0
  %2476 = vmatprep.subr.mxu0 0.0
  %2477 = vmatpush1.msra.mxu0 0.0
  %2478 = vmatprep.subr.mxu0 0.0
  %2479 = vmatpush1.msra.mxu0 0.0
  %2480 = vmatprep.subr.mxu0 0.0
  %2481 = vmatpush1.msra.mxu0 0.0
  %2482 = vmatprep.subr.mxu0 %v2446
  %2483 = vmatpush1.msra.mxu0 %v2445
  %2484 = vmatprep.subr.mxu0 %v2442
  %2485 = vmatpush1.msra.mxu0 %v2441
  %2486 = vmatprep.subr.mxu0 0.0
  %2487 = vmatpush2.msra.mxu0 0.0
  %2488 = vmatprep.subr.mxu0 0.0
  %2489 = vmatpush2.msra.mxu0 0.0
  %2490 = vmatprep.subr.mxu0 0.0
  %2491 = vmatpush2.msra.mxu0 0.0
  %2492 = vmatprep.subr.mxu0 0.0
  %2493 = vmatpush2.msra.mxu0 0.0
  %2494 = vmatprep.subr.mxu0 0.0
  %2495 = vmatpush2.msra.mxu0 0.0
  %2496 = vmatprep.subr.mxu0 0.0
  %2497 = vmatpush2.msra.mxu0 0.0
  %2498 = vmatprep.subr.mxu0 0.0
  %2499 = vmatpush2.msra.mxu0 0.0
  %2500 = vmatprep.subr.mxu0 0.0
  %2501 = vmatpush2.msra.mxu0 0.0
  %2502 = vmatprep.subr.mxu0 0.0
  %2503 = vmatpush2.msra.mxu0 0.0
  %2504 = vmatprep.subr.mxu0 0.0
  %2505 = vmatpush2.msra.mxu0 0.0
  %2506 = vmatprep.subr.mxu0 0.0
  %2507 = vmatpush2.msra.mxu0 0.0
  %2508 = vmatprep.subr.mxu0 0.0
  %2509 = vmatpush2.msra.mxu0 0.0
  %2510 = vmatprep.subr.mxu0 0.0
  %2511 = vmatpush2.msra.mxu0 0.0
  %2512 = vmatprep.subr.mxu0 0.0
  %2513 = vmatpush2.msra.mxu0 0.0
  %2514 = vmatprep.subr.mxu0 0.0
  %2515 = vmatpush2.msra.mxu0 0.0
  %2516 = vmatprep.subr.mxu0 0.0
  %2517 = vmatpush2.msra.mxu0 0.0
  %2518 = vmatprep.mubr.f32.mxu0 0.0
  %2519 = vmatmul.mubr.f32.gmra.mxu0 %v2452
  %v2520 = vpop.f32.mrf.mxu0
  %v2521 = vadd.f32 0.0, %v2520
  %v2522 = vpop.f32.mrf.mxu0
  %v2523 = vadd.f32 0.0, %v2522
  %2524 = vdwg.mxu0
  %2525 = vmatprep.subr.mxu0 0.0
  %2526 = vmatpush1.msra.mxu0 0.0
  %2527 = vmatprep.subr.mxu0 0.0
  %2528 = vmatpush1.msra.mxu0 0.0
  %2529 = vmatprep.subr.mxu0 0.0
  %2530 = vmatpush1.msra.mxu0 0.0
  %2531 = vmatprep.subr.mxu0 0.0
  %2532 = vmatpush1.msra.mxu0 0.0
  %2533 = vmatprep.subr.mxu0 0.0
  %2534 = vmatpush1.msra.mxu0 0.0
  %2535 = vmatprep.subr.mxu0 0.0
  %2536 = vmatpush1.msra.mxu0 0.0
  %2537 = vmatprep.subr.mxu0 0.0
  %2538 = vmatpush1.msra.mxu0 0.0
  %2539 = vmatprep.subr.mxu0 0.0
  %2540 = vmatpush1.msra.mxu0 0.0
  %2541 = vmatprep.subr.mxu0 0.0
  %2542 = vmatpush1.msra.mxu0 0.0
  %2543 = vmatprep.subr.mxu0 0.0
  %2544 = vmatpush1.msra.mxu0 0.0
  %2545 = vmatprep.subr.mxu0 0.0
  %2546 = vmatpush1.msra.mxu0 0.0
  %2547 = vmatprep.subr.mxu0 0.0
  %2548 = vmatpush1.msra.mxu0 0.0
  %2549 = vmatprep.subr.mxu0 0.0
  %2550 = vmatpush1.msra.mxu0 0.0
  %2551 = vmatprep.subr.mxu0 0.0
  %2552 = vmatpush1.msra.mxu0 0.0
  %2553 = vmatprep.subr.mxu0 %v2448
  %2554 = vmatpush1.msra.mxu0 %v2447
  %2555 = vmatprep.subr.mxu0 %v2444
  %2556 = vmatpush1.msra.mxu0 %v2443
  %2557 = vmatprep.subr.mxu0 0.0
  %2558 = vmatpush2.msra.mxu0 0.0
  %2559 = vmatprep.subr.mxu0 0.0
  %2560 = vmatpush2.msra.mxu0 0.0
  %2561 = vmatprep.subr.mxu0 0.0
  %2562 = vmatpush2.msra.mxu0 0.0
  %2563 = vmatprep.subr.mxu0 0.0
  %2564 = vmatpush2.msra.mxu0 0.0
  %2565 = vmatprep.subr.mxu0 0.0
  %2566 = vmatpush2.msra.mxu0 0.0
  %2567 = vmatprep.subr.mxu0 0.0
  %2568 = vmatpush2.msra.mxu0 0.0
  %2569 = vmatprep.subr.mxu0 0.0
  %2570 = vmatpush2.msra.mxu0 0.0
  %2571 = vmatprep.subr.mxu0 0.0
  %2572 = vmatpush2.msra.mxu0 0.0
  %2573 = vmatprep.subr.mxu0 0.0
  %2574 = vmatpush2.msra.mxu0 0.0
  %2575 = vmatprep.subr.mxu0 0.0
  %2576 = vmatpush2.msra.mxu0 0.0
  %2577 = vmatprep.subr.mxu0 0.0
  %2578 = vmatpush2.msra.mxu0 0.0
  %2579 = vmatprep.subr.mxu0 0.0
  %2580 = vmatpush2.msra.mxu0 0.0
  %2581 = vmatprep.subr.mxu0 0.0
  %2582 = vmatpush2.msra.mxu0 0.0
  %2583 = vmatprep.subr.mxu0 0.0
  %2584 = vmatpush2.msra.mxu0 0.0
  %2585 = vmatprep.subr.mxu0 0.0
  %2586 = vmatpush2.msra.mxu0 0.0
  %2587 = vmatprep.subr.mxu0 0.0
  %2588 = vmatpush2.msra.mxu0 0.0
  %2589 = vmatprep.mubr.f32.mxu0 0.0
  %2590 = vmatmul.mubr.f32.gmra.mxu0 %v2452
  %v2591 = vpop.f32.mrf.mxu0
  %v2592 = vadd.f32 0.0, %v2591
  %v2593 = vpop.f32.mrf.mxu0
  %v2594 = vadd.f32 0.0, %v2593
  %2595 = vdwg.mxu0
  %v2596 = vadd.f32 %v2413, %v2521
  %v2597 = vadd.f32 %v2414, %v2523
  %v2598 = vadd.f32 %v2415, %v2592
  %v2599 = vadd.f32 %v2416, %v2594
  %2600 = vrot.lane.b32.xlu0 %v1899, 1
  %v2601 = vpop.permute.xlu0 %2600
  %2602 = vrot.lane.b32.xlu0 %v1903, 1
  %v2603 = vpop.permute.xlu0 %2602
  %2604 = vrot.lane.b32.xlu0 %v1900, 1
  %v2605 = vpop.permute.xlu0 %2604
  %2606 = vrot.lane.b32.xlu0 %v1904, 1
  %v2607 = vpop.permute.xlu0 %2606
  %2608 = vrot.lane.b32.xlu0 %v1901, 1
  %v2609 = vpop.permute.xlu0 %2608
  %2610 = vrot.lane.b32.xlu0 %v1905, 1
  %v2611 = vpop.permute.xlu0 %2610
  %2612 = vrot.lane.b32.xlu0 %v1902, 1
  %v2613 = vpop.permute.xlu0 %2612
  %2614 = vrot.lane.b32.xlu0 %v1906, 1
  %v2615 = vpop.permute.xlu0 %2614
  %v2616 = vsel %vm844, %v2609, %v2613
  %v2617 = vsel %vm844, %v2611, %v2615
  %v2618 = vsel %vm844, %v2605, %v2609
  %v2619 = vsel %vm844, %v2607, %v2611
  %v2620 = vsel %vm844, %v2601, %v2605
  %v2621 = vsel %vm844, %v2603, %v2607
  %v2622 = vsel %vm844, %v2613, %v2601
  %v2623 = vsel %vm844, %v2615, %v2603
  %v2624 = vsel %vm866, %v2622, 0.0
  %v2625 = vsel %vm867, %v2620, 0.0
  %v2626 = vsel %vm868, %v2618, 0.0
  %v2627 = vsel %vm869, %v2616, 0.0
  %v2628 = vsel %vm866, %v2623, 0.0
  %v2629 = vsel %vm867, %v2621, 0.0
  %v2630 = vsel %vm868, %v2619, 0.0
  %v2631 = vsel %vm869, %v2617, 0.0
  %s2632 = scalar_lea.vmem %s4, 12
  %v2633 = vld [vmem:[%s2632] sm:$0x7]
  %v2635 = vsel %vm1943, %v2633, 0
  %2637 = vmatprep.subr.mxu0 0.0
  %2638 = vmatpush1.msra.mxu0 0.0
  %2639 = vmatprep.subr.mxu0 0.0
  %2640 = vmatpush1.msra.mxu0 0.0
  %2641 = vmatprep.subr.mxu0 0.0
  %2642 = vmatpush1.msra.mxu0 0.0
  %2643 = vmatprep.subr.mxu0 0.0
  %2644 = vmatpush1.msra.mxu0 0.0
  %2645 = vmatprep.subr.mxu0 0.0
  %2646 = vmatpush1.msra.mxu0 0.0
  %2647 = vmatprep.subr.mxu0 0.0
  %2648 = vmatpush1.msra.mxu0 0.0
  %2649 = vmatprep.subr.mxu0 0.0
  %2650 = vmatpush1.msra.mxu0 0.0
  %2651 = vmatprep.subr.mxu0 0.0
  %2652 = vmatpush1.msra.mxu0 0.0
  %2653 = vmatprep.subr.mxu0 0.0
  %2654 = vmatpush1.msra.mxu0 0.0
  %2655 = vmatprep.subr.mxu0 0.0
  %2656 = vmatpush1.msra.mxu0 0.0
  %2657 = vmatprep.subr.mxu0 0.0
  %2658 = vmatpush1.msra.mxu0 0.0
  %2659 = vmatprep.subr.mxu0 0.0
  %2660 = vmatpush1.msra.mxu0 0.0
  %2661 = vmatprep.subr.mxu0 0.0
  %2662 = vmatpush1.msra.mxu0 0.0
  %2663 = vmatprep.subr.mxu0 0.0
  %2664 = vmatpush1.msra.mxu0 0.0
  %2665 = vmatprep.subr.mxu0 %v2629
  %2666 = vmatpush1.msra.mxu0 %v2628
  %2667 = vmatprep.subr.mxu0 %v2625
  %2668 = vmatpush1.msra.mxu0 %v2624
  %2669 = vmatprep.subr.mxu0 0.0
  %2670 = vmatpush2.msra.mxu0 0.0
  %2671 = vmatprep.subr.mxu0 0.0
  %2672 = vmatpush2.msra.mxu0 0.0
  %2673 = vmatprep.subr.mxu0 0.0
  %2674 = vmatpush2.msra.mxu0 0.0
  %2675 = vmatprep.subr.mxu0 0.0
  %2676 = vmatpush2.msra.mxu0 0.0
  %2677 = vmatprep.subr.mxu0 0.0
  %2678 = vmatpush2.msra.mxu0 0.0
  %2679 = vmatprep.subr.mxu0 0.0
  %2680 = vmatpush2.msra.mxu0 0.0
  %2681 = vmatprep.subr.mxu0 0.0
  %2682 = vmatpush2.msra.mxu0 0.0
  %2683 = vmatprep.subr.mxu0 0.0
  %2684 = vmatpush2.msra.mxu0 0.0
  %2685 = vmatprep.subr.mxu0 0.0
  %2686 = vmatpush2.msra.mxu0 0.0
  %2687 = vmatprep.subr.mxu0 0.0
  %2688 = vmatpush2.msra.mxu0 0.0
  %2689 = vmatprep.subr.mxu0 0.0
  %2690 = vmatpush2.msra.mxu0 0.0
  %2691 = vmatprep.subr.mxu0 0.0
  %2692 = vmatpush2.msra.mxu0 0.0
  %2693 = vmatprep.subr.mxu0 0.0
  %2694 = vmatpush2.msra.mxu0 0.0
  %2695 = vmatprep.subr.mxu0 0.0
  %2696 = vmatpush2.msra.mxu0 0.0
  %2697 = vmatprep.subr.mxu0 0.0
  %2698 = vmatpush2.msra.mxu0 0.0
  %2699 = vmatprep.subr.mxu0 0.0
  %2700 = vmatpush2.msra.mxu0 0.0
  %2701 = vmatprep.mubr.f32.mxu0 0.0
  %2702 = vmatmul.mubr.f32.gmra.mxu0 %v2635
  %v2703 = vpop.f32.mrf.mxu0
  %v2704 = vadd.f32 0.0, %v2703
  %v2705 = vpop.f32.mrf.mxu0
  %v2706 = vadd.f32 0.0, %v2705
  %2707 = vdwg.mxu0
  %2708 = vmatprep.subr.mxu0 0.0
  %2709 = vmatpush1.msra.mxu0 0.0
  %2710 = vmatprep.subr.mxu0 0.0
  %2711 = vmatpush1.msra.mxu0 0.0
  %2712 = vmatprep.subr.mxu0 0.0
  %2713 = vmatpush1.msra.mxu0 0.0
  %2714 = vmatprep.subr.mxu0 0.0
  %2715 = vmatpush1.msra.mxu0 0.0
  %2716 = vmatprep.subr.mxu0 0.0
  %2717 = vmatpush1.msra.mxu0 0.0
  %2718 = vmatprep.subr.mxu0 0.0
  %2719 = vmatpush1.msra.mxu0 0.0
  %2720 = vmatprep.subr.mxu0 0.0
  %2721 = vmatpush1.msra.mxu0 0.0
  %2722 = vmatprep.subr.mxu0 0.0
  %2723 = vmatpush1.msra.mxu0 0.0
  %2724 = vmatprep.subr.mxu0 0.0
  %2725 = vmatpush1.msra.mxu0 0.0
  %2726 = vmatprep.subr.mxu0 0.0
  %2727 = vmatpush1.msra.mxu0 0.0
  %2728 = vmatprep.subr.mxu0 0.0
  %2729 = vmatpush1.msra.mxu0 0.0
  %2730 = vmatprep.subr.mxu0 0.0
  %2731 = vmatpush1.msra.mxu0 0.0
  %2732 = vmatprep.subr.mxu0 0.0
  %2733 = vmatpush1.msra.mxu0 0.0
  %2734 = vmatprep.subr.mxu0 0.0
  %2735 = vmatpush1.msra.mxu0 0.0
  %2736 = vmatprep.subr.mxu0 %v2631
  %2737 = vmatpush1.msra.mxu0 %v2630
  %2738 = vmatprep.subr.mxu0 %v2627
  %2739 = vmatpush1.msra.mxu0 %v2626
  %2740 = vmatprep.subr.mxu0 0.0
  %2741 = vmatpush2.msra.mxu0 0.0
  %2742 = vmatprep.subr.mxu0 0.0
  %2743 = vmatpush2.msra.mxu0 0.0
  %2744 = vmatprep.subr.mxu0 0.0
  %2745 = vmatpush2.msra.mxu0 0.0
  %2746 = vmatprep.subr.mxu0 0.0
  %2747 = vmatpush2.msra.mxu0 0.0
  %2748 = vmatprep.subr.mxu0 0.0
  %2749 = vmatpush2.msra.mxu0 0.0
  %2750 = vmatprep.subr.mxu0 0.0
  %2751 = vmatpush2.msra.mxu0 0.0
  %2752 = vmatprep.subr.mxu0 0.0
  %2753 = vmatpush2.msra.mxu0 0.0
  %2754 = vmatprep.subr.mxu0 0.0
  %2755 = vmatpush2.msra.mxu0 0.0
  %2756 = vmatprep.subr.mxu0 0.0
  %2757 = vmatpush2.msra.mxu0 0.0
  %2758 = vmatprep.subr.mxu0 0.0
  %2759 = vmatpush2.msra.mxu0 0.0
  %2760 = vmatprep.subr.mxu0 0.0
  %2761 = vmatpush2.msra.mxu0 0.0
  %2762 = vmatprep.subr.mxu0 0.0
  %2763 = vmatpush2.msra.mxu0 0.0
  %2764 = vmatprep.subr.mxu0 0.0
  %2765 = vmatpush2.msra.mxu0 0.0
  %2766 = vmatprep.subr.mxu0 0.0
  %2767 = vmatpush2.msra.mxu0 0.0
  %2768 = vmatprep.subr.mxu0 0.0
  %2769 = vmatpush2.msra.mxu0 0.0
  %2770 = vmatprep.subr.mxu0 0.0
  %2771 = vmatpush2.msra.mxu0 0.0
  %2772 = vmatprep.mubr.f32.mxu0 0.0
  %2773 = vmatmul.mubr.f32.gmra.mxu0 %v2635
  %v2774 = vpop.f32.mrf.mxu0
  %v2775 = vadd.f32 0.0, %v2774
  %v2776 = vpop.f32.mrf.mxu0
  %v2777 = vadd.f32 0.0, %v2776
  %2778 = vdwg.mxu0
  %v2779 = vadd.f32 %v2596, %v2704
  %v2780 = vadd.f32 %v2597, %v2706
  %v2781 = vadd.f32 %v2598, %v2775
  %v2782 = vadd.f32 %v2599, %v2777
  %2783 = vrot.lane.b32.xlu0 %v1899, 127
  %v2784 = vpop.permute.xlu0 %2783
  %2785 = vrot.lane.b32.xlu0 %v1903, 127
  %v2786 = vpop.permute.xlu0 %2785
  %2787 = vrot.lane.b32.xlu0 %v1900, 127
  %v2788 = vpop.permute.xlu0 %2787
  %2789 = vrot.lane.b32.xlu0 %v1904, 127
  %v2790 = vpop.permute.xlu0 %2789
  %2791 = vrot.lane.b32.xlu0 %v1901, 127
  %v2792 = vpop.permute.xlu0 %2791
  %2793 = vrot.lane.b32.xlu0 %v1905, 127
  %v2794 = vpop.permute.xlu0 %2793
  %2795 = vrot.lane.b32.xlu0 %v1902, 127
  %v2796 = vpop.permute.xlu0 %2795
  %2797 = vrot.lane.b32.xlu0 %v1906, 127
  %v2798 = vpop.permute.xlu0 %2797
  %v2799 = vsel %vm1053, %v2792, %v2796
  %v2800 = vsel %vm1053, %v2794, %v2798
  %v2801 = vsel %vm1053, %v2788, %v2792
  %v2802 = vsel %vm1053, %v2790, %v2794
  %v2803 = vsel %vm1053, %v2784, %v2788
  %v2804 = vsel %vm1053, %v2786, %v2790
  %v2805 = vsel %vm1053, %v2796, %v2784
  %v2806 = vsel %vm1053, %v2798, %v2786
  %v2807 = vsel %vm1075, %v2803, 0.0
  %v2808 = vsel %vm1076, %v2801, 0.0
  %v2809 = vsel %vm1077, %v2799, 0.0
  %v2810 = vsel %vm1078, %v2805, 0.0
  %v2811 = vsel %vm1075, %v2804, 0.0
  %v2812 = vsel %vm1076, %v2802, 0.0
  %v2813 = vsel %vm1077, %v2800, 0.0
  %v2814 = vsel %vm1078, %v2806, 0.0
  %s2815 = scalar_lea.vmem %s4, 20
  %v2816 = vld [vmem:[%s2815] sm:$0x7]
  %v2818 = vsel %vm1943, %v2816, 0
  %2820 = vmatprep.subr.mxu0 0.0
  %2821 = vmatpush1.msra.mxu0 0.0
  %2822 = vmatprep.subr.mxu0 0.0
  %2823 = vmatpush1.msra.mxu0 0.0
  %2824 = vmatprep.subr.mxu0 0.0
  %2825 = vmatpush1.msra.mxu0 0.0
  %2826 = vmatprep.subr.mxu0 0.0
  %2827 = vmatpush1.msra.mxu0 0.0
  %2828 = vmatprep.subr.mxu0 0.0
  %2829 = vmatpush1.msra.mxu0 0.0
  %2830 = vmatprep.subr.mxu0 0.0
  %2831 = vmatpush1.msra.mxu0 0.0
  %2832 = vmatprep.subr.mxu0 0.0
  %2833 = vmatpush1.msra.mxu0 0.0
  %2834 = vmatprep.subr.mxu0 0.0
  %2835 = vmatpush1.msra.mxu0 0.0
  %2836 = vmatprep.subr.mxu0 0.0
  %2837 = vmatpush1.msra.mxu0 0.0
  %2838 = vmatprep.subr.mxu0 0.0
  %2839 = vmatpush1.msra.mxu0 0.0
  %2840 = vmatprep.subr.mxu0 0.0
  %2841 = vmatpush1.msra.mxu0 0.0
  %2842 = vmatprep.subr.mxu0 0.0
  %2843 = vmatpush1.msra.mxu0 0.0
  %2844 = vmatprep.subr.mxu0 0.0
  %2845 = vmatpush1.msra.mxu0 0.0
  %2846 = vmatprep.subr.mxu0 0.0
  %2847 = vmatpush1.msra.mxu0 0.0
  %2848 = vmatprep.subr.mxu0 %v2812
  %2849 = vmatpush1.msra.mxu0 %v2811
  %2850 = vmatprep.subr.mxu0 %v2808
  %2851 = vmatpush1.msra.mxu0 %v2807
  %2852 = vmatprep.subr.mxu0 0.0
  %2853 = vmatpush2.msra.mxu0 0.0
  %2854 = vmatprep.subr.mxu0 0.0
  %2855 = vmatpush2.msra.mxu0 0.0
  %2856 = vmatprep.subr.mxu0 0.0
  %2857 = vmatpush2.msra.mxu0 0.0
  %2858 = vmatprep.subr.mxu0 0.0
  %2859 = vmatpush2.msra.mxu0 0.0
  %2860 = vmatprep.subr.mxu0 0.0
  %2861 = vmatpush2.msra.mxu0 0.0
  %2862 = vmatprep.subr.mxu0 0.0
  %2863 = vmatpush2.msra.mxu0 0.0
  %2864 = vmatprep.subr.mxu0 0.0
  %2865 = vmatpush2.msra.mxu0 0.0
  %2866 = vmatprep.subr.mxu0 0.0
  %2867 = vmatpush2.msra.mxu0 0.0
  %2868 = vmatprep.subr.mxu0 0.0
  %2869 = vmatpush2.msra.mxu0 0.0
  %2870 = vmatprep.subr.mxu0 0.0
  %2871 = vmatpush2.msra.mxu0 0.0
  %2872 = vmatprep.subr.mxu0 0.0
  %2873 = vmatpush2.msra.mxu0 0.0
  %2874 = vmatprep.subr.mxu0 0.0
  %2875 = vmatpush2.msra.mxu0 0.0
  %2876 = vmatprep.subr.mxu0 0.0
  %2877 = vmatpush2.msra.mxu0 0.0
  %2878 = vmatprep.subr.mxu0 0.0
  %2879 = vmatpush2.msra.mxu0 0.0
  %2880 = vmatprep.subr.mxu0 0.0
  %2881 = vmatpush2.msra.mxu0 0.0
  %2882 = vmatprep.subr.mxu0 0.0
  %2883 = vmatpush2.msra.mxu0 0.0
  %2884 = vmatprep.mubr.f32.mxu0 0.0
  %2885 = vmatmul.mubr.f32.gmra.mxu0 %v2818
  %v2886 = vpop.f32.mrf.mxu0
  %v2887 = vadd.f32 0.0, %v2886
  %v2888 = vpop.f32.mrf.mxu0
  %v2889 = vadd.f32 0.0, %v2888
  %2890 = vdwg.mxu0
  %2891 = vmatprep.subr.mxu0 0.0
  %2892 = vmatpush1.msra.mxu0 0.0
  %2893 = vmatprep.subr.mxu0 0.0
  %2894 = vmatpush1.msra.mxu0 0.0
  %2895 = vmatprep.subr.mxu0 0.0
  %2896 = vmatpush1.msra.mxu0 0.0
  %2897 = vmatprep.subr.mxu0 0.0
  %2898 = vmatpush1.msra.mxu0 0.0
  %2899 = vmatprep.subr.mxu0 0.0
  %2900 = vmatpush1.msra.mxu0 0.0
  %2901 = vmatprep.subr.mxu0 0.0
  %2902 = vmatpush1.msra.mxu0 0.0
  %2903 = vmatprep.subr.mxu0 0.0
  %2904 = vmatpush1.msra.mxu0 0.0
  %2905 = vmatprep.subr.mxu0 0.0
  %2906 = vmatpush1.msra.mxu0 0.0
  %2907 = vmatprep.subr.mxu0 0.0
  %2908 = vmatpush1.msra.mxu0 0.0
  %2909 = vmatprep.subr.mxu0 0.0
  %2910 = vmatpush1.msra.mxu0 0.0
  %2911 = vmatprep.subr.mxu0 0.0
  %2912 = vmatpush1.msra.mxu0 0.0
  %2913 = vmatprep.subr.mxu0 0.0
  %2914 = vmatpush1.msra.mxu0 0.0
  %2915 = vmatprep.subr.mxu0 0.0
  %2916 = vmatpush1.msra.mxu0 0.0
  %2917 = vmatprep.subr.mxu0 0.0
  %2918 = vmatpush1.msra.mxu0 0.0
  %2919 = vmatprep.subr.mxu0 %v2814
  %2920 = vmatpush1.msra.mxu0 %v2813
  %2921 = vmatprep.subr.mxu0 %v2810
  %2922 = vmatpush1.msra.mxu0 %v2809
  %2923 = vmatprep.subr.mxu0 0.0
  %2924 = vmatpush2.msra.mxu0 0.0
  %2925 = vmatprep.subr.mxu0 0.0
  %2926 = vmatpush2.msra.mxu0 0.0
  %2927 = vmatprep.subr.mxu0 0.0
  %2928 = vmatpush2.msra.mxu0 0.0
  %2929 = vmatprep.subr.mxu0 0.0
  %2930 = vmatpush2.msra.mxu0 0.0
  %2931 = vmatprep.subr.mxu0 0.0
  %2932 = vmatpush2.msra.mxu0 0.0
  %2933 = vmatprep.subr.mxu0 0.0
  %2934 = vmatpush2.msra.mxu0 0.0
  %2935 = vmatprep.subr.mxu0 0.0
  %2936 = vmatpush2.msra.mxu0 0.0
  %2937 = vmatprep.subr.mxu0 0.0
  %2938 = vmatpush2.msra.mxu0 0.0
  %2939 = vmatprep.subr.mxu0 0.0
  %2940 = vmatpush2.msra.mxu0 0.0
  %2941 = vmatprep.subr.mxu0 0.0
  %2942 = vmatpush2.msra.mxu0 0.0
  %2943 = vmatprep.subr.mxu0 0.0
  %2944 = vmatpush2.msra.mxu0 0.0
  %2945 = vmatprep.subr.mxu0 0.0
  %2946 = vmatpush2.msra.mxu0 0.0
  %2947 = vmatprep.subr.mxu0 0.0
  %2948 = vmatpush2.msra.mxu0 0.0
  %2949 = vmatprep.subr.mxu0 0.0
  %2950 = vmatpush2.msra.mxu0 0.0
  %2951 = vmatprep.subr.mxu0 0.0
  %2952 = vmatpush2.msra.mxu0 0.0
  %2953 = vmatprep.subr.mxu0 0.0
  %2954 = vmatpush2.msra.mxu0 0.0
  %2955 = vmatprep.mubr.f32.mxu0 0.0
  %2956 = vmatmul.mubr.f32.gmra.mxu0 %v2818
  %v2957 = vpop.f32.mrf.mxu0
  %v2958 = vadd.f32 0.0, %v2957
  %v2959 = vpop.f32.mrf.mxu0
  %v2960 = vadd.f32 0.0, %v2959
  %2961 = vdwg.mxu0
  %v2962 = vadd.f32 %v2779, %v2887
  %v2963 = vadd.f32 %v2780, %v2889
  %v2964 = vadd.f32 %v2781, %v2958
  %v2965 = vadd.f32 %v2782, %v2960
  %2966 = vrot.lane.b32.xlu0 %v1899, 113
  %v2967 = vpop.permute.xlu0 %2966
  %2968 = vrot.lane.b32.xlu0 %v1903, 113
  %v2969 = vpop.permute.xlu0 %2968
  %2970 = vrot.lane.b32.xlu0 %v1900, 113
  %v2971 = vpop.permute.xlu0 %2970
  %2972 = vrot.lane.b32.xlu0 %v1904, 113
  %v2973 = vpop.permute.xlu0 %2972
  %2974 = vrot.lane.b32.xlu0 %v1901, 113
  %v2975 = vpop.permute.xlu0 %2974
  %2976 = vrot.lane.b32.xlu0 %v1905, 113
  %v2977 = vpop.permute.xlu0 %2976
  %2978 = vrot.lane.b32.xlu0 %v1902, 113
  %v2979 = vpop.permute.xlu0 %2978
  %2980 = vrot.lane.b32.xlu0 %v1906, 113
  %v2981 = vpop.permute.xlu0 %2980
  %v2982 = vsel %vm1262, %v2975, %v2979
  %v2983 = vsel %vm1262, %v2977, %v2981
  %v2984 = vsel %vm1262, %v2971, %v2975
  %v2985 = vsel %vm1262, %v2973, %v2977
  %v2986 = vsel %vm1262, %v2967, %v2971
  %v2987 = vsel %vm1262, %v2969, %v2973
  %v2988 = vsel %vm1262, %v2979, %v2967
  %v2989 = vsel %vm1262, %v2981, %v2969
  %v2990 = vsel %vm1284, %v2986, 0.0
  %v2991 = vsel %vm1285, %v2984, 0.0
  %v2992 = vsel %vm1286, %v2982, 0.0
  %v2993 = vsel %vm1287, %v2988, 0.0
  %v2994 = vsel %vm1284, %v2987, 0.0
  %v2995 = vsel %vm1285, %v2985, 0.0
  %v2996 = vsel %vm1286, %v2983, 0.0
  %v2997 = vsel %vm1287, %v2989, 0.0
  %s2998 = scalar_lea.vmem %s4, 24
  %v2999 = vld [vmem:[%s2998] sm:$0x7]
  %v3001 = vsel %vm1943, %v2999, 0
  %3003 = vmatprep.subr.mxu0 0.0
  %3004 = vmatpush1.msra.mxu0 0.0
  %3005 = vmatprep.subr.mxu0 0.0
  %3006 = vmatpush1.msra.mxu0 0.0
  %3007 = vmatprep.subr.mxu0 0.0
  %3008 = vmatpush1.msra.mxu0 0.0
  %3009 = vmatprep.subr.mxu0 0.0
  %3010 = vmatpush1.msra.mxu0 0.0
  %3011 = vmatprep.subr.mxu0 0.0
  %3012 = vmatpush1.msra.mxu0 0.0
  %3013 = vmatprep.subr.mxu0 0.0
  %3014 = vmatpush1.msra.mxu0 0.0
  %3015 = vmatprep.subr.mxu0 0.0
  %3016 = vmatpush1.msra.mxu0 0.0
  %3017 = vmatprep.subr.mxu0 0.0
  %3018 = vmatpush1.msra.mxu0 0.0
  %3019 = vmatprep.subr.mxu0 0.0
  %3020 = vmatpush1.msra.mxu0 0.0
  %3021 = vmatprep.subr.mxu0 0.0
  %3022 = vmatpush1.msra.mxu0 0.0
  %3023 = vmatprep.subr.mxu0 0.0
  %3024 = vmatpush1.msra.mxu0 0.0
  %3025 = vmatprep.subr.mxu0 0.0
  %3026 = vmatpush1.msra.mxu0 0.0
  %3027 = vmatprep.subr.mxu0 0.0
  %3028 = vmatpush1.msra.mxu0 0.0
  %3029 = vmatprep.subr.mxu0 0.0
  %3030 = vmatpush1.msra.mxu0 0.0
  %3031 = vmatprep.subr.mxu0 %v2995
  %3032 = vmatpush1.msra.mxu0 %v2994
  %3033 = vmatprep.subr.mxu0 %v2991
  %3034 = vmatpush1.msra.mxu0 %v2990
  %3035 = vmatprep.subr.mxu0 0.0
  %3036 = vmatpush2.msra.mxu0 0.0
  %3037 = vmatprep.subr.mxu0 0.0
  %3038 = vmatpush2.msra.mxu0 0.0
  %3039 = vmatprep.subr.mxu0 0.0
  %3040 = vmatpush2.msra.mxu0 0.0
  %3041 = vmatprep.subr.mxu0 0.0
  %3042 = vmatpush2.msra.mxu0 0.0
  %3043 = vmatprep.subr.mxu0 0.0
  %3044 = vmatpush2.msra.mxu0 0.0
  %3045 = vmatprep.subr.mxu0 0.0
  %3046 = vmatpush2.msra.mxu0 0.0
  %3047 = vmatprep.subr.mxu0 0.0
  %3048 = vmatpush2.msra.mxu0 0.0
  %3049 = vmatprep.subr.mxu0 0.0
  %3050 = vmatpush2.msra.mxu0 0.0
  %3051 = vmatprep.subr.mxu0 0.0
  %3052 = vmatpush2.msra.mxu0 0.0
  %3053 = vmatprep.subr.mxu0 0.0
  %3054 = vmatpush2.msra.mxu0 0.0
  %3055 = vmatprep.subr.mxu0 0.0
  %3056 = vmatpush2.msra.mxu0 0.0
  %3057 = vmatprep.subr.mxu0 0.0
  %3058 = vmatpush2.msra.mxu0 0.0
  %3059 = vmatprep.subr.mxu0 0.0
  %3060 = vmatpush2.msra.mxu0 0.0
  %3061 = vmatprep.subr.mxu0 0.0
  %3062 = vmatpush2.msra.mxu0 0.0
  %3063 = vmatprep.subr.mxu0 0.0
  %3064 = vmatpush2.msra.mxu0 0.0
  %3065 = vmatprep.subr.mxu0 0.0
  %3066 = vmatpush2.msra.mxu0 0.0
  %3067 = vmatprep.mubr.f32.mxu0 0.0
  %3068 = vmatmul.mubr.f32.gmra.mxu0 %v3001
  %v3069 = vpop.f32.mrf.mxu0
  %v3070 = vadd.f32 0.0, %v3069
  %v3071 = vpop.f32.mrf.mxu0
  %v3072 = vadd.f32 0.0, %v3071
  %3073 = vdwg.mxu0
  %3074 = vmatprep.subr.mxu0 0.0
  %3075 = vmatpush1.msra.mxu0 0.0
  %3076 = vmatprep.subr.mxu0 0.0
  %3077 = vmatpush1.msra.mxu0 0.0
  %3078 = vmatprep.subr.mxu0 0.0
  %3079 = vmatpush1.msra.mxu0 0.0
  %3080 = vmatprep.subr.mxu0 0.0
  %3081 = vmatpush1.msra.mxu0 0.0
  %3082 = vmatprep.subr.mxu0 0.0
  %3083 = vmatpush1.msra.mxu0 0.0
  %3084 = vmatprep.subr.mxu0 0.0
  %3085 = vmatpush1.msra.mxu0 0.0
  %3086 = vmatprep.subr.mxu0 0.0
  %3087 = vmatpush1.msra.mxu0 0.0
  %3088 = vmatprep.subr.mxu0 0.0
  %3089 = vmatpush1.msra.mxu0 0.0
  %3090 = vmatprep.subr.mxu0 0.0
  %3091 = vmatpush1.msra.mxu0 0.0
  %3092 = vmatprep.subr.mxu0 0.0
  %3093 = vmatpush1.msra.mxu0 0.0
  %3094 = vmatprep.subr.mxu0 0.0
  %3095 = vmatpush1.msra.mxu0 0.0
  %3096 = vmatprep.subr.mxu0 0.0
  %3097 = vmatpush1.msra.mxu0 0.0
  %3098 = vmatprep.subr.mxu0 0.0
  %3099 = vmatpush1.msra.mxu0 0.0
  %3100 = vmatprep.subr.mxu0 0.0
  %3101 = vmatpush1.msra.mxu0 0.0
  %3102 = vmatprep.subr.mxu0 %v2997
  %3103 = vmatpush1.msra.mxu0 %v2996
  %3104 = vmatprep.subr.mxu0 %v2993
  %3105 = vmatpush1.msra.mxu0 %v2992
  %3106 = vmatprep.subr.mxu0 0.0
  %3107 = vmatpush2.msra.mxu0 0.0
  %3108 = vmatprep.subr.mxu0 0.0
  %3109 = vmatpush2.msra.mxu0 0.0
  %3110 = vmatprep.subr.mxu0 0.0
  %3111 = vmatpush2.msra.mxu0 0.0
  %3112 = vmatprep.subr.mxu0 0.0
  %3113 = vmatpush2.msra.mxu0 0.0
  %3114 = vmatprep.subr.mxu0 0.0
  %3115 = vmatpush2.msra.mxu0 0.0
  %3116 = vmatprep.subr.mxu0 0.0
  %3117 = vmatpush2.msra.mxu0 0.0
  %3118 = vmatprep.subr.mxu0 0.0
  %3119 = vmatpush2.msra.mxu0 0.0
  %3120 = vmatprep.subr.mxu0 0.0
  %3121 = vmatpush2.msra.mxu0 0.0
  %3122 = vmatprep.subr.mxu0 0.0
  %3123 = vmatpush2.msra.mxu0 0.0
  %3124 = vmatprep.subr.mxu0 0.0
  %3125 = vmatpush2.msra.mxu0 0.0
  %3126 = vmatprep.subr.mxu0 0.0
  %3127 = vmatpush2.msra.mxu0 0.0
  %3128 = vmatprep.subr.mxu0 0.0
  %3129 = vmatpush2.msra.mxu0 0.0
  %3130 = vmatprep.subr.mxu0 0.0
  %3131 = vmatpush2.msra.mxu0 0.0
  %3132 = vmatprep.subr.mxu0 0.0
  %3133 = vmatpush2.msra.mxu0 0.0
  %3134 = vmatprep.subr.mxu0 0.0
  %3135 = vmatpush2.msra.mxu0 0.0
  %3136 = vmatprep.subr.mxu0 0.0
  %3137 = vmatpush2.msra.mxu0 0.0
  %3138 = vmatprep.mubr.f32.mxu0 0.0
  %3139 = vmatmul.mubr.f32.gmra.mxu0 %v3001
  %v3140 = vpop.f32.mrf.mxu0
  %v3141 = vadd.f32 0.0, %v3140
  %v3142 = vpop.f32.mrf.mxu0
  %v3143 = vadd.f32 0.0, %v3142
  %3144 = vdwg.mxu0
  %v3145 = vadd.f32 %v2962, %v3070
  %v3146 = vadd.f32 %v2963, %v3072
  %v3147 = vadd.f32 %v2964, %v3141
  %v3148 = vadd.f32 %v2965, %v3143
  %3149 = vrot.lane.b32.xlu0 %v1899, 112
  %v3150 = vpop.permute.xlu0 %3149
  %3151 = vrot.lane.b32.xlu0 %v1903, 112
  %v3152 = vpop.permute.xlu0 %3151
  %3153 = vrot.lane.b32.xlu0 %v1900, 112
  %v3154 = vpop.permute.xlu0 %3153
  %3155 = vrot.lane.b32.xlu0 %v1904, 112
  %v3156 = vpop.permute.xlu0 %3155
  %3157 = vrot.lane.b32.xlu0 %v1901, 112
  %v3158 = vpop.permute.xlu0 %3157
  %3159 = vrot.lane.b32.xlu0 %v1905, 112
  %v3160 = vpop.permute.xlu0 %3159
  %3161 = vrot.lane.b32.xlu0 %v1902, 112
  %v3162 = vpop.permute.xlu0 %3161
  %3163 = vrot.lane.b32.xlu0 %v1906, 112
  %v3164 = vpop.permute.xlu0 %3163
  %v3165 = vsel %vm1471, %v3158, %v3162
  %v3166 = vsel %vm1471, %v3160, %v3164
  %v3167 = vsel %vm1471, %v3154, %v3158
  %v3168 = vsel %vm1471, %v3156, %v3160
  %v3169 = vsel %vm1471, %v3150, %v3154
  %v3170 = vsel %vm1471, %v3152, %v3156
  %v3171 = vsel %vm1471, %v3162, %v3150
  %v3172 = vsel %vm1471, %v3164, %v3152
  %v3173 = vsel %vm1493, %v3169, 0.0
  %v3174 = vsel %vm1494, %v3167, 0.0
  %v3175 = vsel %vm1495, %v3165, 0.0
  %v3176 = vsel %vm1496, %v3171, 0.0
  %v3177 = vsel %vm1493, %v3170, 0.0
  %v3178 = vsel %vm1494, %v3168, 0.0
  %v3179 = vsel %vm1495, %v3166, 0.0
  %v3180 = vsel %vm1496, %v3172, 0.0
  %s3181 = scalar_lea.vmem %s4, 28
  %v3182 = vld [vmem:[%s3181] sm:$0x7]
  %v3184 = vsel %vm1943, %v3182, 0
  %3186 = vmatprep.subr.mxu0 0.0
  %3187 = vmatpush1.msra.mxu0 0.0
  %3188 = vmatprep.subr.mxu0 0.0
  %3189 = vmatpush1.msra.mxu0 0.0
  %3190 = vmatprep.subr.mxu0 0.0
  %3191 = vmatpush1.msra.mxu0 0.0
  %3192 = vmatprep.subr.mxu0 0.0
  %3193 = vmatpush1.msra.mxu0 0.0
  %3194 = vmatprep.subr.mxu0 0.0
  %3195 = vmatpush1.msra.mxu0 0.0
  %3196 = vmatprep.subr.mxu0 0.0
  %3197 = vmatpush1.msra.mxu0 0.0
  %3198 = vmatprep.subr.mxu0 0.0
  %3199 = vmatpush1.msra.mxu0 0.0
  %3200 = vmatprep.subr.mxu0 0.0
  %3201 = vmatpush1.msra.mxu0 0.0
  %3202 = vmatprep.subr.mxu0 0.0
  %3203 = vmatpush1.msra.mxu0 0.0
  %3204 = vmatprep.subr.mxu0 0.0
  %3205 = vmatpush1.msra.mxu0 0.0
  %3206 = vmatprep.subr.mxu0 0.0
  %3207 = vmatpush1.msra.mxu0 0.0
  %3208 = vmatprep.subr.mxu0 0.0
  %3209 = vmatpush1.msra.mxu0 0.0
  %3210 = vmatprep.subr.mxu0 0.0
  %3211 = vmatpush1.msra.mxu0 0.0
  %3212 = vmatprep.subr.mxu0 0.0
  %3213 = vmatpush1.msra.mxu0 0.0
  %3214 = vmatprep.subr.mxu0 %v3178
  %3215 = vmatpush1.msra.mxu0 %v3177
  %3216 = vmatprep.subr.mxu0 %v3174
  %3217 = vmatpush1.msra.mxu0 %v3173
  %3218 = vmatprep.subr.mxu0 0.0
  %3219 = vmatpush2.msra.mxu0 0.0
  %3220 = vmatprep.subr.mxu0 0.0
  %3221 = vmatpush2.msra.mxu0 0.0
  %3222 = vmatprep.subr.mxu0 0.0
  %3223 = vmatpush2.msra.mxu0 0.0
  %3224 = vmatprep.subr.mxu0 0.0
  %3225 = vmatpush2.msra.mxu0 0.0
  %3226 = vmatprep.subr.mxu0 0.0
  %3227 = vmatpush2.msra.mxu0 0.0
  %3228 = vmatprep.subr.mxu0 0.0
  %3229 = vmatpush2.msra.mxu0 0.0
  %3230 = vmatprep.subr.mxu0 0.0
  %3231 = vmatpush2.msra.mxu0 0.0
  %3232 = vmatprep.subr.mxu0 0.0
  %3233 = vmatpush2.msra.mxu0 0.0
  %3234 = vmatprep.subr.mxu0 0.0
  %3235 = vmatpush2.msra.mxu0 0.0
  %3236 = vmatprep.subr.mxu0 0.0
  %3237 = vmatpush2.msra.mxu0 0.0
  %3238 = vmatprep.subr.mxu0 0.0
  %3239 = vmatpush2.msra.mxu0 0.0
  %3240 = vmatprep.subr.mxu0 0.0
  %3241 = vmatpush2.msra.mxu0 0.0
  %3242 = vmatprep.subr.mxu0 0.0
  %3243 = vmatpush2.msra.mxu0 0.0
  %3244 = vmatprep.subr.mxu0 0.0
  %3245 = vmatpush2.msra.mxu0 0.0
  %3246 = vmatprep.subr.mxu0 0.0
  %3247 = vmatpush2.msra.mxu0 0.0
  %3248 = vmatprep.subr.mxu0 0.0
  %3249 = vmatpush2.msra.mxu0 0.0
  %3250 = vmatprep.mubr.f32.mxu0 0.0
  %3251 = vmatmul.mubr.f32.gmra.mxu0 %v3184
  %v3252 = vpop.f32.mrf.mxu0
  %v3253 = vadd.f32 0.0, %v3252
  %v3254 = vpop.f32.mrf.mxu0
  %v3255 = vadd.f32 0.0, %v3254
  %3256 = vdwg.mxu0
  %3257 = vmatprep.subr.mxu0 0.0
  %3258 = vmatpush1.msra.mxu0 0.0
  %3259 = vmatprep.subr.mxu0 0.0
  %3260 = vmatpush1.msra.mxu0 0.0
  %3261 = vmatprep.subr.mxu0 0.0
  %3262 = vmatpush1.msra.mxu0 0.0
  %3263 = vmatprep.subr.mxu0 0.0
  %3264 = vmatpush1.msra.mxu0 0.0
  %3265 = vmatprep.subr.mxu0 0.0
  %3266 = vmatpush1.msra.mxu0 0.0
  %3267 = vmatprep.subr.mxu0 0.0
  %3268 = vmatpush1.msra.mxu0 0.0
  %3269 = vmatprep.subr.mxu0 0.0
  %3270 = vmatpush1.msra.mxu0 0.0
  %3271 = vmatprep.subr.mxu0 0.0
  %3272 = vmatpush1.msra.mxu0 0.0
  %3273 = vmatprep.subr.mxu0 0.0
  %3274 = vmatpush1.msra.mxu0 0.0
  %3275 = vmatprep.subr.mxu0 0.0
  %3276 = vmatpush1.msra.mxu0 0.0
  %3277 = vmatprep.subr.mxu0 0.0
  %3278 = vmatpush1.msra.mxu0 0.0
  %3279 = vmatprep.subr.mxu0 0.0
  %3280 = vmatpush1.msra.mxu0 0.0
  %3281 = vmatprep.subr.mxu0 0.0
  %3282 = vmatpush1.msra.mxu0 0.0
  %3283 = vmatprep.subr.mxu0 0.0
  %3284 = vmatpush1.msra.mxu0 0.0
  %3285 = vmatprep.subr.mxu0 %v3180
  %3286 = vmatpush1.msra.mxu0 %v3179
  %3287 = vmatprep.subr.mxu0 %v3176
  %3288 = vmatpush1.msra.mxu0 %v3175
  %3289 = vmatprep.subr.mxu0 0.0
  %3290 = vmatpush2.msra.mxu0 0.0
  %3291 = vmatprep.subr.mxu0 0.0
  %3292 = vmatpush2.msra.mxu0 0.0
  %3293 = vmatprep.subr.mxu0 0.0
  %3294 = vmatpush2.msra.mxu0 0.0
  %3295 = vmatprep.subr.mxu0 0.0
  %3296 = vmatpush2.msra.mxu0 0.0
  %3297 = vmatprep.subr.mxu0 0.0
  %3298 = vmatpush2.msra.mxu0 0.0
  %3299 = vmatprep.subr.mxu0 0.0
  %3300 = vmatpush2.msra.mxu0 0.0
  %3301 = vmatprep.subr.mxu0 0.0
  %3302 = vmatpush2.msra.mxu0 0.0
  %3303 = vmatprep.subr.mxu0 0.0
  %3304 = vmatpush2.msra.mxu0 0.0
  %3305 = vmatprep.subr.mxu0 0.0
  %3306 = vmatpush2.msra.mxu0 0.0
  %3307 = vmatprep.subr.mxu0 0.0
  %3308 = vmatpush2.msra.mxu0 0.0
  %3309 = vmatprep.subr.mxu0 0.0
  %3310 = vmatpush2.msra.mxu0 0.0
  %3311 = vmatprep.subr.mxu0 0.0
  %3312 = vmatpush2.msra.mxu0 0.0
  %3313 = vmatprep.subr.mxu0 0.0
  %3314 = vmatpush2.msra.mxu0 0.0
  %3315 = vmatprep.subr.mxu0 0.0
  %3316 = vmatpush2.msra.mxu0 0.0
  %3317 = vmatprep.subr.mxu0 0.0
  %3318 = vmatpush2.msra.mxu0 0.0
  %3319 = vmatprep.subr.mxu0 0.0
  %3320 = vmatpush2.msra.mxu0 0.0
  %3321 = vmatprep.mubr.f32.mxu0 0.0
  %3322 = vmatmul.mubr.f32.gmra.mxu0 %v3184
  %v3323 = vpop.f32.mrf.mxu0
  %v3324 = vadd.f32 0.0, %v3323
  %v3325 = vpop.f32.mrf.mxu0
  %v3326 = vadd.f32 0.0, %v3325
  %3327 = vdwg.mxu0
  %v3328 = vadd.f32 %v3145, %v3253
  %v3329 = vadd.f32 %v3146, %v3255
  %v3330 = vadd.f32 %v3147, %v3324
  %v3331 = vadd.f32 %v3148, %v3326
  %3332 = vrot.lane.b32.xlu0 %v1899, 111
  %v3333 = vpop.permute.xlu0 %3332
  %3334 = vrot.lane.b32.xlu0 %v1903, 111
  %v3335 = vpop.permute.xlu0 %3334
  %3336 = vrot.lane.b32.xlu0 %v1900, 111
  %v3337 = vpop.permute.xlu0 %3336
  %3338 = vrot.lane.b32.xlu0 %v1904, 111
  %v3339 = vpop.permute.xlu0 %3338
  %3340 = vrot.lane.b32.xlu0 %v1901, 111
  %v3341 = vpop.permute.xlu0 %3340
  %3342 = vrot.lane.b32.xlu0 %v1905, 111
  %v3343 = vpop.permute.xlu0 %3342
  %3344 = vrot.lane.b32.xlu0 %v1902, 111
  %v3345 = vpop.permute.xlu0 %3344
  %3346 = vrot.lane.b32.xlu0 %v1906, 111
  %v3347 = vpop.permute.xlu0 %3346
  %v3348 = vsel %vm1680, %v3341, %v3345
  %v3349 = vsel %vm1680, %v3343, %v3347
  %v3350 = vsel %vm1680, %v3337, %v3341
  %v3351 = vsel %vm1680, %v3339, %v3343
  %v3352 = vsel %vm1680, %v3333, %v3337
  %v3353 = vsel %vm1680, %v3335, %v3339
  %v3354 = vsel %vm1680, %v3345, %v3333
  %v3355 = vsel %vm1680, %v3347, %v3335
  %v3356 = vsel %vm1702, %v3352, 0.0
  %v3357 = vsel %vm1703, %v3350, 0.0
  %v3358 = vsel %vm1704, %v3348, 0.0
  %v3359 = vsel %vm1705, %v3354, 0.0
  %v3360 = vsel %vm1702, %v3353, 0.0
  %v3361 = vsel %vm1703, %v3351, 0.0
  %v3362 = vsel %vm1704, %v3349, 0.0
  %v3363 = vsel %vm1705, %v3355, 0.0
  %s3364 = scalar_lea.vmem %s4, 32
  %v3365 = vld [vmem:[%s3364] sm:$0x7]
  %v3367 = vsel %vm1943, %v3365, 0
  %3369 = vmatprep.subr.mxu0 0.0
  %3370 = vmatpush1.msra.mxu0 0.0
  %3371 = vmatprep.subr.mxu0 0.0
  %3372 = vmatpush1.msra.mxu0 0.0
  %3373 = vmatprep.subr.mxu0 0.0
  %3374 = vmatpush1.msra.mxu0 0.0
  %3375 = vmatprep.subr.mxu0 0.0
  %3376 = vmatpush1.msra.mxu0 0.0
  %3377 = vmatprep.subr.mxu0 0.0
  %3378 = vmatpush1.msra.mxu0 0.0
  %3379 = vmatprep.subr.mxu0 0.0
  %3380 = vmatpush1.msra.mxu0 0.0
  %3381 = vmatprep.subr.mxu0 0.0
  %3382 = vmatpush1.msra.mxu0 0.0
  %3383 = vmatprep.subr.mxu0 0.0
  %3384 = vmatpush1.msra.mxu0 0.0
  %3385 = vmatprep.subr.mxu0 0.0
  %3386 = vmatpush1.msra.mxu0 0.0
  %3387 = vmatprep.subr.mxu0 0.0
  %3388 = vmatpush1.msra.mxu0 0.0
  %3389 = vmatprep.subr.mxu0 0.0
  %3390 = vmatpush1.msra.mxu0 0.0
  %3391 = vmatprep.subr.mxu0 0.0
  %3392 = vmatpush1.msra.mxu0 0.0
  %3393 = vmatprep.subr.mxu0 0.0
  %3394 = vmatpush1.msra.mxu0 0.0
  %3395 = vmatprep.subr.mxu0 0.0
  %3396 = vmatpush1.msra.mxu0 0.0
  %3397 = vmatprep.subr.mxu0 %v3361
  %3398 = vmatpush1.msra.mxu0 %v3360
  %3399 = vmatprep.subr.mxu0 %v3357
  %3400 = vmatpush1.msra.mxu0 %v3356
  %3401 = vmatprep.subr.mxu0 0.0
  %3402 = vmatpush2.msra.mxu0 0.0
  %3403 = vmatprep.subr.mxu0 0.0
  %3404 = vmatpush2.msra.mxu0 0.0
  %3405 = vmatprep.subr.mxu0 0.0
  %3406 = vmatpush2.msra.mxu0 0.0
  %3407 = vmatprep.subr.mxu0 0.0
  %3408 = vmatpush2.msra.mxu0 0.0
  %3409 = vmatprep.subr.mxu0 0.0
  %3410 = vmatpush2.msra.mxu0 0.0
  %3411 = vmatprep.subr.mxu0 0.0
  %3412 = vmatpush2.msra.mxu0 0.0
  %3413 = vmatprep.subr.mxu0 0.0
  %3414 = vmatpush2.msra.mxu0 0.0
  %3415 = vmatprep.subr.mxu0 0.0
  %3416 = vmatpush2.msra.mxu0 0.0
  %3417 = vmatprep.subr.mxu0 0.0
  %3418 = vmatpush2.msra.mxu0 0.0
  %3419 = vmatprep.subr.mxu0 0.0
  %3420 = vmatpush2.msra.mxu0 0.0
  %3421 = vmatprep.subr.mxu0 0.0
  %3422 = vmatpush2.msra.mxu0 0.0
  %3423 = vmatprep.subr.mxu0 0.0
  %3424 = vmatpush2.msra.mxu0 0.0
  %3425 = vmatprep.subr.mxu0 0.0
  %3426 = vmatpush2.msra.mxu0 0.0
  %3427 = vmatprep.subr.mxu0 0.0
  %3428 = vmatpush2.msra.mxu0 0.0
  %3429 = vmatprep.subr.mxu0 0.0
  %3430 = vmatpush2.msra.mxu0 0.0
  %3431 = vmatprep.subr.mxu0 0.0
  %3432 = vmatpush2.msra.mxu0 0.0
  %3433 = vmatprep.mubr.f32.mxu0 0.0
  %3434 = vmatmul.mubr.f32.gmra.mxu0 %v3367
  %v3435 = vpop.f32.mrf.mxu0
  %v3436 = vadd.f32 0.0, %v3435
  %v3437 = vpop.f32.mrf.mxu0
  %v3438 = vadd.f32 0.0, %v3437
  %3439 = vdwg.mxu0
  %3440 = vmatprep.subr.mxu0 0.0
  %3441 = vmatpush1.msra.mxu0 0.0
  %3442 = vmatprep.subr.mxu0 0.0
  %3443 = vmatpush1.msra.mxu0 0.0
  %3444 = vmatprep.subr.mxu0 0.0
  %3445 = vmatpush1.msra.mxu0 0.0
  %3446 = vmatprep.subr.mxu0 0.0
  %3447 = vmatpush1.msra.mxu0 0.0
  %3448 = vmatprep.subr.mxu0 0.0
  %3449 = vmatpush1.msra.mxu0 0.0
  %3450 = vmatprep.subr.mxu0 0.0
  %3451 = vmatpush1.msra.mxu0 0.0
  %3452 = vmatprep.subr.mxu0 0.0
  %3453 = vmatpush1.msra.mxu0 0.0
  %3454 = vmatprep.subr.mxu0 0.0
  %3455 = vmatpush1.msra.mxu0 0.0
  %3456 = vmatprep.subr.mxu0 0.0
  %3457 = vmatpush1.msra.mxu0 0.0
  %3458 = vmatprep.subr.mxu0 0.0
  %3459 = vmatpush1.msra.mxu0 0.0
  %3460 = vmatprep.subr.mxu0 0.0
  %3461 = vmatpush1.msra.mxu0 0.0
  %3462 = vmatprep.subr.mxu0 0.0
  %3463 = vmatpush1.msra.mxu0 0.0
  %3464 = vmatprep.subr.mxu0 0.0
  %3465 = vmatpush1.msra.mxu0 0.0
  %3466 = vmatprep.subr.mxu0 0.0
  %3467 = vmatpush1.msra.mxu0 0.0
  %3468 = vmatprep.subr.mxu0 %v3363
  %3469 = vmatpush1.msra.mxu0 %v3362
  %3470 = vmatprep.subr.mxu0 %v3359
  %3471 = vmatpush1.msra.mxu0 %v3358
  %3472 = vmatprep.subr.mxu0 0.0
  %3473 = vmatpush2.msra.mxu0 0.0
  %3474 = vmatprep.subr.mxu0 0.0
  %3475 = vmatpush2.msra.mxu0 0.0
  %3476 = vmatprep.subr.mxu0 0.0
  %3477 = vmatpush2.msra.mxu0 0.0
  %3478 = vmatprep.subr.mxu0 0.0
  %3479 = vmatpush2.msra.mxu0 0.0
  %3480 = vmatprep.subr.mxu0 0.0
  %3481 = vmatpush2.msra.mxu0 0.0
  %3482 = vmatprep.subr.mxu0 0.0
  %3483 = vmatpush2.msra.mxu0 0.0
  %3484 = vmatprep.subr.mxu0 0.0
  %3485 = vmatpush2.msra.mxu0 0.0
  %3486 = vmatprep.subr.mxu0 0.0
  %3487 = vmatpush2.msra.mxu0 0.0
  %3488 = vmatprep.subr.mxu0 0.0
  %3489 = vmatpush2.msra.mxu0 0.0
  %3490 = vmatprep.subr.mxu0 0.0
  %3491 = vmatpush2.msra.mxu0 0.0
  %3492 = vmatprep.subr.mxu0 0.0
  %3493 = vmatpush2.msra.mxu0 0.0
  %3494 = vmatprep.subr.mxu0 0.0
  %3495 = vmatpush2.msra.mxu0 0.0
  %3496 = vmatprep.subr.mxu0 0.0
  %3497 = vmatpush2.msra.mxu0 0.0
  %3498 = vmatprep.subr.mxu0 0.0
  %3499 = vmatpush2.msra.mxu0 0.0
  %3500 = vmatprep.subr.mxu0 0.0
  %3501 = vmatpush2.msra.mxu0 0.0
  %3502 = vmatprep.subr.mxu0 0.0
  %3503 = vmatpush2.msra.mxu0 0.0
  %3504 = vmatprep.mubr.f32.mxu0 0.0
  %3505 = vmatmul.mubr.f32.gmra.mxu0 %v3367
  %v3506 = vpop.f32.mrf.mxu0
  %v3507 = vadd.f32 0.0, %v3506
  %v3508 = vpop.f32.mrf.mxu0
  %v3509 = vadd.f32 0.0, %v3508
  %3510 = vdwg.mxu0
  %v3511 = vadd.f32 %v3328, %v3436
  %v3512 = vadd.f32 %v3329, %v3438
  %v3513 = vadd.f32 %v3330, %v3507
  %v3514 = vadd.f32 %v3331, %v3509
  %3516 = vset.pattern.permute.xlu0 0
  %3517 = vperm.xlu0 %3516, %v1907
  %v3518 = vpop.permute.xlu0 %3517
  %v3520 = vadd.f32 %v3511, %v3518
  %v3521 = vadd.f32 %v3512, %v3518
  %v3522 = vadd.f32 %v3513, %v3518
  %v3523 = vadd.f32 %v3514, %v3518
  %v3528 = vcombine.low %v3520, %v3521
  %v3529 = vcombine.low %v3522, %v3523
  %3532 = vst [vmem:[%s6] sm:$0x77] %v3528
  %3533 = vst [vmem:[%s6 + $0x8] sm:$0x77] %v3529
  // Predicated region
  $region26: #{unet_student_forward.1} parent=0 // pred_check
    _
  $region27: #{unet_student_forward.1} parent=0 // pred_check_branch
    %3535 = sbr.rel (0) target = $region29
  $region28: #{unet_student_forward.1} parent=0 // pred_region
    _
  $region29: #{unet_student_forward.1} parent=0 // pred_fallthru
    _
  // Predicated region
  $region30: #{unet_student_forward.1} parent=0 // pred_check
    _
  $region31: #{unet_student_forward.1} parent=0 // pred_check_branch
    %3537 = sbr.rel (0) target = $region33
  $region32: #{unet_student_forward.1} parent=0 // pred_region
    _
  $region33: #{unet_student_forward.1} parent=0 // pred_fallthru
    _

</llo_original>
